<compile_context>
chip_gen: v7x
topology: tpu7x:2x2x1
jax: 0.10.0
libtpu: 0.0.40
codegen_flags: <defaults>
</compile_context>

<pallas_src>
import functools
import math

import jax
import jax.numpy as jnp
from jax import lax
from jax.experimental import pallas as pl
from jax.experimental.pallas import tpu as pltpu


def _layer_norm(y, gamma, beta, eps=1e-5):
    mu = jnp.mean(y, axis=-1, keepdims=True)
    d = y - mu
    var = jnp.mean(d * d, axis=-1, keepdims=True)
    return d * lax.rsqrt(var + eps) * gamma + beta


def t_sa_kernel(x_ref, mask_ref,
                wq_ref, bq_ref, wk_ref, bk_ref, wv_ref, bv_ref,
                wo_ref, bo_ref, g1_ref, be1_ref,
                wl_ref, bl_ref, g2_ref, be2_ref,
                out_ref, *, nheads):
    TB, T, C = x_ref.shape
    hd = C // nheads

    # Residual stream in f32; matmul operands cast to bf16 (fast MXU path on
    # v5e/v6e/v7x) with f32 accumulation.
    x = x_ref[...].astype(jnp.float32)                      # (TB, T, C)
    x2 = x.reshape(TB * T, C)
    xb = x2.astype(jnp.bfloat16)

    # Fused q/k/v_proj ∘ MHA.in_proj: one full-width MXU matmul per stream.
    # (1/sqrt(hd) attention scale is folded into the Q weights/bias.)
    q2 = jnp.dot(xb, wq_ref[...], preferred_element_type=jnp.float32) + bq_ref[...]
    k2 = jnp.dot(xb, wk_ref[...], preferred_element_type=jnp.float32) + bk_ref[...]
    v2 = jnp.dot(xb, wv_ref[...], preferred_element_type=jnp.float32) + bv_ref[...]

    # Fold heads into the leading batch dim so both attention contractions are
    # single batched matmuls (no per-head matmul/softmax chains).  The
    # lane-slice + leading-dim concat is the pure-copy relayout (heads:
    # lanes -> batch); these op classes lower reliably on Mosaic.
    def heads_to_batch(z2):
        z3 = z2.astype(jnp.bfloat16).reshape(TB, T, C)
        return jnp.concatenate(
            [z3[:, :, h * hd:(h + 1) * hd] for h in range(nheads)], axis=0)

    qh = heads_to_batch(q2)                                 # (nheads*TB, T, hd)
    kh = heads_to_batch(k2)
    vh = heads_to_batch(v2)

    # key_padding_mask: 1.0 = keep, 0.0 = padded key.  (head, batch) order.
    m = mask_ref[...]                                       # (TB, 1, T)
    keep = jnp.concatenate([m] * nheads, axis=0) > 0.0      # (nheads*TB, 1, T)

    # Scores for all heads & batch rows in ONE batched matmul; softmax in f32.
    # Note: fully-masked rows yield uniform attention here, whereas PyTorch's
    # MultiheadAttention would produce NaN for such rows.
    s = jnp.einsum('btd,bsd->bts', qh, kh, preferred_element_type=jnp.float32)
    s = jnp.where(keep, s, jnp.float32(-1e9))
    s = s - jnp.max(s, axis=-1, keepdims=True)
    e = jnp.exp(s)
    p = e * pl.reciprocal(jnp.sum(e, axis=-1, keepdims=True), approx=True)
    # TODO(synk): attention-weight dropout treated as identity (eval mode).

    o = jnp.einsum('bts,bsd->btd', p.astype(jnp.bfloat16), vh,
                   preferred_element_type=jnp.float32)      # (nheads*TB, T, hd)

    # Fold heads back onto the channel dim (pure copy) for the out-projection.
    att = jnp.concatenate(
        [o[h * TB:(h + 1) * TB].reshape(TB * T, hd) for h in range(nheads)],
        axis=-1)                                            # (TB*T, C)

    # MHA out_proj, residual, LayerNorm (t_att.norm).
    upd = jnp.dot(att.astype(jnp.bfloat16), wo_ref[...],
                  preferred_element_type=jnp.float32) + bo_ref[...]
    # TODO(synk): SelfAttention's dropout on `update` treated as identity (eval mode).
    x1 = _layer_norm(x2 + upd, g1_ref[...], be1_ref[...])

    # FFN: Linear -> ReLU -> (dropout = identity) -> residual -> LayerNorm.
    lin = jnp.dot(x1.astype(jnp.bfloat16), wl_ref[...],
                  preferred_element_type=jnp.float32) + bl_ref[...]
    lin = jnp.maximum(lin, 0.0)
    # TODO(synk): T_SA_layer dropout after the ReLU treated as identity (eval mode).
    y = _layer_norm(x1 + lin, g2_ref[...], be2_ref[...])

    out_ref[...] = y.reshape(TB, T, C).astype(out_ref.dtype)


def fold_params(params, *, nheads):
    """One-time parameter preprocessing (hoisted out of the forward path):
    folds q/k/v_proj into MHA.in_proj, folds the 1/sqrt(head_dim) scale into
    the Q weights, pre-transposes weights to (in, out) layout and casts all
    matmul weights to bf16 (biases / LayerNorm params stay f32)."""
    (wq, bq, wk, bk, wv, bv, w_in, b_in, wo, bo,
     g1, be1, wl, bl, g2, be2) = params
    C = wq.shape[0]
    assert C % nheads == 0, "hdim must be divisible by nheads"
    scale = 1.0 / math.sqrt(C // nheads)

    wiq, wik, wiv = jnp.split(w_in, 3, axis=0)
    biq, bik, biv = jnp.split(b_in, 3)
    f32, bf16 = jnp.float32, jnp.bfloat16

    aq = ((wq.T @ wiq.T) * scale).astype(bf16)
    cq = ((bq @ wiq.T + biq) * scale).reshape(1, C).astype(f32)
    ak = (wk.T @ wik.T).astype(bf16)
    ck = (bk @ wik.T + bik).reshape(1, C).astype(f32)
    av = (wv.T @ wiv.T).astype(bf16)
    cv = (bv @ wiv.T + biv).reshape(1, C).astype(f32)

    return (aq, cq, ak, ck, av, cv,
            wo.T.astype(bf16), bo.reshape(1, C).astype(f32),
            g1.reshape(1, C).astype(f32), be1.reshape(1, C).astype(f32),
            wl.T.astype(bf16), bl.reshape(1, C).astype(f32),
            g2.reshape(1, C).astype(f32), be2.reshape(1, C).astype(f32))


def _vmem_capacity_bytes():
    try:
        return int(pltpu.get_tpu_info().vmem_capacity_bytes)
    except Exception:
        return 64 * 1024 * 1024      # conservative default (v7x per-TC VMEM)


def _pick_block_b(B, T, C, nheads, budget_bytes):
    """Largest batch block that (a) divides B, (b) keeps grid length >= 2 when
    possible (v7x dual-TensorCore sharding), (c) fits the VMEM budget
    (double-buffered x/out blocks, bf16 q/k/v head copies, f32 score/prob
    tensors, resident bf16 weights)."""
    def need(tb):
        io = 2 * 2 * tb * T * C * 4                 # x + out, double-buffered f32
        qkv = 3 * tb * T * C * (4 + 2)              # f32 projections + bf16 head copies
        scores = 2 * nheads * tb * T * T * 4        # scores + probs, f32
        weights = 6 * C * C * 2 + 16 * C * 4        # resident bf16 weights + f32 vectors
        return int(1.5 * (io + qkv + scores)) + weights

    best = 1
    for tb in range(1, B + 1):
        if B % tb:
            continue
        if B > 1 and B // tb < 2:
            continue
        if need(tb) <= budget_bytes:
            best = max(best, tb)
    return best
    # TODO(synk): for very large T a flash-style key-block loop inside the kernel
    # is needed; here the heuristic only shrinks the batch block.


def t_sa_forward(x, mask, folded, *, nheads, block_b=None):
    """Pallas forward of T_SA_layer (eval mode). Returns src_emb' [B, T, C]."""
    B, T, C = x.shape
    assert C % nheads == 0, "hdim must be divisible by nheads"

    vmem_cap = _vmem_capacity_bytes()
    if block_b is None:
        block_b = _pick_block_b(B, T, C, nheads, int(0.70 * vmem_cap))
    assert B % block_b == 0, "batch must be divisible by the batch block size"

    # Mask laid out (B, 1, T): key axis on lanes, broadcasts onto the logits.
    mask3 = mask.astype(jnp.float32).reshape(B, 1, T)
    args = (x, mask3) + tuple(folded)

    def build(single_buffer_weights):
        def wspec(shape):
            if single_buffer_weights:
                # Constant index map -> never re-fetched; single-buffer it to
                # halve the resident weight VMEM footprint.
                return pl.BlockSpec(shape, lambda b: (0, 0),
                                    pipeline_mode=pl.Buffered(1))
            return pl.BlockSpec(shape, lambda b: (0, 0))

        return pl.pallas_call(
            functools.partial(t_sa_kernel, nheads=nheads),
            out_shape=jax.ShapeDtypeStruct((B, T, C), jnp.float32),
            grid_spec=pltpu.PrefetchScalarGridSpec(
                num_scalar_prefetch=0,
                grid=(B // block_b,),
                in_specs=[
                    pl.BlockSpec((block_b, T, C), lambda b: (b, 0, 0)),   # x
                    pl.BlockSpec((block_b, 1, T), lambda b: (b, 0, 0)),   # mask
                    wspec((C, C)), wspec((1, C)),     # fused Q proj (scale folded)
                    wspec((C, C)), wspec((1, C)),     # fused K proj
                    wspec((C, C)), wspec((1, C)),     # fused V proj
                    wspec((C, C)), wspec((1, C)),     # MHA out_proj
                    wspec((1, C)), wspec((1, C)),     # t_att.norm gamma/beta
                    wspec((C, C)), wspec((1, C)),     # FFN linear
                    wspec((1, C)), wspec((1, C)),     # final norm gamma/beta
                ],
                out_specs=pl.BlockSpec((block_b, T, C), lambda b: (b, 0, 0)),
            ),
            compiler_params=pltpu.CompilerParams(
                dimension_semantics=("parallel",),
                vmem_limit_bytes=int(min(0.9 * vmem_cap, 128 * 1024 * 1024)),
            ),
        )

    try:
        return build(True)(*args)
    except Exception:
        # Compatibility fallback for jax versions without
        # BlockSpec(pipeline_mode=pl.Buffered(1)).
        return build(False)(*args)


def reference_forward(x, mask, params, *, nheads):
    """Plain-JAX f32 reference mirroring the PyTorch module (eval mode)."""
    (wq, bq, wk, bk, wv, bv, w_in, b_in, wo, bo,
     g1, be1, wl, bl, g2, be2) = params
    B, T, C = x.shape
    hd = C // nheads

    def ln(y, g, b, eps=1e-5):
        mu = jnp.mean(y, axis=-1, keepdims=True)
        var = jnp.mean((y - mu) ** 2, axis=-1, keepdims=True)
        return (y - mu) / jnp.sqrt(var + eps) * g + b

    q = x @ wq.T + bq
    k = x @ wk.T + bk
    v = x @ wv.T + bv

    wiq, wik, wiv = jnp.split(w_in, 3, axis=0)
    biq, bik, biv = jnp.split(b_in, 3)
    Q = q @ wiq.T + biq
    K = k @ wik.T + bik
    V = v @ wiv.T + biv

    Qh = Q.reshape(B, T, nheads, hd).transpose(0, 2, 1, 3)
    Kh = K.reshape(B, T, nheads, hd).transpose(0, 2, 1, 3)
    Vh = V.reshape(B, T, nheads, hd).transpose(0, 2, 1, 3)

    s = jnp.einsum('bhtd,bhsd->bhts', Qh, Kh) / math.sqrt(hd)
    s = jnp.where(mask[:, None, None, :] == 0, -1e9, s)
    p = jax.nn.softmax(s, axis=-1)
    o = jnp.einsum('bhts,bhsd->bhtd', p, Vh)
    o = o.transpose(0, 2, 1, 3).reshape(B, T, C)
    upd = o @ wo.T + bo

    x1 = ln(x + upd, g1, be1)
    lin = jax.nn.relu(x1 @ wl.T + bl)
    return ln(x1 + lin, g2, be2)


def init_params(rng, C):
    ks = jax.random.split(rng, 16)

    def lw(k): return jax.random.normal(k, (C, C), jnp.float32) / math.sqrt(C)
    def lb(k): return 0.02 * jax.random.normal(k, (C,), jnp.float32)

    wq, bq = lw(ks[0]), lb(ks[1])
    wk, bk = lw(ks[2]), lb(ks[3])
    wv, bv = lw(ks[4]), lb(ks[5])
    w_in = jax.random.normal(ks[6], (3 * C, C), jnp.float32) / math.sqrt(C)
    b_in = 0.02 * jax.random.normal(ks[7], (3 * C,), jnp.float32)
    wo, bo = lw(ks[8]), lb(ks[9])
    g1 = 1.0 + 0.1 * jax.random.normal(ks[10], (C,), jnp.float32)
    be1 = 0.05 * jax.random.normal(ks[11], (C,), jnp.float32)
    wl, bl = lw(ks[12]), lb(ks[13])
    g2 = 1.0 + 0.1 * jax.random.normal(ks[14], (C,), jnp.float32)
    be2 = 0.05 * jax.random.normal(ks[15], (C,), jnp.float32)
    return (wq, bq, wk, bk, wv, bv, w_in, b_in, wo, bo, g1, be1, wl, bl, g2, be2)


if __name__ == "__main__":
    B, T, C, NHEADS = 4, 8, 32, 4

    root = jax.random.PRNGKey(0)
    kp, kx = jax.random.split(root, 2)
    params = init_params(kp, C)
    folded = fold_params(params, nheads=NHEADS)      # one-time preprocessing

    x = jax.random.normal(kx, (B, T, C), jnp.float32)
    # Pad out the last 2 positions of batch 1 and the first 3 of batch 3.
    mask = jnp.ones((B, T), jnp.float32).at[1, -2:].set(0.0).at[3, :3].set(0.0)

    out = t_sa_forward(x, mask, folded, nheads=NHEADS)
    jax.block_until_ready(out)

    ref = reference_forward(x, mask, params, nheads=NHEADS)
    assert out.shape == (B, T, C)
    err = float(jnp.max(jnp.abs(out - ref)))
    # Tolerance covers intentional bf16 matmul operands (softmax/LayerNorm in f32).
    assert jnp.allclose(out, ref, atol=5e-2, rtol=5e-2), f"max abs err {err}"

    print("KERNEL_OK")
</pallas_src>

<mosaic_0001>
module attributes {stable_mosaic.version = 11 : i64} {
  func.func @t_sa_kernel(%arg0: i32, %arg1: memref<2x8x32xf32, #tpu.memory_space<vmem>>, %arg2: memref<2x1x8xf32, #tpu.memory_space<vmem>>, %arg3: memref<32x32xbf16, #tpu.memory_space<vmem>>, %arg4: memref<1x32xf32, #tpu.memory_space<vmem>>, %arg5: memref<32x32xbf16, #tpu.memory_space<vmem>>, %arg6: memref<1x32xf32, #tpu.memory_space<vmem>>, %arg7: memref<32x32xbf16, #tpu.memory_space<vmem>>, %arg8: memref<1x32xf32, #tpu.memory_space<vmem>>, %arg9: memref<32x32xbf16, #tpu.memory_space<vmem>>, %arg10: memref<1x32xf32, #tpu.memory_space<vmem>>, %arg11: memref<1x32xf32, #tpu.memory_space<vmem>>, %arg12: memref<1x32xf32, #tpu.memory_space<vmem>>, %arg13: memref<32x32xbf16, #tpu.memory_space<vmem>>, %arg14: memref<1x32xf32, #tpu.memory_space<vmem>>, %arg15: memref<1x32xf32, #tpu.memory_space<vmem>>, %arg16: memref<1x32xf32, #tpu.memory_space<vmem>>, %arg17: memref<2x8x32xf32, #tpu.memory_space<vmem>>) attributes {dimension_semantics = [#tpu.dimension_semantics<parallel>], iteration_bounds = array<i64: 2>, scalar_prefetch = 0 : i64, scratch_operands = 0 : i64, tpu.core_type = #tpu.core_type<tc>, window_params = [{transform_indices = @transform_0, window_bounds = array<i64: 2, 8, 32>}, {transform_indices = @transform_1, window_bounds = array<i64: 2, 1, 8>}, {pipeline_mode = #tpu.pipeline_mode<synchronous>, transform_indices = @transform_2, window_bounds = array<i64: 32, 32>}, {pipeline_mode = #tpu.pipeline_mode<synchronous>, transform_indices = @transform_3, window_bounds = array<i64: 1, 32>}, {pipeline_mode = #tpu.pipeline_mode<synchronous>, transform_indices = @transform_4, window_bounds = array<i64: 32, 32>}, {pipeline_mode = #tpu.pipeline_mode<synchronous>, transform_indices = @transform_5, window_bounds = array<i64: 1, 32>}, {pipeline_mode = #tpu.pipeline_mode<synchronous>, transform_indices = @transform_6, window_bounds = array<i64: 32, 32>}, {pipeline_mode = #tpu.pipeline_mode<synchronous>, transform_indices = @transform_7, window_bounds = array<i64: 1, 32>}, {pipeline_mode = #tpu.pipeline_mode<synchronous>, transform_indices = @transform_8, window_bounds = array<i64: 32, 32>}, {pipeline_mode = #tpu.pipeline_mode<synchronous>, transform_indices = @transform_9, window_bounds = array<i64: 1, 32>}, {pipeline_mode = #tpu.pipeline_mode<synchronous>, transform_indices = @transform_10, window_bounds = array<i64: 1, 32>}, {pipeline_mode = #tpu.pipeline_mode<synchronous>, transform_indices = @transform_11, window_bounds = array<i64: 1, 32>}, {pipeline_mode = #tpu.pipeline_mode<synchronous>, transform_indices = @transform_12, window_bounds = array<i64: 32, 32>}, {pipeline_mode = #tpu.pipeline_mode<synchronous>, transform_indices = @transform_13, window_bounds = array<i64: 1, 32>}, {pipeline_mode = #tpu.pipeline_mode<synchronous>, transform_indices = @transform_14, window_bounds = array<i64: 1, 32>}, {pipeline_mode = #tpu.pipeline_mode<synchronous>, transform_indices = @transform_15, window_bounds = array<i64: 1, 32>}, {transform_indices = @transform_16, window_bounds = array<i64: 2, 8, 32>}]} {
    %c0 = arith.constant 0 : index
    %c0_0 = arith.constant 0 : index
    %c0_1 = arith.constant 0 : index
    %0 = vector.load %arg1[%c0, %c0_0, %c0_1] : memref<2x8x32xf32, #tpu.memory_space<vmem>>, vector<2x8x32xf32>
    %1 = vector.shape_cast %0 : vector<2x8x32xf32> to vector<16x32xf32>
    %2 = arith.truncf %1 : vector<16x32xf32> to vector<16x32xbf16>
    %c0_2 = arith.constant 0 : index
    %c0_3 = arith.constant 0 : index
    %3 = vector.load %arg3[%c0_2, %c0_3] : memref<32x32xbf16, #tpu.memory_space<vmem>>, vector<32x32xbf16>
    %cst = arith.constant dense<0.000000e+00> : vector<16x32xf32>
    %4 = tpu.matmul %2, %3, %cst {dimension_numbers = #tpu.dot_dimension_numbers<[1], [0], [0], [1], [0, 0, 1, 1], [], []>} : vector<16x32xbf16>, vector<32x32xbf16>, vector<16x32xf32> -> vector<16x32xf32>
    %c0_4 = arith.constant 0 : index
    %c0_5 = arith.constant 0 : index
    %5 = vector.load %arg4[%c0_4, %c0_5] : memref<1x32xf32, #tpu.memory_space<vmem>>, vector<1x32xf32>
    %6 = vector.broadcast %5 : vector<1x32xf32> to vector<16x32xf32>
    %7 = arith.addf %4, %6 : vector<16x32xf32>
    %c0_6 = arith.constant 0 : index
    %c0_7 = arith.constant 0 : index
    %8 = vector.load %arg5[%c0_6, %c0_7] : memref<32x32xbf16, #tpu.memory_space<vmem>>, vector<32x32xbf16>
    %cst_8 = arith.constant dense<0.000000e+00> : vector<16x32xf32>
    %9 = tpu.matmul %2, %8, %cst_8 {dimension_numbers = #tpu.dot_dimension_numbers<[1], [0], [0], [1], [0, 0, 1, 1], [], []>} : vector<16x32xbf16>, vector<32x32xbf16>, vector<16x32xf32> -> vector<16x32xf32>
    %c0_9 = arith.constant 0 : index
    %c0_10 = arith.constant 0 : index
    %10 = vector.load %arg6[%c0_9, %c0_10] : memref<1x32xf32, #tpu.memory_space<vmem>>, vector<1x32xf32>
    %11 = vector.broadcast %10 : vector<1x32xf32> to vector<16x32xf32>
    %12 = arith.addf %9, %11 : vector<16x32xf32>
    %c0_11 = arith.constant 0 : index
    %c0_12 = arith.constant 0 : index
    %13 = vector.load %arg7[%c0_11, %c0_12] : memref<32x32xbf16, #tpu.memory_space<vmem>>, vector<32x32xbf16>
    %cst_13 = arith.constant dense<0.000000e+00> : vector<16x32xf32>
    %14 = tpu.matmul %2, %13, %cst_13 {dimension_numbers = #tpu.dot_dimension_numbers<[1], [0], [0], [1], [0, 0, 1, 1], [], []>} : vector<16x32xbf16>, vector<32x32xbf16>, vector<16x32xf32> -> vector<16x32xf32>
    %c0_14 = arith.constant 0 : index
    %c0_15 = arith.constant 0 : index
    %15 = vector.load %arg8[%c0_14, %c0_15] : memref<1x32xf32, #tpu.memory_space<vmem>>, vector<1x32xf32>
    %16 = vector.broadcast %15 : vector<1x32xf32> to vector<16x32xf32>
    %17 = arith.addf %14, %16 : vector<16x32xf32>
    %18 = arith.truncf %7 : vector<16x32xf32> to vector<16x32xbf16>
    %19 = vector.shape_cast %18 : vector<16x32xbf16> to vector<2x8x32xbf16>
    %20 = vector.extract_strided_slice %19 {offsets = [0, 0, 0], sizes = [2, 8, 8], strides = [1, 1, 1]} : vector<2x8x32xbf16> to vector<2x8x8xbf16>
    %21 = vector.extract_strided_slice %19 {offsets = [0, 0, 8], sizes = [2, 8, 8], strides = [1, 1, 1]} : vector<2x8x32xbf16> to vector<2x8x8xbf16>
    %22 = vector.extract_strided_slice %19 {offsets = [0, 0, 16], sizes = [2, 8, 8], strides = [1, 1, 1]} : vector<2x8x32xbf16> to vector<2x8x8xbf16>
    %23 = vector.extract_strided_slice %19 {offsets = [0, 0, 24], sizes = [2, 8, 8], strides = [1, 1, 1]} : vector<2x8x32xbf16> to vector<2x8x8xbf16>
    %24 = tpu.concatenate %20, %21, %22, %23 in 0 : vector<2x8x8xbf16>, vector<2x8x8xbf16>, vector<2x8x8xbf16>, vector<2x8x8xbf16> -> vector<8x8x8xbf16>
    %25 = arith.truncf %12 : vector<16x32xf32> to vector<16x32xbf16>
    %26 = vector.shape_cast %25 : vector<16x32xbf16> to vector<2x8x32xbf16>
    %27 = vector.extract_strided_slice %26 {offsets = [0, 0, 0], sizes = [2, 8, 8], strides = [1, 1, 1]} : vector<2x8x32xbf16> to vector<2x8x8xbf16>
    %28 = vector.extract_strided_slice %26 {offsets = [0, 0, 8], sizes = [2, 8, 8], strides = [1, 1, 1]} : vector<2x8x32xbf16> to vector<2x8x8xbf16>
    %29 = vector.extract_strided_slice %26 {offsets = [0, 0, 16], sizes = [2, 8, 8], strides = [1, 1, 1]} : vector<2x8x32xbf16> to vector<2x8x8xbf16>
    %30 = vector.extract_strided_slice %26 {offsets = [0, 0, 24], sizes = [2, 8, 8], strides = [1, 1, 1]} : vector<2x8x32xbf16> to vector<2x8x8xbf16>
    %31 = tpu.concatenate %27, %28, %29, %30 in 0 : vector<2x8x8xbf16>, vector<2x8x8xbf16>, vector<2x8x8xbf16>, vector<2x8x8xbf16> -> vector<8x8x8xbf16>
    %32 = arith.truncf %17 : vector<16x32xf32> to vector<16x32xbf16>
    %33 = vector.shape_cast %32 : vector<16x32xbf16> to vector<2x8x32xbf16>
    %34 = vector.extract_strided_slice %33 {offsets = [0, 0, 0], sizes = [2, 8, 8], strides = [1, 1, 1]} : vector<2x8x32xbf16> to vector<2x8x8xbf16>
    %35 = vector.extract_strided_slice %33 {offsets = [0, 0, 8], sizes = [2, 8, 8], strides = [1, 1, 1]} : vector<2x8x32xbf16> to vector<2x8x8xbf16>
    %36 = vector.extract_strided_slice %33 {offsets = [0, 0, 16], sizes = [2, 8, 8], strides = [1, 1, 1]} : vector<2x8x32xbf16> to vector<2x8x8xbf16>
    %37 = vector.extract_strided_slice %33 {offsets = [0, 0, 24], sizes = [2, 8, 8], strides = [1, 1, 1]} : vector<2x8x32xbf16> to vector<2x8x8xbf16>
    %38 = tpu.concatenate %34, %35, %36, %37 in 0 : vector<2x8x8xbf16>, vector<2x8x8xbf16>, vector<2x8x8xbf16>, vector<2x8x8xbf16> -> vector<8x8x8xbf16>
    %c0_16 = arith.constant 0 : index
    %c0_17 = arith.constant 0 : index
    %c0_18 = arith.constant 0 : index
    %39 = vector.load %arg2[%c0_16, %c0_17, %c0_18] : memref<2x1x8xf32, #tpu.memory_space<vmem>>, vector<2x1x8xf32>
    %40 = tpu.concatenate %39, %39, %39, %39 in 0 : vector<2x1x8xf32>, vector<2x1x8xf32>, vector<2x1x8xf32>, vector<2x1x8xf32> -> vector<8x1x8xf32>
    %cst_19 = arith.constant 0.000000e+00 : f32
    %41 = vector.broadcast %cst_19 : f32 to vector<8x1x8xf32>
    %42 = arith.cmpf ogt, %40, %41 : vector<8x1x8xf32>
    "tpu.trace_start"() <{level = 10 : i32, message = "btd,bsd->bts"}> : () -> ()
    %cst_20 = arith.constant dense<0.000000e+00> : vector<8x8x8xf32>
    %43 = tpu.matmul %24, %31, %cst_20 {dimension_numbers = #tpu.dot_dimension_numbers<[2], [2], [1], [1], [0, 0, 0, 1, 1, 1], [0], [0]>} : vector<8x8x8xbf16>, vector<8x8x8xbf16>, vector<8x8x8xf32> -> vector<8x8x8xf32>
    %cst_21 = arith.constant -1.000000e+09 : f32
    "tpu.trace_stop"() : () -> ()
    %44 = vector.shape_cast %42 : vector<8x1x8xi1> to vector<8x1x8xi1>
    %45 = vector.broadcast %44 : vector<8x1x8xi1> to vector<8x8x8xi1>
    %46 = vector.broadcast %cst_21 : f32 to vector<8x8x8xf32>
    %47 = arith.select %45, %43, %46 : vector<8x8x8xi1>, vector<8x8x8xf32>
    %cst_22 = arith.constant dense<0xFF800000> : vector<8x8xf32>
    %48 = vector.multi_reduction <maximumf>, %47, %cst_22 [2] : vector<8x8x8xf32> to vector<8x8xf32>
    %49 = vector.shape_cast %48 : vector<8x8xf32> to vector<8x8x1xf32>
    %50 = vector.broadcast %49 : vector<8x8x1xf32> to vector<8x8x8xf32>
    %51 = arith.subf %47, %50 : vector<8x8x8xf32>
    %52 = math.exp %51 : vector<8x8x8xf32>
    %cst_23 = arith.constant dense<0.000000e+00> : vector<8x8xf32>
    %53 = vector.multi_reduction <add>, %52, %cst_23 [2] : vector<8x8x8xf32> to vector<8x8xf32>
    %54 = vector.shape_cast %53 : vector<8x8xf32> to vector<8x8x1xf32>
    %55 = tpu.reciprocal %54 {approx = true} : vector<8x8x1xf32> -> vector<8x8x1xf32>
    %56 = vector.broadcast %55 : vector<8x8x1xf32> to vector<8x8x8xf32>
    %57 = arith.mulf %52, %56 : vector<8x8x8xf32>
    %58 = arith.truncf %57 : vector<8x8x8xf32> to vector<8x8x8xbf16>
    "tpu.trace_start"() <{level = 10 : i32, message = "bts,bsd->btd"}> : () -> ()
    %cst_24 = arith.constant dense<0.000000e+00> : vector<8x8x8xf32>
    %59 = tpu.matmul %58, %38, %cst_24 {dimension_numbers = #tpu.dot_dimension_numbers<[2], [1], [1], [2], [0, 0, 0, 1, 1, 2], [0], [0]>} : vector<8x8x8xbf16>, vector<8x8x8xbf16>, vector<8x8x8xf32> -> vector<8x8x8xf32>
    "tpu.trace_stop"() : () -> ()
    %60 = vector.extract_strided_slice %59 {offsets = [0, 0, 0], sizes = [2, 8, 8], strides = [1, 1, 1]} : vector<8x8x8xf32> to vector<2x8x8xf32>
    %61 = vector.shape_cast %60 : vector<2x8x8xf32> to vector<16x8xf32>
    %62 = vector.extract_strided_slice %59 {offsets = [2, 0, 0], sizes = [2, 8, 8], strides = [1, 1, 1]} : vector<8x8x8xf32> to vector<2x8x8xf32>
    %63 = vector.shape_cast %62 : vector<2x8x8xf32> to vector<16x8xf32>
    %64 = vector.extract_strided_slice %59 {offsets = [4, 0, 0], sizes = [2, 8, 8], strides = [1, 1, 1]} : vector<8x8x8xf32> to vector<2x8x8xf32>
    %65 = vector.shape_cast %64 : vector<2x8x8xf32> to vector<16x8xf32>
    %66 = vector.extract_strided_slice %59 {offsets = [6, 0, 0], sizes = [2, 8, 8], strides = [1, 1, 1]} : vector<8x8x8xf32> to vector<2x8x8xf32>
    %67 = vector.shape_cast %66 : vector<2x8x8xf32> to vector<16x8xf32>
    %68 = tpu.concatenate %61, %63, %65, %67 in 1 : vector<16x8xf32>, vector<16x8xf32>, vector<16x8xf32>, vector<16x8xf32> -> vector<16x32xf32>
    %69 = arith.truncf %68 : vector<16x32xf32> to vector<16x32xbf16>
    %c0_25 = arith.constant 0 : index
    %c0_26 = arith.constant 0 : index
    %70 = vector.load %arg9[%c0_25, %c0_26] : memref<32x32xbf16, #tpu.memory_space<vmem>>, vector<32x32xbf16>
    %cst_27 = arith.constant dense<0.000000e+00> : vector<16x32xf32>
    %71 = tpu.matmul %69, %70, %cst_27 {dimension_numbers = #tpu.dot_dimension_numbers<[1], [0], [0], [1], [0, 0, 1, 1], [], []>} : vector<16x32xbf16>, vector<32x32xbf16>, vector<16x32xf32> -> vector<16x32xf32>
    %c0_28 = arith.constant 0 : index
    %c0_29 = arith.constant 0 : index
    %72 = vector.load %arg10[%c0_28, %c0_29] : memref<1x32xf32, #tpu.memory_space<vmem>>, vector<1x32xf32>
    %73 = vector.broadcast %72 : vector<1x32xf32> to vector<16x32xf32>
    %74 = arith.addf %71, %73 : vector<16x32xf32>
    %75 = arith.addf %1, %74 : vector<16x32xf32>
    %c0_30 = arith.constant 0 : index
    %c0_31 = arith.constant 0 : index
    %76 = vector.load %arg11[%c0_30, %c0_31] : memref<1x32xf32, #tpu.memory_space<vmem>>, vector<1x32xf32>
    %c0_32 = arith.constant 0 : index
    %c0_33 = arith.constant 0 : index
    %77 = vector.load %arg12[%c0_32, %c0_33] : memref<1x32xf32, #tpu.memory_space<vmem>>, vector<1x32xf32>
    %cst_34 = arith.constant dense<0.000000e+00> : vector<16xf32>
    %78 = vector.multi_reduction <add>, %75, %cst_34 [1] : vector<16x32xf32> to vector<16xf32>
    %79 = vector.shape_cast %78 : vector<16xf32> to vector<16x1xf32>
    %cst_35 = arith.constant 3.200000e+01 : f32
    %80 = vector.broadcast %cst_35 : f32 to vector<16x1xf32>
    %81 = arith.divf %79, %80 : vector<16x1xf32>
    %82 = vector.broadcast %81 : vector<16x1xf32> to vector<16x32xf32>
    %83 = arith.subf %75, %82 : vector<16x32xf32>
    %84 = arith.mulf %83, %83 : vector<16x32xf32>
    %cst_36 = arith.constant dense<0.000000e+00> : vector<16xf32>
    %85 = vector.multi_reduction <add>, %84, %cst_36 [1] : vector<16x32xf32> to vector<16xf32>
    %86 = vector.shape_cast %85 : vector<16xf32> to vector<16x1xf32>
    %cst_37 = arith.constant 3.200000e+01 : f32
    %87 = vector.broadcast %cst_37 : f32 to vector<16x1xf32>
    %88 = arith.divf %86, %87 : vector<16x1xf32>
    %cst_38 = arith.constant 9.99999974E-6 : f32
    %89 = vector.broadcast %cst_38 : f32 to vector<16x1xf32>
    %90 = arith.addf %88, %89 : vector<16x1xf32>
    %91 = math.rsqrt %90 : vector<16x1xf32>
    %92 = vector.broadcast %91 : vector<16x1xf32> to vector<16x32xf32>
    %93 = arith.mulf %83, %92 : vector<16x32xf32>
    %94 = vector.broadcast %76 : vector<1x32xf32> to vector<16x32xf32>
    %95 = arith.mulf %93, %94 : vector<16x32xf32>
    %96 = vector.broadcast %77 : vector<1x32xf32> to vector<16x32xf32>
    %97 = arith.addf %95, %96 : vector<16x32xf32>
    %98 = arith.truncf %97 : vector<16x32xf32> to vector<16x32xbf16>
    %c0_39 = arith.constant 0 : index
    %c0_40 = arith.constant 0 : index
    %99 = vector.load %arg13[%c0_39, %c0_40] : memref<32x32xbf16, #tpu.memory_space<vmem>>, vector<32x32xbf16>
    %cst_41 = arith.constant dense<0.000000e+00> : vector<16x32xf32>
    %100 = tpu.matmul %98, %99, %cst_41 {dimension_numbers = #tpu.dot_dimension_numbers<[1], [0], [0], [1], [0, 0, 1, 1], [], []>} : vector<16x32xbf16>, vector<32x32xbf16>, vector<16x32xf32> -> vector<16x32xf32>
    %c0_42 = arith.constant 0 : index
    %c0_43 = arith.constant 0 : index
    %101 = vector.load %arg14[%c0_42, %c0_43] : memref<1x32xf32, #tpu.memory_space<vmem>>, vector<1x32xf32>
    %102 = vector.broadcast %101 : vector<1x32xf32> to vector<16x32xf32>
    %103 = arith.addf %100, %102 : vector<16x32xf32>
    %cst_44 = arith.constant 0.000000e+00 : f32
    %104 = vector.broadcast %cst_44 : f32 to vector<16x32xf32>
    %105 = arith.maximumf %103, %104 : vector<16x32xf32>
    %106 = arith.addf %97, %105 : vector<16x32xf32>
    %c0_45 = arith.constant 0 : index
    %c0_46 = arith.constant 0 : index
    %107 = vector.load %arg15[%c0_45, %c0_46] : memref<1x32xf32, #tpu.memory_space<vmem>>, vector<1x32xf32>
    %c0_47 = arith.constant 0 : index
    %c0_48 = arith.constant 0 : index
    %108 = vector.load %arg16[%c0_47, %c0_48] : memref<1x32xf32, #tpu.memory_space<vmem>>, vector<1x32xf32>
    %cst_49 = arith.constant dense<0.000000e+00> : vector<16xf32>
    %109 = vector.multi_reduction <add>, %106, %cst_49 [1] : vector<16x32xf32> to vector<16xf32>
    %110 = vector.shape_cast %109 : vector<16xf32> to vector<16x1xf32>
    %cst_50 = arith.constant 3.200000e+01 : f32
    %111 = vector.broadcast %cst_50 : f32 to vector<16x1xf32>
    %112 = arith.divf %110, %111 : vector<16x1xf32>
    %113 = vector.broadcast %112 : vector<16x1xf32> to vector<16x32xf32>
    %114 = arith.subf %106, %113 : vector<16x32xf32>
    %115 = arith.mulf %114, %114 : vector<16x32xf32>
    %cst_51 = arith.constant dense<0.000000e+00> : vector<16xf32>
    %116 = vector.multi_reduction <add>, %115, %cst_51 [1] : vector<16x32xf32> to vector<16xf32>
    %117 = vector.shape_cast %116 : vector<16xf32> to vector<16x1xf32>
    %cst_52 = arith.constant 3.200000e+01 : f32
    %118 = vector.broadcast %cst_52 : f32 to vector<16x1xf32>
    %119 = arith.divf %117, %118 : vector<16x1xf32>
    %cst_53 = arith.constant 9.99999974E-6 : f32
    %120 = vector.broadcast %cst_53 : f32 to vector<16x1xf32>
    %121 = arith.addf %119, %120 : vector<16x1xf32>
    %122 = math.rsqrt %121 : vector<16x1xf32>
    %123 = vector.broadcast %122 : vector<16x1xf32> to vector<16x32xf32>
    %124 = arith.mulf %114, %123 : vector<16x32xf32>
    %125 = vector.broadcast %107 : vector<1x32xf32> to vector<16x32xf32>
    %126 = arith.mulf %124, %125 : vector<16x32xf32>
    %127 = vector.broadcast %108 : vector<1x32xf32> to vector<16x32xf32>
    %128 = arith.addf %126, %127 : vector<16x32xf32>
    %129 = vector.shape_cast %128 : vector<16x32xf32> to vector<2x8x32xf32>
    %c0_54 = arith.constant 0 : index
    %c0_55 = arith.constant 0 : index
    %c0_56 = arith.constant 0 : index
    %130 = vector.load %arg17[%c0_54, %c0_55, %c0_56] : memref<2x8x32xf32, #tpu.memory_space<vmem>>, vector<2x8x32xf32>
    tpu.vector_store %arg17[%c0_54, %c0_55, %c0_56], %129 {strides = array<i32>} : memref<2x8x32xf32, #tpu.memory_space<vmem>>, vector<2x8x32xf32>,
    return
  }
  func.func @transform_0(%arg0: i32) -> (i32, i32, i32) {
    %c0_i32 = arith.constant 0 : i32
    %c0_i32_0 = arith.constant 0 : i32
    %c0_i32_1 = arith.constant 0 : i32
    return %arg0, %c0_i32, %c0_i32_0 : i32, i32, i32
  }
  func.func @transform_1(%arg0: i32) -> (i32, i32, i32) {
    %c0_i32 = arith.constant 0 : i32
    %c0_i32_0 = arith.constant 0 : i32
    %c0_i32_1 = arith.constant 0 : i32
    return %arg0, %c0_i32, %c0_i32_0 : i32, i32, i32
  }
  func.func @transform_2(%arg0: i32) -> (i32, i32) {
    %c0_i32 = arith.constant 0 : i32
    %c0_i32_0 = arith.constant 0 : i32
    %c0_i32_1 = arith.constant 0 : i32
    return %c0_i32, %c0_i32_0 : i32, i32
  }
  func.func @transform_3(%arg0: i32) -> (i32, i32) {
    %c0_i32 = arith.constant 0 : i32
    %c0_i32_0 = arith.constant 0 : i32
    %c0_i32_1 = arith.constant 0 : i32
    return %c0_i32, %c0_i32_0 : i32, i32
  }
  func.func @transform_4(%arg0: i32) -> (i32, i32) {
    %c0_i32 = arith.constant 0 : i32
    %c0_i32_0 = arith.constant 0 : i32
    %c0_i32_1 = arith.constant 0 : i32
    return %c0_i32, %c0_i32_0 : i32, i32
  }
  func.func @transform_5(%arg0: i32) -> (i32, i32) {
    %c0_i32 = arith.constant 0 : i32
    %c0_i32_0 = arith.constant 0 : i32
    %c0_i32_1 = arith.constant 0 : i32
    return %c0_i32, %c0_i32_0 : i32, i32
  }
  func.func @transform_6(%arg0: i32) -> (i32, i32) {
    %c0_i32 = arith.constant 0 : i32
    %c0_i32_0 = arith.constant 0 : i32
    %c0_i32_1 = arith.constant 0 : i32
    return %c0_i32, %c0_i32_0 : i32, i32
  }
  func.func @transform_7(%arg0: i32) -> (i32, i32) {
    %c0_i32 = arith.constant 0 : i32
    %c0_i32_0 = arith.constant 0 : i32
    %c0_i32_1 = arith.constant 0 : i32
    return %c0_i32, %c0_i32_0 : i32, i32
  }
  func.func @transform_8(%arg0: i32) -> (i32, i32) {
    %c0_i32 = arith.constant 0 : i32
    %c0_i32_0 = arith.constant 0 : i32
    %c0_i32_1 = arith.constant 0 : i32
    return %c0_i32, %c0_i32_0 : i32, i32
  }
  func.func @transform_9(%arg0: i32) -> (i32, i32) {
    %c0_i32 = arith.constant 0 : i32
    %c0_i32_0 = arith.constant 0 : i32
    %c0_i32_1 = arith.constant 0 : i32
    return %c0_i32, %c0_i32_0 : i32, i32
  }
  func.func @transform_10(%arg0: i32) -> (i32, i32) {
    %c0_i32 = arith.constant 0 : i32
    %c0_i32_0 = arith.constant 0 : i32
    %c0_i32_1 = arith.constant 0 : i32
    return %c0_i32, %c0_i32_0 : i32, i32
  }
  func.func @transform_11(%arg0: i32) -> (i32, i32) {
    %c0_i32 = arith.constant 0 : i32
    %c0_i32_0 = arith.constant 0 : i32
    %c0_i32_1 = arith.constant 0 : i32
    return %c0_i32, %c0_i32_0 : i32, i32
  }
  func.func @transform_12(%arg0: i32) -> (i32, i32) {
    %c0_i32 = arith.constant 0 : i32
    %c0_i32_0 = arith.constant 0 : i32
    %c0_i32_1 = arith.constant 0 : i32
    return %c0_i32, %c0_i32_0 : i32, i32
  }
  func.func @transform_13(%arg0: i32) -> (i32, i32) {
    %c0_i32 = arith.constant 0 : i32
    %c0_i32_0 = arith.constant 0 : i32
    %c0_i32_1 = arith.constant 0 : i32
    return %c0_i32, %c0_i32_0 : i32, i32
  }
  func.func @transform_14(%arg0: i32) -> (i32, i32) {
    %c0_i32 = arith.constant 0 : i32
    %c0_i32_0 = arith.constant 0 : i32
    %c0_i32_1 = arith.constant 0 : i32
    return %c0_i32, %c0_i32_0 : i32, i32
  }
  func.func @transform_15(%arg0: i32) -> (i32, i32) {
    %c0_i32 = arith.constant 0 : i32
    %c0_i32_0 = arith.constant 0 : i32
    %c0_i32_1 = arith.constant 0 : i32
    return %c0_i32, %c0_i32_0 : i32, i32
  }
  func.func @transform_16(%arg0: i32) -> (i32, i32, i32) {
    %c0_i32 = arith.constant 0 : i32
    %c0_i32_0 = arith.constant 0 : i32
    %c0_i32_1 = arith.constant 0 : i32
    return %arg0, %c0_i32, %c0_i32_0 : i32, i32, i32
  }
}

module attributes {stable_mosaic.version = 11 : i64} {
  func.func @t_sa_kernel(%arg0: i32, %arg1: memref<2x8x32xf32, #tpu.memory_space<vmem>>, %arg2: memref<2x1x8xf32, #tpu.memory_space<vmem>>, %arg3: memref<32x32xbf16, #tpu.memory_space<vmem>>, %arg4: memref<1x32xf32, #tpu.memory_space<vmem>>, %arg5: memref<32x32xbf16, #tpu.memory_space<vmem>>, %arg6: memref<1x32xf32, #tpu.memory_space<vmem>>, %arg7: memref<32x32xbf16, #tpu.memory_space<vmem>>, %arg8: memref<1x32xf32, #tpu.memory_space<vmem>>, %arg9: memref<32x32xbf16, #tpu.memory_space<vmem>>, %arg10: memref<1x32xf32, #tpu.memory_space<vmem>>, %arg11: memref<1x32xf32, #tpu.memory_space<vmem>>, %arg12: memref<1x32xf32, #tpu.memory_space<vmem>>, %arg13: memref<32x32xbf16, #tpu.memory_space<vmem>>, %arg14: memref<1x32xf32, #tpu.memory_space<vmem>>, %arg15: memref<1x32xf32, #tpu.memory_space<vmem>>, %arg16: memref<1x32xf32, #tpu.memory_space<vmem>>, %arg17: memref<2x8x32xf32, #tpu.memory_space<vmem>>) attributes {dimension_semantics = [#tpu.dimension_semantics<parallel>], iteration_bounds = array<i64: 2>, scalar_prefetch = 0 : i64, scratch_operands = 0 : i64, tpu.core_type = #tpu.core_type<tc>, window_params = [{transform_indices = @transform_0, window_bounds = array<i64: 2, 8, 32>}, {transform_indices = @transform_1, window_bounds = array<i64: 2, 1, 8>}, {pipeline_mode = #tpu.pipeline_mode<synchronous>, transform_indices = @transform_2, window_bounds = array<i64: 32, 32>}, {pipeline_mode = #tpu.pipeline_mode<synchronous>, transform_indices = @transform_3, window_bounds = array<i64: 1, 32>}, {pipeline_mode = #tpu.pipeline_mode<synchronous>, transform_indices = @transform_4, window_bounds = array<i64: 32, 32>}, {pipeline_mode = #tpu.pipeline_mode<synchronous>, transform_indices = @transform_5, window_bounds = array<i64: 1, 32>}, {pipeline_mode = #tpu.pipeline_mode<synchronous>, transform_indices = @transform_6, window_bounds = array<i64: 32, 32>}, {pipeline_mode = #tpu.pipeline_mode<synchronous>, transform_indices = @transform_7, window_bounds = array<i64: 1, 32>}, {pipeline_mode = #tpu.pipeline_mode<synchronous>, transform_indices = @transform_8, window_bounds = array<i64: 32, 32>}, {pipeline_mode = #tpu.pipeline_mode<synchronous>, transform_indices = @transform_9, window_bounds = array<i64: 1, 32>}, {pipeline_mode = #tpu.pipeline_mode<synchronous>, transform_indices = @transform_10, window_bounds = array<i64: 1, 32>}, {pipeline_mode = #tpu.pipeline_mode<synchronous>, transform_indices = @transform_11, window_bounds = array<i64: 1, 32>}, {pipeline_mode = #tpu.pipeline_mode<synchronous>, transform_indices = @transform_12, window_bounds = array<i64: 32, 32>}, {pipeline_mode = #tpu.pipeline_mode<synchronous>, transform_indices = @transform_13, window_bounds = array<i64: 1, 32>}, {pipeline_mode = #tpu.pipeline_mode<synchronous>, transform_indices = @transform_14, window_bounds = array<i64: 1, 32>}, {pipeline_mode = #tpu.pipeline_mode<synchronous>, transform_indices = @transform_15, window_bounds = array<i64: 1, 32>}, {transform_indices = @transform_16, window_bounds = array<i64: 2, 8, 32>}]} {
    %c0 = arith.constant 0 : index
    %c0_0 = arith.constant 0 : index
    %c0_1 = arith.constant 0 : index
    %0 = vector.load %arg1[%c0, %c0_0, %c0_1] : memref<2x8x32xf32, #tpu.memory_space<vmem>>, vector<2x8x32xf32>
    %1 = vector.shape_cast %0 : vector<2x8x32xf32> to vector<16x32xf32>
    %2 = arith.truncf %1 : vector<16x32xf32> to vector<16x32xbf16>
    %c0_2 = arith.constant 0 : index
    %c0_3 = arith.constant 0 : index
    %3 = vector.load %arg3[%c0_2, %c0_3] : memref<32x32xbf16, #tpu.memory_space<vmem>>, vector<32x32xbf16>
    %cst = arith.constant dense<0.000000e+00> : vector<16x32xf32>
    %4 = tpu.matmul %2, %3, %cst {dimension_numbers = #tpu.dot_dimension_numbers<[1], [0], [0], [1], [0, 0, 1, 1], [], []>} : vector<16x32xbf16>, vector<32x32xbf16>, vector<16x32xf32> -> vector<16x32xf32>
    %c0_4 = arith.constant 0 : index
    %c0_5 = arith.constant 0 : index
    %5 = vector.load %arg4[%c0_4, %c0_5] : memref<1x32xf32, #tpu.memory_space<vmem>>, vector<1x32xf32>
    %6 = vector.broadcast %5 : vector<1x32xf32> to vector<16x32xf32>
    %7 = arith.addf %4, %6 : vector<16x32xf32>
    %c0_6 = arith.constant 0 : index
    %c0_7 = arith.constant 0 : index
    %8 = vector.load %arg5[%c0_6, %c0_7] : memref<32x32xbf16, #tpu.memory_space<vmem>>, vector<32x32xbf16>
    %cst_8 = arith.constant dense<0.000000e+00> : vector<16x32xf32>
    %9 = tpu.matmul %2, %8, %cst_8 {dimension_numbers = #tpu.dot_dimension_numbers<[1], [0], [0], [1], [0, 0, 1, 1], [], []>} : vector<16x32xbf16>, vector<32x32xbf16>, vector<16x32xf32> -> vector<16x32xf32>
    %c0_9 = arith.constant 0 : index
    %c0_10 = arith.constant 0 : index
    %10 = vector.load %arg6[%c0_9, %c0_10] : memref<1x32xf32, #tpu.memory_space<vmem>>, vector<1x32xf32>
    %11 = vector.broadcast %10 : vector<1x32xf32> to vector<16x32xf32>
    %12 = arith.addf %9, %11 : vector<16x32xf32>
    %c0_11 = arith.constant 0 : index
    %c0_12 = arith.constant 0 : index
    %13 = vector.load %arg7[%c0_11, %c0_12] : memref<32x32xbf16, #tpu.memory_space<vmem>>, vector<32x32xbf16>
    %cst_13 = arith.constant dense<0.000000e+00> : vector<16x32xf32>
    %14 = tpu.matmul %2, %13, %cst_13 {dimension_numbers = #tpu.dot_dimension_numbers<[1], [0], [0], [1], [0, 0, 1, 1], [], []>} : vector<16x32xbf16>, vector<32x32xbf16>, vector<16x32xf32> -> vector<16x32xf32>
    %c0_14 = arith.constant 0 : index
    %c0_15 = arith.constant 0 : index
    %15 = vector.load %arg8[%c0_14, %c0_15] : memref<1x32xf32, #tpu.memory_space<vmem>>, vector<1x32xf32>
    %16 = vector.broadcast %15 : vector<1x32xf32> to vector<16x32xf32>
    %17 = arith.addf %14, %16 : vector<16x32xf32>
    %18 = arith.truncf %7 : vector<16x32xf32> to vector<16x32xbf16>
    %19 = vector.shape_cast %18 : vector<16x32xbf16> to vector<2x8x32xbf16>
    %20 = vector.extract_strided_slice %19 {offsets = [0, 0, 0], sizes = [2, 8, 8], strides = [1, 1, 1]} : vector<2x8x32xbf16> to vector<2x8x8xbf16>
    %21 = vector.extract_strided_slice %19 {offsets = [0, 0, 8], sizes = [2, 8, 8], strides = [1, 1, 1]} : vector<2x8x32xbf16> to vector<2x8x8xbf16>
    %22 = vector.extract_strided_slice %19 {offsets = [0, 0, 16], sizes = [2, 8, 8], strides = [1, 1, 1]} : vector<2x8x32xbf16> to vector<2x8x8xbf16>
    %23 = vector.extract_strided_slice %19 {offsets = [0, 0, 24], sizes = [2, 8, 8], strides = [1, 1, 1]} : vector<2x8x32xbf16> to vector<2x8x8xbf16>
    %24 = tpu.concatenate %20, %21, %22, %23 in 0 : vector<2x8x8xbf16>, vector<2x8x8xbf16>, vector<2x8x8xbf16>, vector<2x8x8xbf16> -> vector<8x8x8xbf16>
    %25 = arith.truncf %12 : vector<16x32xf32> to vector<16x32xbf16>
    %26 = vector.shape_cast %25 : vector<16x32xbf16> to vector<2x8x32xbf16>
    %27 = vector.extract_strided_slice %26 {offsets = [0, 0, 0], sizes = [2, 8, 8], strides = [1, 1, 1]} : vector<2x8x32xbf16> to vector<2x8x8xbf16>
    %28 = vector.extract_strided_slice %26 {offsets = [0, 0, 8], sizes = [2, 8, 8], strides = [1, 1, 1]} : vector<2x8x32xbf16> to vector<2x8x8xbf16>
    %29 = vector.extract_strided_slice %26 {offsets = [0, 0, 16], sizes = [2, 8, 8], strides = [1, 1, 1]} : vector<2x8x32xbf16> to vector<2x8x8xbf16>
    %30 = vector.extract_strided_slice %26 {offsets = [0, 0, 24], sizes = [2, 8, 8], strides = [1, 1, 1]} : vector<2x8x32xbf16> to vector<2x8x8xbf16>
    %31 = tpu.concatenate %27, %28, %29, %30 in 0 : vector<2x8x8xbf16>, vector<2x8x8xbf16>, vector<2x8x8xbf16>, vector<2x8x8xbf16> -> vector<8x8x8xbf16>
    %32 = arith.truncf %17 : vector<16x32xf32> to vector<16x32xbf16>
    %33 = vector.shape_cast %32 : vector<16x32xbf16> to vector<2x8x32xbf16>
    %34 = vector.extract_strided_slice %33 {offsets = [0, 0, 0], sizes = [2, 8, 8], strides = [1, 1, 1]} : vector<2x8x32xbf16> to vector<2x8x8xbf16>
    %35 = vector.extract_strided_slice %33 {offsets = [0, 0, 8], sizes = [2, 8, 8], strides = [1, 1, 1]} : vector<2x8x32xbf16> to vector<2x8x8xbf16>
    %36 = vector.extract_strided_slice %33 {offsets = [0, 0, 16], sizes = [2, 8, 8], strides = [1, 1, 1]} : vector<2x8x32xbf16> to vector<2x8x8xbf16>
    %37 = vector.extract_strided_slice %33 {offsets = [0, 0, 24], sizes = [2, 8, 8], strides = [1, 1, 1]} : vector<2x8x32xbf16> to vector<2x8x8xbf16>
    %38 = tpu.concatenate %34, %35, %36, %37 in 0 : vector<2x8x8xbf16>, vector<2x8x8xbf16>, vector<2x8x8xbf16>, vector<2x8x8xbf16> -> vector<8x8x8xbf16>
    %c0_16 = arith.constant 0 : index
    %c0_17 = arith.constant 0 : index
    %c0_18 = arith.constant 0 : index
    %39 = vector.load %arg2[%c0_16, %c0_17, %c0_18] : memref<2x1x8xf32, #tpu.memory_space<vmem>>, vector<2x1x8xf32>
    %40 = tpu.concatenate %39, %39, %39, %39 in 0 : vector<2x1x8xf32>, vector<2x1x8xf32>, vector<2x1x8xf32>, vector<2x1x8xf32> -> vector<8x1x8xf32>
    %cst_19 = arith.constant 0.000000e+00 : f32
    %41 = vector.broadcast %cst_19 : f32 to vector<8x1x8xf32>
    %42 = arith.cmpf ogt, %40, %41 : vector<8x1x8xf32>
    "tpu.trace_start"() <{level = 10 : i32, message = "btd,bsd->bts"}> : () -> ()
    %cst_20 = arith.constant dense<0.000000e+00> : vector<8x8x8xf32>
    %43 = tpu.matmul %24, %31, %cst_20 {dimension_numbers = #tpu.dot_dimension_numbers<[2], [2], [1], [1], [0, 0, 0, 1, 1, 1], [0], [0]>} : vector<8x8x8xbf16>, vector<8x8x8xbf16>, vector<8x8x8xf32> -> vector<8x8x8xf32>
    %cst_21 = arith.constant -1.000000e+09 : f32
    "tpu.trace_stop"() : () -> ()
    %44 = vector.shape_cast %42 : vector<8x1x8xi1> to vector<8x1x8xi1>
    %45 = vector.broadcast %44 : vector<8x1x8xi1> to vector<8x8x8xi1>
    %46 = vector.broadcast %cst_21 : f32 to vector<8x8x8xf32>
    %47 = arith.select %45, %43, %46 : vector<8x8x8xi1>, vector<8x8x8xf32>
    %cst_22 = arith.constant dense<0xFF800000> : vector<8x8xf32>
    %48 = vector.multi_reduction <maximumf>, %47, %cst_22 [2] : vector<8x8x8xf32> to vector<8x8xf32>
    %49 = vector.shape_cast %48 : vector<8x8xf32> to vector<8x8x1xf32>
    %50 = vector.broadcast %49 : vector<8x8x1xf32> to vector<8x8x8xf32>
    %51 = arith.subf %47, %50 : vector<8x8x8xf32>
    %52 = math.exp %51 : vector<8x8x8xf32>
    %cst_23 = arith.constant dense<0.000000e+00> : vector<8x8xf32>
    %53 = vector.multi_reduction <add>, %52, %cst_23 [2] : vector<8x8x8xf32> to vector<8x8xf32>
    %54 = vector.shape_cast %53 : vector<8x8xf32> to vector<8x8x1xf32>
    %55 = tpu.reciprocal %54 {approx = true} : vector<8x8x1xf32> -> vector<8x8x1xf32>
    %56 = vector.broadcast %55 : vector<8x8x1xf32> to vector<8x8x8xf32>
    %57 = arith.mulf %52, %56 : vector<8x8x8xf32>
    %58 = arith.truncf %57 : vector<8x8x8xf32> to vector<8x8x8xbf16>
    "tpu.trace_start"() <{level = 10 : i32, message = "bts,bsd->btd"}> : () -> ()
    %cst_24 = arith.constant dense<0.000000e+00> : vector<8x8x8xf32>
    %59 = tpu.matmul %58, %38, %cst_24 {dimension_numbers = #tpu.dot_dimension_numbers<[2], [1], [1], [2], [0, 0, 0, 1, 1, 2], [0], [0]>} : vector<8x8x8xbf16>, vector<8x8x8xbf16>, vector<8x8x8xf32> -> vector<8x8x8xf32>
    "tpu.trace_stop"() : () -> ()
    %60 = vector.extract_strided_slice %59 {offsets = [0, 0, 0], sizes = [2, 8, 8], strides = [1, 1, 1]} : vector<8x8x8xf32> to vector<2x8x8xf32>
    %61 = vector.shape_cast %60 : vector<2x8x8xf32> to vector<16x8xf32>
    %62 = vector.extract_strided_slice %59 {offsets = [2, 0, 0], sizes = [2, 8, 8], strides = [1, 1, 1]} : vector<8x8x8xf32> to vector<2x8x8xf32>
    %63 = vector.shape_cast %62 : vector<2x8x8xf32> to vector<16x8xf32>
    %64 = vector.extract_strided_slice %59 {offsets = [4, 0, 0], sizes = [2, 8, 8], strides = [1, 1, 1]} : vector<8x8x8xf32> to vector<2x8x8xf32>
    %65 = vector.shape_cast %64 : vector<2x8x8xf32> to vector<16x8xf32>
    %66 = vector.extract_strided_slice %59 {offsets = [6, 0, 0], sizes = [2, 8, 8], strides = [1, 1, 1]} : vector<8x8x8xf32> to vector<2x8x8xf32>
    %67 = vector.shape_cast %66 : vector<2x8x8xf32> to vector<16x8xf32>
    %68 = tpu.concatenate %61, %63, %65, %67 in 1 : vector<16x8xf32>, vector<16x8xf32>, vector<16x8xf32>, vector<16x8xf32> -> vector<16x32xf32>
    %69 = arith.truncf %68 : vector<16x32xf32> to vector<16x32xbf16>
    %c0_25 = arith.constant 0 : index
    %c0_26 = arith.constant 0 : index
    %70 = vector.load %arg9[%c0_25, %c0_26] : memref<32x32xbf16, #tpu.memory_space<vmem>>, vector<32x32xbf16>
    %cst_27 = arith.constant dense<0.000000e+00> : vector<16x32xf32>
    %71 = tpu.matmul %69, %70, %cst_27 {dimension_numbers = #tpu.dot_dimension_numbers<[1], [0], [0], [1], [0, 0, 1, 1], [], []>} : vector<16x32xbf16>, vector<32x32xbf16>, vector<16x32xf32> -> vector<16x32xf32>
    %c0_28 = arith.constant 0 : index
    %c0_29 = arith.constant 0 : index
    %72 = vector.load %arg10[%c0_28, %c0_29] : memref<1x32xf32, #tpu.memory_space<vmem>>, vector<1x32xf32>
    %73 = vector.broadcast %72 : vector<1x32xf32> to vector<16x32xf32>
    %74 = arith.addf %71, %73 : vector<16x32xf32>
    %75 = arith.addf %1, %74 : vector<16x32xf32>
    %c0_30 = arith.constant 0 : index
    %c0_31 = arith.constant 0 : index
    %76 = vector.load %arg11[%c0_30, %c0_31] : memref<1x32xf32, #tpu.memory_space<vmem>>, vector<1x32xf32>
    %c0_32 = arith.constant 0 : index
    %c0_33 = arith.constant 0 : index
    %77 = vector.load %arg12[%c0_32, %c0_33] : memref<1x32xf32, #tpu.memory_space<vmem>>, vector<1x32xf32>
    %cst_34 = arith.constant dense<0.000000e+00> : vector<16xf32>
    %78 = vector.multi_reduction <add>, %75, %cst_34 [1] : vector<16x32xf32> to vector<16xf32>
    %79 = vector.shape_cast %78 : vector<16xf32> to vector<16x1xf32>
    %cst_35 = arith.constant 3.200000e+01 : f32
    %80 = vector.broadcast %cst_35 : f32 to vector<16x1xf32>
    %81 = arith.divf %79, %80 : vector<16x1xf32>
    %82 = vector.broadcast %81 : vector<16x1xf32> to vector<16x32xf32>
    %83 = arith.subf %75, %82 : vector<16x32xf32>
    %84 = arith.mulf %83, %83 : vector<16x32xf32>
    %cst_36 = arith.constant dense<0.000000e+00> : vector<16xf32>
    %85 = vector.multi_reduction <add>, %84, %cst_36 [1] : vector<16x32xf32> to vector<16xf32>
    %86 = vector.shape_cast %85 : vector<16xf32> to vector<16x1xf32>
    %cst_37 = arith.constant 3.200000e+01 : f32
    %87 = vector.broadcast %cst_37 : f32 to vector<16x1xf32>
    %88 = arith.divf %86, %87 : vector<16x1xf32>
    %cst_38 = arith.constant 9.99999974E-6 : f32
    %89 = vector.broadcast %cst_38 : f32 to vector<16x1xf32>
    %90 = arith.addf %88, %89 : vector<16x1xf32>
    %91 = math.rsqrt %90 : vector<16x1xf32>
    %92 = vector.broadcast %91 : vector<16x1xf32> to vector<16x32xf32>
    %93 = arith.mulf %83, %92 : vector<16x32xf32>
    %94 = vector.broadcast %76 : vector<1x32xf32> to vector<16x32xf32>
    %95 = arith.mulf %93, %94 : vector<16x32xf32>
    %96 = vector.broadcast %77 : vector<1x32xf32> to vector<16x32xf32>
    %97 = arith.addf %95, %96 : vector<16x32xf32>
    %98 = arith.truncf %97 : vector<16x32xf32> to vector<16x32xbf16>
    %c0_39 = arith.constant 0 : index
    %c0_40 = arith.constant 0 : index
    %99 = vector.load %arg13[%c0_39, %c0_40] : memref<32x32xbf16, #tpu.memory_space<vmem>>, vector<32x32xbf16>
    %cst_41 = arith.constant dense<0.000000e+00> : vector<16x32xf32>
    %100 = tpu.matmul %98, %99, %cst_41 {dimension_numbers = #tpu.dot_dimension_numbers<[1], [0], [0], [1], [0, 0, 1, 1], [], []>} : vector<16x32xbf16>, vector<32x32xbf16>, vector<16x32xf32> -> vector<16x32xf32>
    %c0_42 = arith.constant 0 : index
    %c0_43 = arith.constant 0 : index
    %101 = vector.load %arg14[%c0_42, %c0_43] : memref<1x32xf32, #tpu.memory_space<vmem>>, vector<1x32xf32>
    %102 = vector.broadcast %101 : vector<1x32xf32> to vector<16x32xf32>
    %103 = arith.addf %100, %102 : vector<16x32xf32>
    %cst_44 = arith.constant 0.000000e+00 : f32
    %104 = vector.broadcast %cst_44 : f32 to vector<16x32xf32>
    %105 = arith.maximumf %103, %104 : vector<16x32xf32>
    %106 = arith.addf %97, %105 : vector<16x32xf32>
    %c0_45 = arith.constant 0 : index
    %c0_46 = arith.constant 0 : index
    %107 = vector.load %arg15[%c0_45, %c0_46] : memref<1x32xf32, #tpu.memory_space<vmem>>, vector<1x32xf32>
    %c0_47 = arith.constant 0 : index
    %c0_48 = arith.constant 0 : index
    %108 = vector.load %arg16[%c0_47, %c0_48] : memref<1x32xf32, #tpu.memory_space<vmem>>, vector<1x32xf32>
    %cst_49 = arith.constant dense<0.000000e+00> : vector<16xf32>
    %109 = vector.multi_reduction <add>, %106, %cst_49 [1] : vector<16x32xf32> to vector<16xf32>
    %110 = vector.shape_cast %109 : vector<16xf32> to vector<16x1xf32>
    %cst_50 = arith.constant 3.200000e+01 : f32
    %111 = vector.broadcast %cst_50 : f32 to vector<16x1xf32>
    %112 = arith.divf %110, %111 : vector<16x1xf32>
    %113 = vector.broadcast %112 : vector<16x1xf32> to vector<16x32xf32>
    %114 = arith.subf %106, %113 : vector<16x32xf32>
    %115 = arith.mulf %114, %114 : vector<16x32xf32>
    %cst_51 = arith.constant dense<0.000000e+00> : vector<16xf32>
    %116 = vector.multi_reduction <add>, %115, %cst_51 [1] : vector<16x32xf32> to vector<16xf32>
    %117 = vector.shape_cast %116 : vector<16xf32> to vector<16x1xf32>
    %cst_52 = arith.constant 3.200000e+01 : f32
    %118 = vector.broadcast %cst_52 : f32 to vector<16x1xf32>
    %119 = arith.divf %117, %118 : vector<16x1xf32>
    %cst_53 = arith.constant 9.99999974E-6 : f32
    %120 = vector.broadcast %cst_53 : f32 to vector<16x1xf32>
    %121 = arith.addf %119, %120 : vector<16x1xf32>
    %122 = math.rsqrt %121 : vector<16x1xf32>
    %123 = vector.broadcast %122 : vector<16x1xf32> to vector<16x32xf32>
    %124 = arith.mulf %114, %123 : vector<16x32xf32>
    %125 = vector.broadcast %107 : vector<1x32xf32> to vector<16x32xf32>
    %126 = arith.mulf %124, %125 : vector<16x32xf32>
    %127 = vector.broadcast %108 : vector<1x32xf32> to vector<16x32xf32>
    %128 = arith.addf %126, %127 : vector<16x32xf32>
    %129 = vector.shape_cast %128 : vector<16x32xf32> to vector<2x8x32xf32>
    %c0_54 = arith.constant 0 : index
    %c0_55 = arith.constant 0 : index
    %c0_56 = arith.constant 0 : index
    %130 = vector.load %arg17[%c0_54, %c0_55, %c0_56] : memref<2x8x32xf32, #tpu.memory_space<vmem>>, vector<2x8x32xf32>
    tpu.vector_store %arg17[%c0_54, %c0_55, %c0_56], %129 {strides = array<i32>} : memref<2x8x32xf32, #tpu.memory_space<vmem>>, vector<2x8x32xf32>,
    return
  }
  func.func @transform_0(%arg0: i32) -> (i32, i32, i32) {
    %c0_i32 = arith.constant 0 : i32
    %c0_i32_0 = arith.constant 0 : i32
    %c0_i32_1 = arith.constant 0 : i32
    return %arg0, %c0_i32, %c0_i32_0 : i32, i32, i32
  }
  func.func @transform_1(%arg0: i32) -> (i32, i32, i32) {
    %c0_i32 = arith.constant 0 : i32
    %c0_i32_0 = arith.constant 0 : i32
    %c0_i32_1 = arith.constant 0 : i32
    return %arg0, %c0_i32, %c0_i32_0 : i32, i32, i32
  }
  func.func @transform_2(%arg0: i32) -> (i32, i32) {
    %c0_i32 = arith.constant 0 : i32
    %c0_i32_0 = arith.constant 0 : i32
    %c0_i32_1 = arith.constant 0 : i32
    return %c0_i32, %c0_i32_0 : i32, i32
  }
  func.func @transform_3(%arg0: i32) -> (i32, i32) {
    %c0_i32 = arith.constant 0 : i32
    %c0_i32_0 = arith.constant 0 : i32
    %c0_i32_1 = arith.constant 0 : i32
    return %c0_i32, %c0_i32_0 : i32, i32
  }
  func.func @transform_4(%arg0: i32) -> (i32, i32) {
    %c0_i32 = arith.constant 0 : i32
    %c0_i32_0 = arith.constant 0 : i32
    %c0_i32_1 = arith.constant 0 : i32
    return %c0_i32, %c0_i32_0 : i32, i32
  }
  func.func @transform_5(%arg0: i32) -> (i32, i32) {
    %c0_i32 = arith.constant 0 : i32
    %c0_i32_0 = arith.constant 0 : i32
    %c0_i32_1 = arith.constant 0 : i32
    return %c0_i32, %c0_i32_0 : i32, i32
  }
  func.func @transform_6(%arg0: i32) -> (i32, i32) {
    %c0_i32 = arith.constant 0 : i32
    %c0_i32_0 = arith.constant 0 : i32
    %c0_i32_1 = arith.constant 0 : i32
    return %c0_i32, %c0_i32_0 : i32, i32
  }
  func.func @transform_7(%arg0: i32) -> (i32, i32) {
    %c0_i32 = arith.constant 0 : i32
    %c0_i32_0 = arith.constant 0 : i32
    %c0_i32_1 = arith.constant 0 : i32
    return %c0_i32, %c0_i32_0 : i32, i32
  }
  func.func @transform_8(%arg0: i32) -> (i32, i32) {
    %c0_i32 = arith.constant 0 : i32
    %c0_i32_0 = arith.constant 0 : i32
    %c0_i32_1 = arith.constant 0 : i32
    return %c0_i32, %c0_i32_0 : i32, i32
  }
  func.func @transform_9(%arg0: i32) -> (i32, i32) {
    %c0_i32 = arith.constant 0 : i32
    %c0_i32_0 = arith.constant 0 : i32
    %c0_i32_1 = arith.constant 0 : i32
    return %c0_i32, %c0_i32_0 : i32, i32
  }
  func.func @transform_10(%arg0: i32) -> (i32, i32) {
    %c0_i32 = arith.constant 0 : i32
    %c0_i32_0 = arith.constant 0 : i32
    %c0_i32_1 = arith.constant 0 : i32
    return %c0_i32, %c0_i32_0 : i32, i32
  }
  func.func @transform_11(%arg0: i32) -> (i32, i32) {
    %c0_i32 = arith.constant 0 : i32
    %c0_i32_0 = arith.constant 0 : i32
    %c0_i32_1 = arith.constant 0 : i32
    return %c0_i32, %c0_i32_0 : i32, i32
  }
  func.func @transform_12(%arg0: i32) -> (i32, i32) {
    %c0_i32 = arith.constant 0 : i32
    %c0_i32_0 = arith.constant 0 : i32
    %c0_i32_1 = arith.constant 0 : i32
    return %c0_i32, %c0_i32_0 : i32, i32
  }
  func.func @transform_13(%arg0: i32) -> (i32, i32) {
    %c0_i32 = arith.constant 0 : i32
    %c0_i32_0 = arith.constant 0 : i32
    %c0_i32_1 = arith.constant 0 : i32
    return %c0_i32, %c0_i32_0 : i32, i32
  }
  func.func @transform_14(%arg0: i32) -> (i32, i32) {
    %c0_i32 = arith.constant 0 : i32
    %c0_i32_0 = arith.constant 0 : i32
    %c0_i32_1 = arith.constant 0 : i32
    return %c0_i32, %c0_i32_0 : i32, i32
  }
  func.func @transform_15(%arg0: i32) -> (i32, i32) {
    %c0_i32 = arith.constant 0 : i32
    %c0_i32_0 = arith.constant 0 : i32
    %c0_i32_1 = arith.constant 0 : i32
    return %c0_i32, %c0_i32_0 : i32, i32
  }
  func.func @transform_16(%arg0: i32) -> (i32, i32, i32) {
    %c0_i32 = arith.constant 0 : i32
    %c0_i32_0 = arith.constant 0 : i32
    %c0_i32_1 = arith.constant 0 : i32
    return %arg0, %c0_i32, %c0_i32_0 : i32, i32, i32
  }
}

</mosaic_0001>

<llo_original>
// kernel: tpu_custom_call.1
$region0: #{tpu_custom_call.1}
  #allocation0 [shape = 'u32[]', space=smem, size = 0x4, offset = 0x4, fixed_abs, tag = 'smem constant byte address 0x4 - core index']
  #allocation1 [shape = 'u32[144,128]{1,0:T(1,128)}', space=vmem, size = 0x12000, scoped, tag = 'internal scratch']
  %s0 = inlined_call_operand.hbm [shape: f32[4,8,32], index: 0, kind: input, shape index: {}]
  %s1 = inlined_call_operand.hbm [shape: f32[4,1,8], index: 1, kind: input, shape index: {}]
  %s2 = inlined_call_operand.hbm [shape: bf16[32,32], index: 2, kind: input, shape index: {}]
  %s3 = inlined_call_operand.vmem [shape: f32[1,32], index: 3, kind: input, shape index: {}]
  %s4 = inlined_call_operand.hbm [shape: bf16[32,32], index: 4, kind: input, shape index: {}]
  %s5 = inlined_call_operand.vmem [shape: f32[1,32], index: 5, kind: input, shape index: {}]
  %s6 = inlined_call_operand.vmem [shape: bf16[32,32], index: 6, kind: input, shape index: {}]
  %s7 = inlined_call_operand.hbm [shape: f32[1,32], index: 7, kind: input, shape index: {}]
  %s8 = inlined_call_operand.hbm [shape: bf16[32,32], index: 8, kind: input, shape index: {}]
  %s9 = inlined_call_operand.hbm [shape: f32[1,32], index: 9, kind: input, shape index: {}]
  %s10 = inlined_call_operand.vmem [shape: f32[1,32], index: 10, kind: input, shape index: {}]
  %s11 = inlined_call_operand.vmem [shape: f32[1,32], index: 11, kind: input, shape index: {}]
  %s12 = inlined_call_operand.vmem [shape: bf16[32,32], index: 12, kind: input, shape index: {}]
  %s13 = inlined_call_operand.vmem [shape: f32[1,32], index: 13, kind: input, shape index: {}]
  %s14 = inlined_call_operand.vmem [shape: f32[1,32], index: 14, kind: input, shape index: {}]
  %s15 = inlined_call_operand.vmem [shape: f32[1,32], index: 15, kind: input, shape index: {}]
  %s16 = inlined_call_operand.hbm [shape: f32[4,8,32], index: 16, kind: output, shape index: {}]
  %s17 = sld [smem:[#allocation0]]
  $region125: #{tpu_custom_call.1} parent=0
    _
  %s19 = ssub.s32 1, %s17
  %s20 = scalar_select 0, %s19, %s17
  $region1: #{tpu_custom_call.1} parent=0
    #allocation2 [shape = 'u8[16384]{0}', space=vmem, size = 0x4000, scoped, tag = 'input window, operand 0']
    #allocation3 [shape = 's32[2]{0}', space=sflag, size = 0x8, scoped, tag = 'scoped memory for tpu_custom_call.1']
    #allocation4 [shape = 's32[2]{0}', space=sflag, size = 0x8, scoped, tag = 'scoped memory for tpu_custom_call.1']
    #allocation5 [shape = 'u8[2048]{0}', space=vmem, size = 0x800, scoped, tag = 'input window, operand 1']
    #allocation6 [shape = 's32[2]{0}', space=sflag, size = 0x8, scoped, tag = 'scoped memory for tpu_custom_call.1']
    #allocation7 [shape = 'u8[8192]{0}', space=vmem, size = 0x2000, scoped, tag = 'input window, operand 2, single buffered']
    #allocation8 [shape = 'u8[8192]{0}', space=vmem, size = 0x2000, scoped, tag = 'input window, operand 4, single buffered']
    #allocation9 [shape = 's32[1]{0}', space=sflag, size = 0x4, scoped, tag = 'scoped memory for tpu_custom_call.1']
    #allocation10 [shape = 'u8[512]{0}', space=vmem, size = 0x400, scoped, tag = 'input window, operand 7, single buffered']
    #allocation11 [shape = 'u8[8192]{0}', space=vmem, size = 0x2000, scoped, tag = 'input window, operand 8, single buffered']
    #allocation12 [shape = 's32[1]{0}', space=sflag, size = 0x4, scoped, tag = 'scoped memory for tpu_custom_call.1']
    #allocation13 [shape = 'u8[512]{0}', space=vmem, size = 0x400, scoped, tag = 'input window, operand 9, single buffered']
    #allocation14 [shape = 'u8[16384]{0}', space=vmem, size = 0x4000, scoped, tag = 'output window, operand 0']
    %21 = vsyncpa [#allocation3], 0
    %s22 = scalar_lea.sflag [#allocation3], 1
    %23 = vsyncpa %s22, 0
    %24 = vsyncpa [#allocation6], 0
    %s25 = scalar_lea.sflag [#allocation6], 1
    %26 = vsyncpa %s25, 0
    %27 = vsyncpa [#allocation9], 0
    %28 = vsyncpa [#allocation12], 0
    %29 = vsyncpa [#allocation4], 0
    %s30 = scalar_lea.sflag [#allocation4], 1
    %31 = vsyncpa %s30, 0
    loop: start=0, step=1, limit=4
    $region2: #{tpu_custom_call.1} parent=1 // loop_pre_header
      _
    $region3: #{tpu_custom_call.1} parent=1 // loop_header
      %s33 = sphi 0, %s37
      %p34 = scmp.ge.s32.totalorder %s33, 4
      %s43 = sphi 0, %s45
      %s46 = sphi 0, %s43
      %s47 = sphi 0, %s46
      %s63 = sphi 0, %s47
      %s69 = sphi 0, %s71
      %s72 = sphi 0, %s69
      %s73 = sphi 0, %s72
      %s89 = sphi 0, %s73
      %s93 = sphi 0, %s93
      %s95 = sphi 0, %s93
      %s96 = sphi 0, %s95
      %s110 = sphi 0, %s96
      %s114 = sphi 0, %s114
      %s116 = sphi 0, %s114
      %s117 = sphi 0, %s116
      %s131 = sphi 0, %s117
      %s135 = sphi 0, %s135
      %s137 = sphi 0, %s135
      %s138 = sphi 0, %s137
      %s152 = sphi 0, %s138
      %s156 = sphi 0, %s156
      %s158 = sphi 0, %s156
      %s159 = sphi 0, %s158
      %s173 = sphi 0, %s159
      %s177 = sphi 0, %s177
      %s179 = sphi 0, %s177
      %s180 = sphi 0, %s179
      %s194 = sphi 0, %s180
      %s198 = sphi 0, %s198
      %s200 = sphi 0, %s198
      %s201 = sphi 0, %s200
      %s215 = sphi 0, %s201
      %s219 = sphi 0, %s219
      %s221 = sphi 0, %s219
      %s222 = sphi 0, %s221
      %s236 = sphi 0, %s222
      %s240 = sphi 0, %s240
      %s242 = sphi 0, %s240
      %s243 = sphi 0, %s242
      %s257 = sphi 0, %s243
      %s261 = sphi 0, %s261
      %s263 = sphi 0, %s261
      %s264 = sphi 0, %s263
      %s278 = sphi 0, %s264
      %s282 = sphi 0, %s282
      %s284 = sphi 0, %s282
      %s285 = sphi 0, %s284
      %s299 = sphi 0, %s285
      %s303 = sphi 0, %s303
      %s305 = sphi 0, %s303
      %s306 = sphi 0, %s305
      %s320 = sphi 0, %s306
      %s324 = sphi 0, %s324
      %s326 = sphi 0, %s324
      %s327 = sphi 0, %s326
      %s341 = sphi 0, %s327
      %s345 = sphi 0, %s345
      %s347 = sphi 0, %s345
      %s348 = sphi 0, %s347
      %s362 = sphi 0, %s348
      %s366 = sphi 0, %s366
      %s368 = sphi 0, %s366
      %s369 = sphi 0, %s368
      %s383 = sphi 0, %s369
      %s389 = sphi 0, %s391
      %s392 = sphi 0, %s389
      %s393 = sphi 0, %s392
      %s409 = sphi 0, %s393
    $region4: #{tpu_custom_call.1} parent=1 // loop_header_branch
      %36 = sbr.rel (%p34) target = $region8
    $region5: #{tpu_custom_call.1} parent=1 // loop_body
      %s38 = ssub.s32 %s33, 1
      %s39 = ssub.s32 %s33, 2
      %s40 = sadd.s32 %s33, 1
      %s41 = ssub.s32 %s33, %s40
      %p42 = scmp.eq.s32.totalorder %s41, 0
      %s44 = sadd.s32 %s43, 1
      %s45 = scalar_select %p42, %s43, %s44
      %p48 = pneg %p42
      %p49 = scmp.eq.s32.totalorder %s33, 1
      %p50 = por %p48, %p49
      %p51 = scmp.ne.s32.totalorder %s43, %s46
      %p52 = scmp.eq.s32.totalorder %s33, 0
      %p53 = por %p51, %p52
      %p54 = scmp.ne.s32.totalorder %s43, %s46
      %p55 = scmp.eq.s32.totalorder %s38, 1
      %p56 = por %p54, %p55
      %p57 = scmp.ne.s32.totalorder %s46, %s47
      %p58 = scmp.eq.s32.totalorder %s38, 0
      %p59 = por %p57, %p58
      %p60 = scmp.ne.s32.totalorder %s46, %s47
      %p61 = scmp.eq.s32.totalorder %s39, 1
      %p62 = por %p60, %p61
      %p64 = scmp.ne.s32.totalorder %s47, %s63
      %p65 = scmp.eq.s32.totalorder %s39, 0
      %p66 = por %p64, %p65
      %s67 = ssub.s32 %s33, %s40
      %p68 = scmp.eq.s32.totalorder %s67, 0
      %s70 = sadd.s32 %s69, 1
      %s71 = scalar_select %p68, %s69, %s70
      %p74 = pneg %p68
      %p75 = scmp.eq.s32.totalorder %s33, 1
      %p76 = por %p74, %p75
      %p77 = scmp.ne.s32.totalorder %s69, %s72
      %p78 = scmp.eq.s32.totalorder %s33, 0
      %p79 = por %p77, %p78
      %p80 = scmp.ne.s32.totalorder %s69, %s72
      %p81 = scmp.eq.s32.totalorder %s38, 1
      %p82 = por %p80, %p81
      %p83 = scmp.ne.s32.totalorder %s72, %s73
      %p84 = scmp.eq.s32.totalorder %s38, 0
      %p85 = por %p83, %p84
      %p86 = scmp.ne.s32.totalorder %s72, %s73
      %p87 = scmp.eq.s32.totalorder %s39, 1
      %p88 = por %p86, %p87
      %p90 = scmp.ne.s32.totalorder %s73, %s89
      %p91 = scmp.eq.s32.totalorder %s39, 0
      %p92 = por %p90, %p91
      %s94 = sadd.s32 %s93, 1
      %p97 = scmp.eq.s32.totalorder %s33, 1
      %p98 = scmp.ne.s32.totalorder %s93, %s95
      %p99 = scmp.eq.s32.totalorder %s33, 0
      %p100 = por %p98, %p99
      %p101 = scmp.ne.s32.totalorder %s93, %s95
      %p102 = scmp.eq.s32.totalorder %s38, 1
      %p103 = por %p101, %p102
      %p104 = scmp.ne.s32.totalorder %s95, %s96
      %p105 = scmp.eq.s32.totalorder %s38, 0
      %p106 = por %p104, %p105
      %p107 = scmp.ne.s32.totalorder %s95, %s96
      %p108 = scmp.eq.s32.totalorder %s39, 1
      %p109 = por %p107, %p108
      %p111 = scmp.ne.s32.totalorder %s96, %s110
      %p112 = scmp.eq.s32.totalorder %s39, 0
      %p113 = por %p111, %p112
      %s115 = sadd.s32 %s114, 1
      %p118 = scmp.eq.s32.totalorder %s33, 1
      %p119 = scmp.ne.s32.totalorder %s114, %s116
      %p120 = scmp.eq.s32.totalorder %s33, 0
      %p121 = por %p119, %p120
      %p122 = scmp.ne.s32.totalorder %s114, %s116
      %p123 = scmp.eq.s32.totalorder %s38, 1
      %p124 = por %p122, %p123
      %p125 = scmp.ne.s32.totalorder %s116, %s117
      %p126 = scmp.eq.s32.totalorder %s38, 0
      %p127 = por %p125, %p126
      %p128 = scmp.ne.s32.totalorder %s116, %s117
      %p129 = scmp.eq.s32.totalorder %s39, 1
      %p130 = por %p128, %p129
      %p132 = scmp.ne.s32.totalorder %s117, %s131
      %p133 = scmp.eq.s32.totalorder %s39, 0
      %p134 = por %p132, %p133
      %s136 = sadd.s32 %s135, 1
      %p139 = scmp.eq.s32.totalorder %s33, 1
      %p140 = scmp.ne.s32.totalorder %s135, %s137
      %p141 = scmp.eq.s32.totalorder %s33, 0
      %p142 = por %p140, %p141
      %p143 = scmp.ne.s32.totalorder %s135, %s137
      %p144 = scmp.eq.s32.totalorder %s38, 1
      %p145 = por %p143, %p144
      %p146 = scmp.ne.s32.totalorder %s137, %s138
      %p147 = scmp.eq.s32.totalorder %s38, 0
      %p148 = por %p146, %p147
      %p149 = scmp.ne.s32.totalorder %s137, %s138
      %p150 = scmp.eq.s32.totalorder %s39, 1
      %p151 = por %p149, %p150
      %p153 = scmp.ne.s32.totalorder %s138, %s152
      %p154 = scmp.eq.s32.totalorder %s39, 0
      %p155 = por %p153, %p154
      %s157 = sadd.s32 %s156, 1
      %p160 = scmp.eq.s32.totalorder %s33, 1
      %p161 = scmp.ne.s32.totalorder %s156, %s158
      %p162 = scmp.eq.s32.totalorder %s33, 0
      %p163 = por %p161, %p162
      %p164 = scmp.ne.s32.totalorder %s156, %s158
      %p165 = scmp.eq.s32.totalorder %s38, 1
      %p166 = por %p164, %p165
      %p167 = scmp.ne.s32.totalorder %s158, %s159
      %p168 = scmp.eq.s32.totalorder %s38, 0
      %p169 = por %p167, %p168
      %p170 = scmp.ne.s32.totalorder %s158, %s159
      %p171 = scmp.eq.s32.totalorder %s39, 1
      %p172 = por %p170, %p171
      %p174 = scmp.ne.s32.totalorder %s159, %s173
      %p175 = scmp.eq.s32.totalorder %s39, 0
      %p176 = por %p174, %p175
      %s178 = sadd.s32 %s177, 1
      %p181 = scmp.eq.s32.totalorder %s33, 1
      %p182 = scmp.ne.s32.totalorder %s177, %s179
      %p183 = scmp.eq.s32.totalorder %s33, 0
      %p184 = por %p182, %p183
      %p185 = scmp.ne.s32.totalorder %s177, %s179
      %p186 = scmp.eq.s32.totalorder %s38, 1
      %p187 = por %p185, %p186
      %p188 = scmp.ne.s32.totalorder %s179, %s180
      %p189 = scmp.eq.s32.totalorder %s38, 0
      %p190 = por %p188, %p189
      %p191 = scmp.ne.s32.totalorder %s179, %s180
      %p192 = scmp.eq.s32.totalorder %s39, 1
      %p193 = por %p191, %p192
      %p195 = scmp.ne.s32.totalorder %s180, %s194
      %p196 = scmp.eq.s32.totalorder %s39, 0
      %p197 = por %p195, %p196
      %s199 = sadd.s32 %s198, 1
      %p202 = scmp.eq.s32.totalorder %s33, 1
      %p203 = scmp.ne.s32.totalorder %s198, %s200
      %p204 = scmp.eq.s32.totalorder %s33, 0
      %p205 = por %p203, %p204
      %p206 = scmp.ne.s32.totalorder %s198, %s200
      %p207 = scmp.eq.s32.totalorder %s38, 1
      %p208 = por %p206, %p207
      %p209 = scmp.ne.s32.totalorder %s200, %s201
      %p210 = scmp.eq.s32.totalorder %s38, 0
      %p211 = por %p209, %p210
      %p212 = scmp.ne.s32.totalorder %s200, %s201
      %p213 = scmp.eq.s32.totalorder %s39, 1
      %p214 = por %p212, %p213
      %p216 = scmp.ne.s32.totalorder %s201, %s215
      %p217 = scmp.eq.s32.totalorder %s39, 0
      %p218 = por %p216, %p217
      %s220 = sadd.s32 %s219, 1
      %p223 = scmp.eq.s32.totalorder %s33, 1
      %p224 = scmp.ne.s32.totalorder %s219, %s221
      %p225 = scmp.eq.s32.totalorder %s33, 0
      %p226 = por %p224, %p225
      %p227 = scmp.ne.s32.totalorder %s219, %s221
      %p228 = scmp.eq.s32.totalorder %s38, 1
      %p229 = por %p227, %p228
      %p230 = scmp.ne.s32.totalorder %s221, %s222
      %p231 = scmp.eq.s32.totalorder %s38, 0
      %p232 = por %p230, %p231
      %p233 = scmp.ne.s32.totalorder %s221, %s222
      %p234 = scmp.eq.s32.totalorder %s39, 1
      %p235 = por %p233, %p234
      %p237 = scmp.ne.s32.totalorder %s222, %s236
      %p238 = scmp.eq.s32.totalorder %s39, 0
      %p239 = por %p237, %p238
      %s241 = sadd.s32 %s240, 1
      %p244 = scmp.eq.s32.totalorder %s33, 1
      %p245 = scmp.ne.s32.totalorder %s240, %s242
      %p246 = scmp.eq.s32.totalorder %s33, 0
      %p247 = por %p245, %p246
      %p248 = scmp.ne.s32.totalorder %s240, %s242
      %p249 = scmp.eq.s32.totalorder %s38, 1
      %p250 = por %p248, %p249
      %p251 = scmp.ne.s32.totalorder %s242, %s243
      %p252 = scmp.eq.s32.totalorder %s38, 0
      %p253 = por %p251, %p252
      %p254 = scmp.ne.s32.totalorder %s242, %s243
      %p255 = scmp.eq.s32.totalorder %s39, 1
      %p256 = por %p254, %p255
      %p258 = scmp.ne.s32.totalorder %s243, %s257
      %p259 = scmp.eq.s32.totalorder %s39, 0
      %p260 = por %p258, %p259
      %s262 = sadd.s32 %s261, 1
      %p265 = scmp.eq.s32.totalorder %s33, 1
      %p266 = scmp.ne.s32.totalorder %s261, %s263
      %p267 = scmp.eq.s32.totalorder %s33, 0
      %p268 = por %p266, %p267
      %p269 = scmp.ne.s32.totalorder %s261, %s263
      %p270 = scmp.eq.s32.totalorder %s38, 1
      %p271 = por %p269, %p270
      %p272 = scmp.ne.s32.totalorder %s263, %s264
      %p273 = scmp.eq.s32.totalorder %s38, 0
      %p274 = por %p272, %p273
      %p275 = scmp.ne.s32.totalorder %s263, %s264
      %p276 = scmp.eq.s32.totalorder %s39, 1
      %p277 = por %p275, %p276
      %p279 = scmp.ne.s32.totalorder %s264, %s278
      %p280 = scmp.eq.s32.totalorder %s39, 0
      %p281 = por %p279, %p280
      %s283 = sadd.s32 %s282, 1
      %p286 = scmp.eq.s32.totalorder %s33, 1
      %p287 = scmp.ne.s32.totalorder %s282, %s284
      %p288 = scmp.eq.s32.totalorder %s33, 0
      %p289 = por %p287, %p288
      %p290 = scmp.ne.s32.totalorder %s282, %s284
      %p291 = scmp.eq.s32.totalorder %s38, 1
      %p292 = por %p290, %p291
      %p293 = scmp.ne.s32.totalorder %s284, %s285
      %p294 = scmp.eq.s32.totalorder %s38, 0
      %p295 = por %p293, %p294
      %p296 = scmp.ne.s32.totalorder %s284, %s285
      %p297 = scmp.eq.s32.totalorder %s39, 1
      %p298 = por %p296, %p297
      %p300 = scmp.ne.s32.totalorder %s285, %s299
      %p301 = scmp.eq.s32.totalorder %s39, 0
      %p302 = por %p300, %p301
      %s304 = sadd.s32 %s303, 1
      %p307 = scmp.eq.s32.totalorder %s33, 1
      %p308 = scmp.ne.s32.totalorder %s303, %s305
      %p309 = scmp.eq.s32.totalorder %s33, 0
      %p310 = por %p308, %p309
      %p311 = scmp.ne.s32.totalorder %s303, %s305
      %p312 = scmp.eq.s32.totalorder %s38, 1
      %p313 = por %p311, %p312
      %p314 = scmp.ne.s32.totalorder %s305, %s306
      %p315 = scmp.eq.s32.totalorder %s38, 0
      %p316 = por %p314, %p315
      %p317 = scmp.ne.s32.totalorder %s305, %s306
      %p318 = scmp.eq.s32.totalorder %s39, 1
      %p319 = por %p317, %p318
      %p321 = scmp.ne.s32.totalorder %s306, %s320
      %p322 = scmp.eq.s32.totalorder %s39, 0
      %p323 = por %p321, %p322
      %s325 = sadd.s32 %s324, 1
      %p328 = scmp.eq.s32.totalorder %s33, 1
      %p329 = scmp.ne.s32.totalorder %s324, %s326
      %p330 = scmp.eq.s32.totalorder %s33, 0
      %p331 = por %p329, %p330
      %p332 = scmp.ne.s32.totalorder %s324, %s326
      %p333 = scmp.eq.s32.totalorder %s38, 1
      %p334 = por %p332, %p333
      %p335 = scmp.ne.s32.totalorder %s326, %s327
      %p336 = scmp.eq.s32.totalorder %s38, 0
      %p337 = por %p335, %p336
      %p338 = scmp.ne.s32.totalorder %s326, %s327
      %p339 = scmp.eq.s32.totalorder %s39, 1
      %p340 = por %p338, %p339
      %p342 = scmp.ne.s32.totalorder %s327, %s341
      %p343 = scmp.eq.s32.totalorder %s39, 0
      %p344 = por %p342, %p343
      %s346 = sadd.s32 %s345, 1
      %p349 = scmp.eq.s32.totalorder %s33, 1
      %p350 = scmp.ne.s32.totalorder %s345, %s347
      %p351 = scmp.eq.s32.totalorder %s33, 0
      %p352 = por %p350, %p351
      %p353 = scmp.ne.s32.totalorder %s345, %s347
      %p354 = scmp.eq.s32.totalorder %s38, 1
      %p355 = por %p353, %p354
      %p356 = scmp.ne.s32.totalorder %s347, %s348
      %p357 = scmp.eq.s32.totalorder %s38, 0
      %p358 = por %p356, %p357
      %p359 = scmp.ne.s32.totalorder %s347, %s348
      %p360 = scmp.eq.s32.totalorder %s39, 1
      %p361 = por %p359, %p360
      %p363 = scmp.ne.s32.totalorder %s348, %s362
      %p364 = scmp.eq.s32.totalorder %s39, 0
      %p365 = por %p363, %p364
      %s367 = sadd.s32 %s366, 1
      %p370 = scmp.eq.s32.totalorder %s33, 1
      %p371 = scmp.ne.s32.totalorder %s366, %s368
      %p372 = scmp.eq.s32.totalorder %s33, 0
      %p373 = por %p371, %p372
      %p374 = scmp.ne.s32.totalorder %s366, %s368
      %p375 = scmp.eq.s32.totalorder %s38, 1
      %p376 = por %p374, %p375
      %p377 = scmp.ne.s32.totalorder %s368, %s369
      %p378 = scmp.eq.s32.totalorder %s38, 0
      %p379 = por %p377, %p378
      %p380 = scmp.ne.s32.totalorder %s368, %s369
      %p381 = scmp.eq.s32.totalorder %s39, 1
      %p382 = por %p380, %p381
      %p384 = scmp.ne.s32.totalorder %s369, %s383
      %p385 = scmp.eq.s32.totalorder %s39, 0
      %p386 = por %p384, %p385
      %s387 = ssub.s32 %s33, %s40
      %p388 = scmp.eq.s32.totalorder %s387, 0
      %s390 = sadd.s32 %s389, 1
      %s391 = scalar_select %p388, %s389, %s390
      %p394 = pneg %p388
      %p395 = scmp.eq.s32.totalorder %s33, 1
      %p396 = por %p394, %p395
      %p397 = scmp.ne.s32.totalorder %s389, %s392
      %p398 = scmp.eq.s32.totalorder %s33, 0
      %p399 = por %p397, %p398
      %p400 = scmp.ne.s32.totalorder %s389, %s392
      %p401 = scmp.eq.s32.totalorder %s38, 1
      %p402 = por %p400, %p401
      %p403 = scmp.ne.s32.totalorder %s392, %s393
      %p404 = scmp.eq.s32.totalorder %s38, 0
      %p405 = por %p403, %p404
      %p406 = scmp.ne.s32.totalorder %s392, %s393
      %p407 = scmp.eq.s32.totalorder %s39, 1
      %p408 = por %p406, %p407
      %p410 = scmp.ne.s32.totalorder %s393, %s409
      %p411 = scmp.eq.s32.totalorder %s39, 0
      %p412 = por %p410, %p411
      %p413 = scmp.le.s32.totalorder 1, %s33
      %p414 = scmp.lt.s32.totalorder %s33, 3
      %p415 = pnand %p413, %p414
      %p416 = pneg %p415
      // Predicated region
      $region9: #{tpu_custom_call.1} parent=5 // pred_check
        _
      $region10: #{tpu_custom_call.1} parent=5 // pred_check_branch
        %418 = sbr.rel (%p415) target = $region12
      $region11: #{tpu_custom_call.1} parent=5 // pred_region
        %s419 = ssub.s32 %s33, 1
        // Predicated region
        $region13: #{tpu_custom_call.1} parent=11 // pred_check
          %p420 = pneg %p106
        $region14: #{tpu_custom_call.1} parent=11 // pred_check_branch
          %422 = sbr.rel (%p420) target = $region16
        $region15: #{tpu_custom_call.1} parent=11 // pred_region
          %s424 = ssub.s32 256, 256
          %425 = vsyncadd [#allocation6], %s424
          %s426 = sshll.u32 [#allocation7], 4
          %s427 = int_to_ptr.vmem [resolvable:$true] %s426
          %432 = dma.hbm_to_vmem [thread:$0]  %s2, 256, %s427, [#allocation6], 64, 64, 4
        $region16: #{tpu_custom_call.1} parent=11 // pred_fallthru
          _
        // Predicated region
        $region17: #{tpu_custom_call.1} parent=11 // pred_check
          %p433 = pneg %p127
        $region18: #{tpu_custom_call.1} parent=11 // pred_check_branch
          %435 = sbr.rel (%p433) target = $region20
        $region19: #{tpu_custom_call.1} parent=11 // pred_region
          _
        $region20: #{tpu_custom_call.1} parent=11 // pred_fallthru
          _
        // Predicated region
        $region21: #{tpu_custom_call.1} parent=11 // pred_check
          %p436 = pneg %p148
        $region22: #{tpu_custom_call.1} parent=11 // pred_check_branch
          %438 = sbr.rel (%p436) target = $region24
        $region23: #{tpu_custom_call.1} parent=11 // pred_region
          %s440 = ssub.s32 256, 256
          %441 = vsyncadd [#allocation9], %s440
          %s442 = sshll.u32 [#allocation8], 4
          %s443 = int_to_ptr.vmem [resolvable:$true] %s442
          %448 = dma.hbm_to_vmem [thread:$0]  %s4, 256, %s443, [#allocation9], 64, 64, 4
        $region24: #{tpu_custom_call.1} parent=11 // pred_fallthru
          _
        // Predicated region
        $region25: #{tpu_custom_call.1} parent=11 // pred_check
          %p449 = pneg %p169
        $region26: #{tpu_custom_call.1} parent=11 // pred_check_branch
          %451 = sbr.rel (%p449) target = $region28
        $region27: #{tpu_custom_call.1} parent=11 // pred_region
          _
        $region28: #{tpu_custom_call.1} parent=11 // pred_fallthru
          _
        // Predicated region
        $region29: #{tpu_custom_call.1} parent=11 // pred_check
          %p452 = pneg %p190
        $region30: #{tpu_custom_call.1} parent=11 // pred_check_branch
          %454 = sbr.rel (%p452) target = $region32
        $region31: #{tpu_custom_call.1} parent=11 // pred_region
          _
        $region32: #{tpu_custom_call.1} parent=11 // pred_fallthru
          _
        // Predicated region
        $region33: #{tpu_custom_call.1} parent=11 // pred_check
          %p455 = pneg %p211
        $region34: #{tpu_custom_call.1} parent=11 // pred_check_branch
          %457 = sbr.rel (%p455) target = $region36
        $region35: #{tpu_custom_call.1} parent=11 // pred_region
          %s459 = ssub.s32 16, 16
          %460 = vsyncadd [#allocation9], %s459
          %s462 = sshll.u32 [#allocation10], 4
          %s463 = int_to_ptr.vmem [resolvable:$true] %s462
          %465 = dma.hbm_to_vmem [thread:$0]  %s7, 16, %s463, [#allocation9]
        $region36: #{tpu_custom_call.1} parent=11 // pred_fallthru
          _
        // Predicated region
        $region37: #{tpu_custom_call.1} parent=11 // pred_check
          %p466 = pneg %p232
        $region38: #{tpu_custom_call.1} parent=11 // pred_check_branch
          %468 = sbr.rel (%p466) target = $region40
        $region39: #{tpu_custom_call.1} parent=11 // pred_region
          %s470 = ssub.s32 256, 256
          %471 = vsyncadd [#allocation12], %s470
          %s472 = sshll.u32 [#allocation11], 4
          %s473 = int_to_ptr.vmem [resolvable:$true] %s472
          %478 = dma.hbm_to_vmem [thread:$0]  %s8, 256, %s473, [#allocation12], 64, 64, 4
        $region40: #{tpu_custom_call.1} parent=11 // pred_fallthru
          _
        // Predicated region
        $region41: #{tpu_custom_call.1} parent=11 // pred_check
          %p479 = pneg %p253
        $region42: #{tpu_custom_call.1} parent=11 // pred_check_branch
          %481 = sbr.rel (%p479) target = $region44
        $region43: #{tpu_custom_call.1} parent=11 // pred_region
          %s483 = ssub.s32 16, 16
          %484 = vsyncadd [#allocation12], %s483
          %s486 = sshll.u32 [#allocation13], 4
          %s487 = int_to_ptr.vmem [resolvable:$true] %s486
          %489 = dma.hbm_to_vmem [thread:$0]  %s9, 16, %s487, [#allocation12]
        $region44: #{tpu_custom_call.1} parent=11 // pred_fallthru
          _
        // Predicated region
        $region45: #{tpu_custom_call.1} parent=11 // pred_check
          %p490 = pneg %p274
        $region46: #{tpu_custom_call.1} parent=11 // pred_check_branch
          %492 = sbr.rel (%p490) target = $region48
        $region47: #{tpu_custom_call.1} parent=11 // pred_region
          _
        $region48: #{tpu_custom_call.1} parent=11 // pred_fallthru
          _
        // Predicated region
        $region49: #{tpu_custom_call.1} parent=11 // pred_check
          %p493 = pneg %p295
        $region50: #{tpu_custom_call.1} parent=11 // pred_check_branch
          %495 = sbr.rel (%p493) target = $region52
        $region51: #{tpu_custom_call.1} parent=11 // pred_region
          _
        $region52: #{tpu_custom_call.1} parent=11 // pred_fallthru
          _
        // Predicated region
        $region53: #{tpu_custom_call.1} parent=11 // pred_check
          %p496 = pneg %p316
        $region54: #{tpu_custom_call.1} parent=11 // pred_check_branch
          %498 = sbr.rel (%p496) target = $region56
        $region55: #{tpu_custom_call.1} parent=11 // pred_region
          _
        $region56: #{tpu_custom_call.1} parent=11 // pred_fallthru
          _
        // Predicated region
        $region57: #{tpu_custom_call.1} parent=11 // pred_check
          %p499 = pneg %p337
        $region58: #{tpu_custom_call.1} parent=11 // pred_check_branch
          %501 = sbr.rel (%p499) target = $region60
        $region59: #{tpu_custom_call.1} parent=11 // pred_region
          _
        $region60: #{tpu_custom_call.1} parent=11 // pred_fallthru
          _
        // Predicated region
        $region61: #{tpu_custom_call.1} parent=11 // pred_check
          %p502 = pneg %p358
        $region62: #{tpu_custom_call.1} parent=11 // pred_check_branch
          %504 = sbr.rel (%p502) target = $region64
        $region63: #{tpu_custom_call.1} parent=11 // pred_region
          _
        $region64: #{tpu_custom_call.1} parent=11 // pred_fallthru
          _
        // Predicated region
        $region65: #{tpu_custom_call.1} parent=11 // pred_check
          %p505 = pneg %p379
        $region66: #{tpu_custom_call.1} parent=11 // pred_check_branch
          %507 = sbr.rel (%p505) target = $region68
        $region67: #{tpu_custom_call.1} parent=11 // pred_region
          _
        $region68: #{tpu_custom_call.1} parent=11 // pred_fallthru
          _
      $region12: #{tpu_custom_call.1} parent=5 // pred_fallthru
        _
      %p508 = scmp.lt.s32.totalorder %s33, 2
      // Predicated region
      $region69: #{tpu_custom_call.1} parent=5 // pred_check
        %p509 = pneg %p508
      $region70: #{tpu_custom_call.1} parent=5 // pred_check_branch
        %511 = sbr.rel (%p509) target = $region72
      $region71: #{tpu_custom_call.1} parent=5 // pred_region
        // Predicated region
        $region73: #{tpu_custom_call.1} parent=71 // pred_check
          %p512 = pneg %p53
        $region74: #{tpu_custom_call.1} parent=71 // pred_check_branch
          %514 = sbr.rel (%p512) target = $region76
        $region75: #{tpu_custom_call.1} parent=71 // pred_region
          %s515 = sand.u32 %s43, 1
          %s516 = scalar_lea.sflag [#allocation3], %s515
          %s517 = sand.u32 %s43, 1
          %s518 = smul.addr %s517, 16
          %s519 = scalar_lea.vmem [#allocation2], %s518
          %s520 = smul.u32 2, %s33
          %s522 = ssub.s32 256, 256
          %523 = vsyncadd %s516, %s522
          %s524 = smul.addr %s520, 128
          %s525 = scalar_lea.hbm %s0, %s524
          %s526 = sshll.u32 %s519, 4
          %s527 = int_to_ptr.vmem [resolvable:$true] %s526
          %532 = dma.hbm_to_vmem [thread:$0]  %s525, 256, %s527, %s516, 128, 128, 8
        $region76: #{tpu_custom_call.1} parent=71 // pred_fallthru
          _
        // Predicated region
        $region77: #{tpu_custom_call.1} parent=71 // pred_check
          %p533 = pneg %p79
        $region78: #{tpu_custom_call.1} parent=71 // pred_check_branch
          %535 = sbr.rel (%p533) target = $region80
        $region79: #{tpu_custom_call.1} parent=71 // pred_region
          %s536 = sand.u32 %s33, 1
          %s537 = scalar_lea.sflag [#allocation6], %s536
          %s538 = sand.u32 %s69, 1
          %s539 = smul.addr %s538, 2
          %s540 = scalar_lea.vmem [#allocation5], %s539
          %s541 = smul.u32 2, %s33
          %s543 = ssub.s32 32, 32
          %544 = vsyncadd %s537, %s543
          %s545 = smul.addr %s541, 16
          %s546 = scalar_lea.hbm %s1, %s545
          %s547 = sshll.u32 %s540, 4
          %s548 = int_to_ptr.vmem [resolvable:$true] %s547
          %553 = dma.hbm_to_vmem [thread:$0]  %s546, 32, %s548, %s537, 16, 16, 1
        $region80: #{tpu_custom_call.1} parent=71 // pred_fallthru
          _
      $region72: #{tpu_custom_call.1} parent=5 // pred_fallthru
        _
      %p554 = scmp.le.s32.totalorder 1, %s33
      %p555 = scmp.lt.s32.totalorder %s33, 3
      %p556 = pnand %p554, %p555
      %p557 = pneg %p556
      // Predicated region
      $region81: #{tpu_custom_call.1} parent=5 // pred_check
        _
      $region82: #{tpu_custom_call.1} parent=5 // pred_check_branch
        %559 = sbr.rel (%p556) target = $region84
      $region83: #{tpu_custom_call.1} parent=5 // pred_region
        %s560 = ssub.s32 %s33, 1
        %s561 = sand.u32 %s46, 1
        %s562 = scalar_lea.sflag [#allocation3], %s561
        %s563 = sand.u32 %s46, 1
        %s564 = smul.addr %s563, 16
        %s565 = scalar_lea.vmem [#allocation2], %s564
        // Predicated region
        $region85: #{tpu_custom_call.1} parent=83 // pred_check
          %p566 = pneg %p59
        $region86: #{tpu_custom_call.1} parent=83 // pred_check_branch
          %568 = sbr.rel (%p566) target = $region88
        $region87: #{tpu_custom_call.1} parent=83 // pred_region
          %569 = dma.done %s562, 256
        $region88: #{tpu_custom_call.1} parent=83 // pred_fallthru
          _
        %s570 = sand.u32 %s38, 1
        %s571 = scalar_lea.sflag [#allocation6], %s570
        %s572 = sand.u32 %s72, 1
        %s573 = smul.addr %s572, 2
        %s574 = scalar_lea.vmem [#allocation5], %s573
        // Predicated region
        $region89: #{tpu_custom_call.1} parent=83 // pred_check
          %p575 = pneg %p85
        $region90: #{tpu_custom_call.1} parent=83 // pred_check_branch
          %577 = sbr.rel (%p575) target = $region92
        $region91: #{tpu_custom_call.1} parent=83 // pred_region
          %578 = dma.done %s571, 32
        $region92: #{tpu_custom_call.1} parent=83 // pred_fallthru
          _
        // Predicated region
        $region93: #{tpu_custom_call.1} parent=83 // pred_check
          %p579 = pneg %p106
        $region94: #{tpu_custom_call.1} parent=83 // pred_check_branch
          %581 = sbr.rel (%p579) target = $region96
        $region95: #{tpu_custom_call.1} parent=83 // pred_region
          %582 = dma.done [#allocation6], 256
        $region96: #{tpu_custom_call.1} parent=83 // pred_fallthru
          _
        // Predicated region
        $region97: #{tpu_custom_call.1} parent=83 // pred_check
          %p583 = pneg %p148
        $region98: #{tpu_custom_call.1} parent=83 // pred_check_branch
          %585 = sbr.rel (%p583) target = $region100
        $region99: #{tpu_custom_call.1} parent=83 // pred_region
          %586 = dma.done [#allocation9], 256
        $region100: #{tpu_custom_call.1} parent=83 // pred_fallthru
          _
        // Predicated region
        $region101: #{tpu_custom_call.1} parent=83 // pred_check
          %p587 = pneg %p211
        $region102: #{tpu_custom_call.1} parent=83 // pred_check_branch
          %589 = sbr.rel (%p587) target = $region104
        $region103: #{tpu_custom_call.1} parent=83 // pred_region
          %590 = dma.done [#allocation9], 16
        $region104: #{tpu_custom_call.1} parent=83 // pred_fallthru
          _
        // Predicated region
        $region105: #{tpu_custom_call.1} parent=83 // pred_check
          %p591 = pneg %p232
        $region106: #{tpu_custom_call.1} parent=83 // pred_check_branch
          %593 = sbr.rel (%p591) target = $region108
        $region107: #{tpu_custom_call.1} parent=83 // pred_region
          %594 = dma.done [#allocation12], 256
        $region108: #{tpu_custom_call.1} parent=83 // pred_fallthru
          _
        // Predicated region
        $region109: #{tpu_custom_call.1} parent=83 // pred_check
          %p595 = pneg %p253
        $region110: #{tpu_custom_call.1} parent=83 // pred_check_branch
          %597 = sbr.rel (%p595) target = $region112
        $region111: #{tpu_custom_call.1} parent=83 // pred_region
          %598 = dma.done [#allocation12], 16
        $region112: #{tpu_custom_call.1} parent=83 // pred_fallthru
          _
        %s599 = sand.u32 %s46, 1
        %s600 = scalar_lea.sflag [#allocation3], %s599
        %s601 = sand.u32 %s46, 1
        %s602 = smul.addr %s601, 16
        %s603 = scalar_lea.vmem [#allocation2], %s602
        %p604 = pneg %p59
        %p605 = pneg %p56
        %s606 = sand.u32 %s38, 1
        %s607 = scalar_lea.sflag [#allocation6], %s606
        %s608 = sand.u32 %s72, 1
        %s609 = smul.addr %s608, 2
        %s610 = scalar_lea.vmem [#allocation5], %s609
        %p611 = pneg %p85
        %p612 = pneg %p82
        %p613 = pneg %p106
        %p614 = pneg %p103
        %p615 = pneg %p127
        %p616 = pneg %p124
        %p617 = pneg %p148
        %p618 = pneg %p145
        %p619 = pneg %p169
        %p620 = pneg %p166
        %p621 = pneg %p190
        %p622 = pneg %p187
        %p623 = pneg %p211
        %p624 = pneg %p208
        %p625 = pneg %p232
        %p626 = pneg %p229
        %p627 = pneg %p253
        %p628 = pneg %p250
        %p629 = pneg %p274
        %p630 = pneg %p271
        %p631 = pneg %p295
        %p632 = pneg %p292
        %p633 = pneg %p316
        %p634 = pneg %p313
        %p635 = pneg %p337
        %p636 = pneg %p334
        %p637 = pneg %p358
        %p638 = pneg %p355
        %p639 = pneg %p379
        %p640 = pneg %p376
        %p641 = pneg %p405
        %p642 = pneg %p402
        %s643 = sand.u32 %s392, 1
        %s644 = scalar_lea.sflag [#allocation4], %s643
        %s645 = sand.u32 %s392, 1
        %s646 = smul.addr %s645, 16
        %s647 = scalar_lea.vmem [#allocation14], %s646
        %s648 = smul.u32 2, %s38
        %s649 = smul.u32 2, %s38
        %s650 = smul.u32 2, %s38
        %v652 = vld [vmem:[%s565] sm:$0xff]
        %v653 = vld [vmem:[%s565 + $0x8] sm:$0xff]
        %v654 = vpack.c.bf16 %v653, %v652
        %v655 = vld [vmem:[#allocation7] sm:$0xf]
        %v656 = vld [vmem:[#allocation7 + $0x4] sm:$0xf]
        %v657 = vld [vmem:[#allocation7 + $0x8] sm:$0xf]
        %v658 = vld [vmem:[#allocation7 + $0xc] sm:$0xf]
        %v659 = vld [vmem:[%s3] sm:$0x1]
        %v661 = vlaneseq
        %v662 = vshrl.u32 %v661, 7
        %v663 = vsub.s32 0, %v662
        %v664 = vrot.slane %v659, %v663
        %v670 = vunpack.c.l.b16 %v655
        %v671 = vunpack.c.l.b16 %v656
        %v672 = vunpack.c.l.b16 %v657
        %v673 = vunpack.c.l.b16 %v658
        %v674 = vpack.c.b16 %v671, %v670
        %v675 = vpack.c.b16 %v673, %v672
        %vm678 = vcmask 261120
        %v680 = vsel %vm678, %v654, 0
        %682 = vmatprep.subr.bf16.mxu0 0
        %683 = vmatpush1.bf16.msra.mxu0 %v674
        %684 = vmatprep.subr.bf16.mxu0 0
        %685 = vmatpush1.bf16.msra.mxu0 %v675
        %686 = vmatprep.subr.bf16.mxu0 0
        %687 = vmatpush1.bf16.msra.mxu0 0
        %688 = vmatprep.subr.bf16.mxu0 0
        %689 = vmatpush1.bf16.msra.mxu0 0
        %690 = vmatprep.subr.bf16.mxu0 0
        %691 = vmatpush1.bf16.msra.mxu0 0
        %692 = vmatprep.subr.bf16.mxu0 0
        %693 = vmatpush1.bf16.msra.mxu0 0
        %694 = vmatprep.subr.bf16.mxu0 0
        %695 = vmatpush1.bf16.msra.mxu0 0
        %696 = vmatprep.subr.bf16.mxu0 0
        %697 = vmatpush1.bf16.msra.mxu0 0
        %698 = vmatprep.subr.bf16.mxu0 0
        %699 = vmatpush1.bf16.msra.mxu0 0
        %700 = vmatprep.subr.bf16.mxu0 0
        %701 = vmatpush1.bf16.msra.mxu0 0
        %702 = vmatprep.subr.bf16.mxu0 0
        %703 = vmatpush1.bf16.msra.mxu0 0
        %704 = vmatprep.subr.bf16.mxu0 0
        %705 = vmatpush1.bf16.msra.mxu0 0
        %706 = vmatprep.subr.bf16.mxu0 0
        %707 = vmatpush1.bf16.msra.mxu0 0
        %708 = vmatprep.subr.bf16.mxu0 0
        %709 = vmatpush1.bf16.msra.mxu0 0
        %710 = vmatprep.subr.bf16.mxu0 0
        %711 = vmatpush1.bf16.msra.mxu0 0
        %712 = vmatprep.subr.bf16.mxu0 0
        %713 = vmatpush1.bf16.msra.mxu0 0
        %714 = vmatprep.mubr.bf16.mxu0 0
        %715 = vmatmul.mubr.bf16.gmra.mrb[0].mxu0 %v680
        %v716 = vpop.f32.mrb[0].mxu0
        %v717 = vadd.f32 %v664, %v716
        %v718 = vpop.f32.mrb[0].mxu0
        %v719 = vpop.f32.mrb[0].mxu0
        %v720 = vadd.f32 %v664, %v719
        %v721 = vpop.f32.mrb[0].mxu0
        %722 = vdwg.mxu0
        %v723 = vld [vmem:[#allocation8] sm:$0xf]
        %v724 = vld [vmem:[#allocation8 + $0x4] sm:$0xf]
        %v725 = vld [vmem:[#allocation8 + $0x8] sm:$0xf]
        %v726 = vld [vmem:[#allocation8 + $0xc] sm:$0xf]
        %v727 = vld [vmem:[%s5] sm:$0x1]
        %v729 = vlaneseq
        %v730 = vshrl.u32 %v729, 7
        %v731 = vsub.s32 0, %v730
        %v732 = vrot.slane %v727, %v731
        %v738 = vunpack.c.l.b16 %v723
        %v739 = vunpack.c.l.b16 %v724
        %v740 = vunpack.c.l.b16 %v725
        %v741 = vunpack.c.l.b16 %v726
        %v742 = vpack.c.b16 %v739, %v738
        %v743 = vpack.c.b16 %v741, %v740
        %746 = vmatprep.subr.bf16.mxu0 0
        %747 = vmatpush1.bf16.msra.mxu0 %v742
        %748 = vmatprep.subr.bf16.mxu0 0
        %749 = vmatpush1.bf16.msra.mxu0 %v743
        %750 = vmatprep.subr.bf16.mxu0 0
        %751 = vmatpush1.bf16.msra.mxu0 0
        %752 = vmatprep.subr.bf16.mxu0 0
        %753 = vmatpush1.bf16.msra.mxu0 0
        %754 = vmatprep.subr.bf16.mxu0 0
        %755 = vmatpush1.bf16.msra.mxu0 0
        %756 = vmatprep.subr.bf16.mxu0 0
        %757 = vmatpush1.bf16.msra.mxu0 0
        %758 = vmatprep.subr.bf16.mxu0 0
        %759 = vmatpush1.bf16.msra.mxu0 0
        %760 = vmatprep.subr.bf16.mxu0 0
        %761 = vmatpush1.bf16.msra.mxu0 0
        %762 = vmatprep.subr.bf16.mxu0 0
        %763 = vmatpush1.bf16.msra.mxu0 0
        %764 = vmatprep.subr.bf16.mxu0 0
        %765 = vmatpush1.bf16.msra.mxu0 0
        %766 = vmatprep.subr.bf16.mxu0 0
        %767 = vmatpush1.bf16.msra.mxu0 0
        %768 = vmatprep.subr.bf16.mxu0 0
        %769 = vmatpush1.bf16.msra.mxu0 0
        %770 = vmatprep.subr.bf16.mxu0 0
        %771 = vmatpush1.bf16.msra.mxu0 0
        %772 = vmatprep.subr.bf16.mxu0 0
        %773 = vmatpush1.bf16.msra.mxu0 0
        %774 = vmatprep.subr.bf16.mxu0 0
        %775 = vmatpush1.bf16.msra.mxu0 0
        %776 = vmatprep.subr.bf16.mxu0 0
        %777 = vmatpush1.bf16.msra.mxu0 0
        %778 = vmatprep.mubr.bf16.mxu0 0
        %779 = vmatmul.mubr.bf16.gmra.mrb[0].mxu0 %v680
        %v780 = vpop.f32.mrb[0].mxu0
        %v781 = vadd.f32 %v732, %v780
        %v782 = vpop.f32.mrb[0].mxu0
        %v783 = vpop.f32.mrb[0].mxu0
        %v784 = vadd.f32 %v732, %v783
        %v785 = vpop.f32.mrb[0].mxu0
        %786 = vdwg.mxu0
        %v787 = vld [vmem:[%s6] sm:$0xf]
        %v788 = vld [vmem:[%s6 + $0x4] sm:$0xf]
        %v789 = vld [vmem:[%s6 + $0x8] sm:$0xf]
        %v790 = vld [vmem:[%s6 + $0xc] sm:$0xf]
        %v791 = vld [vmem:[#allocation10] sm:$0x1]
        %v793 = vlaneseq
        %v794 = vshrl.u32 %v793, 7
        %v795 = vsub.s32 0, %v794
        %v796 = vrot.slane %v791, %v795
        %v802 = vunpack.c.l.b16 %v787
        %v803 = vunpack.c.l.b16 %v788
        %v804 = vunpack.c.l.b16 %v789
        %v805 = vunpack.c.l.b16 %v790
        %v806 = vpack.c.b16 %v803, %v802
        %v807 = vpack.c.b16 %v805, %v804
        %810 = vmatprep.subr.bf16.mxu0 0
        %811 = vmatpush1.bf16.msra.mxu0 %v806
        %812 = vmatprep.subr.bf16.mxu0 0
        %813 = vmatpush1.bf16.msra.mxu0 %v807
        %814 = vmatprep.subr.bf16.mxu0 0
        %815 = vmatpush1.bf16.msra.mxu0 0
        %816 = vmatprep.subr.bf16.mxu0 0
        %817 = vmatpush1.bf16.msra.mxu0 0
        %818 = vmatprep.subr.bf16.mxu0 0
        %819 = vmatpush1.bf16.msra.mxu0 0
        %820 = vmatprep.subr.bf16.mxu0 0
        %821 = vmatpush1.bf16.msra.mxu0 0
        %822 = vmatprep.subr.bf16.mxu0 0
        %823 = vmatpush1.bf16.msra.mxu0 0
        %824 = vmatprep.subr.bf16.mxu0 0
        %825 = vmatpush1.bf16.msra.mxu0 0
        %826 = vmatprep.subr.bf16.mxu0 0
        %827 = vmatpush1.bf16.msra.mxu0 0
        %828 = vmatprep.subr.bf16.mxu0 0
        %829 = vmatpush1.bf16.msra.mxu0 0
        %830 = vmatprep.subr.bf16.mxu0 0
        %831 = vmatpush1.bf16.msra.mxu0 0
        %832 = vmatprep.subr.bf16.mxu0 0
        %833 = vmatpush1.bf16.msra.mxu0 0
        %834 = vmatprep.subr.bf16.mxu0 0
        %835 = vmatpush1.bf16.msra.mxu0 0
        %836 = vmatprep.subr.bf16.mxu0 0
        %837 = vmatpush1.bf16.msra.mxu0 0
        %838 = vmatprep.subr.bf16.mxu0 0
        %839 = vmatpush1.bf16.msra.mxu0 0
        %840 = vmatprep.subr.bf16.mxu0 0
        %841 = vmatpush1.bf16.msra.mxu0 0
        %842 = vmatprep.mubr.bf16.mxu0 0
        %843 = vmatmul.mubr.bf16.gmra.mrb[0].mxu0 %v680
        %v844 = vpop.f32.mrb[0].mxu0
        %v845 = vadd.f32 %v796, %v844
        %v846 = vpop.f32.mrb[0].mxu0
        %v847 = vpop.f32.mrb[0].mxu0
        %v848 = vadd.f32 %v796, %v847
        %v849 = vpop.f32.mrb[0].mxu0
        %850 = vdwg.mxu0
        %v851 = vpack.c.bf16 %v720, %v717
        %v853 = vunpack.c.l.b16 %v851
        %v854 = vunpack.c.h.b16 %v851
        %v855 = vpack.c.b16 %v853, %v853
        %v856 = vpack.c.b16 %v854, %v854
        %857 = vrot.lane.b32.xlu0 %v855, 120
        %v858 = vpop.permute.xlu0 %857
        %859 = vrot.lane.b32.xlu0 %v856, 120
        %v860 = vpop.permute.xlu0 %859
        %861 = vrot.lane.b32.xlu0 %v855, 112
        %v862 = vpop.permute.xlu0 %861
        %863 = vrot.lane.b32.xlu0 %v856, 112
        %v864 = vpop.permute.xlu0 %863
        %865 = vrot.lane.b32.xlu0 %v855, 104
        %v866 = vpop.permute.xlu0 %865
        %867 = vrot.lane.b32.xlu0 %v856, 104
        %v868 = vpop.permute.xlu0 %867
        %v869 = vpack.c.bf16 %v784, %v781
        %v871 = vunpack.c.l.b16 %v869
        %v872 = vunpack.c.h.b16 %v869
        %v873 = vpack.c.b16 %v871, %v871
        %v874 = vpack.c.b16 %v872, %v872
        %875 = vrot.lane.b32.xlu0 %v873, 120
        %v876 = vpop.permute.xlu0 %875
        %877 = vrot.lane.b32.xlu0 %v874, 120
        %v878 = vpop.permute.xlu0 %877
        %879 = vrot.lane.b32.xlu0 %v873, 112
        %v880 = vpop.permute.xlu0 %879
        %881 = vrot.lane.b32.xlu0 %v874, 112
        %v882 = vpop.permute.xlu0 %881
        %883 = vrot.lane.b32.xlu0 %v873, 104
        %v884 = vpop.permute.xlu0 %883
        %885 = vrot.lane.b32.xlu0 %v874, 104
        %v886 = vpop.permute.xlu0 %885
        %v887 = vpack.c.bf16 %v848, %v845
        %v889 = vunpack.c.l.b16 %v887
        %v890 = vunpack.c.h.b16 %v887
        %v891 = vpack.c.b16 %v889, %v889
        %v892 = vpack.c.b16 %v890, %v890
        %893 = vrot.lane.b32.xlu0 %v891, 120
        %v894 = vpop.permute.xlu0 %893
        %895 = vrot.lane.b32.xlu0 %v892, 120
        %v896 = vpop.permute.xlu0 %895
        %897 = vrot.lane.b32.xlu0 %v891, 112
        %v898 = vpop.permute.xlu0 %897
        %899 = vrot.lane.b32.xlu0 %v892, 112
        %v900 = vpop.permute.xlu0 %899
        %901 = vrot.lane.b32.xlu0 %v891, 104
        %v902 = vpop.permute.xlu0 %901
        %903 = vrot.lane.b32.xlu0 %v892, 104
        %v904 = vpop.permute.xlu0 %903
        %v905 = vld [vmem:[%s574] sm:$0x1]
        %v906 = vld [vmem:[%s574 + $0x1] sm:$0x1]
        %vm907 = vcmp.gt.f32.partialorder %v905, 0.0
        %vm908 = vcmp.gt.f32.partialorder %v906, 0.0
        %vm909 = vcmask 64512
        %v911 = vsel %vm909, %v855, 0
        %v914 = vsel %vm909, %v873, 0
        %916 = vmatprep.subr.bf16.mxu0 0
        %917 = vmatpush1.bf16.xpose.msra.mxu0 %v914
        %918 = vmatprep.subr.bf16.mxu0 0
        %919 = vmatpush1.bf16.xpose.msra.mxu0 0
        %920 = vmatprep.subr.bf16.mxu0 0
        %921 = vmatpush1.bf16.xpose.msra.mxu0 0
        %922 = vmatprep.subr.bf16.mxu0 0
        %923 = vmatpush1.bf16.xpose.msra.mxu0 0
        %924 = vmatprep.subr.bf16.mxu0 0
        %925 = vmatpush1.bf16.xpose.msra.mxu0 0
        %926 = vmatprep.subr.bf16.mxu0 0
        %927 = vmatpush1.bf16.xpose.msra.mxu0 0
        %928 = vmatprep.subr.bf16.mxu0 0
        %929 = vmatpush1.bf16.xpose.msra.mxu0 0
        %930 = vmatprep.subr.bf16.mxu0 0
        %931 = vmatpush1.bf16.xpose.msra.mxu0 0
        %932 = vmatprep.subr.bf16.mxu0 0
        %933 = vmatpush1.bf16.xpose.msra.mxu0 0
        %934 = vmatprep.subr.bf16.mxu0 0
        %935 = vmatpush1.bf16.xpose.msra.mxu0 0
        %936 = vmatprep.subr.bf16.mxu0 0
        %937 = vmatpush1.bf16.xpose.msra.mxu0 0
        %938 = vmatprep.subr.bf16.mxu0 0
        %939 = vmatpush1.bf16.xpose.msra.mxu0 0
        %940 = vmatprep.subr.bf16.mxu0 0
        %941 = vmatpush1.bf16.xpose.msra.mxu0 0
        %942 = vmatprep.subr.bf16.mxu0 0
        %943 = vmatpush1.bf16.xpose.msra.mxu0 0
        %944 = vmatprep.subr.bf16.mxu0 0
        %945 = vmatpush1.bf16.xpose.msra.mxu0 0
        %946 = vmatprep.subr.bf16.mxu0 0
        %947 = vmatpush1.bf16.xpose.msra.mxu0 0
        %948 = vmatprep.mubr.bf16.mxu0 0
        %949 = vmatmul.mubr.bf16.gmra.mrb[0].mxu0 %v911
        %v950 = vpop.f32.mrb[0].mxu0
        %v951 = vadd.f32 0.0, %v950
        %v952 = vpop.f32.mrb[0].mxu0
        %v953 = vpop.f32.mrb[0].mxu0
        %v954 = vpop.f32.mrb[0].mxu0
        %955 = vdwg.mxu0
        %v957 = vsel %vm909, %v856, 0
        %v960 = vsel %vm909, %v874, 0
        %962 = vmatprep.subr.bf16.mxu0 0
        %963 = vmatpush1.bf16.xpose.msra.mxu0 %v960
        %964 = vmatprep.subr.bf16.mxu0 0
        %965 = vmatpush1.bf16.xpose.msra.mxu0 0
        %966 = vmatprep.subr.bf16.mxu0 0
        %967 = vmatpush1.bf16.xpose.msra.mxu0 0
        %968 = vmatprep.subr.bf16.mxu0 0
        %969 = vmatpush1.bf16.xpose.msra.mxu0 0
        %970 = vmatprep.subr.bf16.mxu0 0
        %971 = vmatpush1.bf16.xpose.msra.mxu0 0
        %972 = vmatprep.subr.bf16.mxu0 0
        %973 = vmatpush1.bf16.xpose.msra.mxu0 0
        %974 = vmatprep.subr.bf16.mxu0 0
        %975 = vmatpush1.bf16.xpose.msra.mxu0 0
        %976 = vmatprep.subr.bf16.mxu0 0
        %977 = vmatpush1.bf16.xpose.msra.mxu0 0
        %978 = vmatprep.subr.bf16.mxu0 0
        %979 = vmatpush1.bf16.xpose.msra.mxu0 0
        %980 = vmatprep.subr.bf16.mxu0 0
        %981 = vmatpush1.bf16.xpose.msra.mxu0 0
        %982 = vmatprep.subr.bf16.mxu0 0
        %983 = vmatpush1.bf16.xpose.msra.mxu0 0
        %984 = vmatprep.subr.bf16.mxu0 0
        %985 = vmatpush1.bf16.xpose.msra.mxu0 0
        %986 = vmatprep.subr.bf16.mxu0 0
        %987 = vmatpush1.bf16.xpose.msra.mxu0 0
        %988 = vmatprep.subr.bf16.mxu0 0
        %989 = vmatpush1.bf16.xpose.msra.mxu0 0
        %990 = vmatprep.subr.bf16.mxu0 0
        %991 = vmatpush1.bf16.xpose.msra.mxu0 0
        %992 = vmatprep.subr.bf16.mxu0 0
        %993 = vmatpush1.bf16.xpose.msra.mxu0 0
        %994 = vmatprep.mubr.bf16.mxu0 0
        %995 = vmatmul.mubr.bf16.gmra.mrb[0].mxu0 %v957
        %v996 = vpop.f32.mrb[0].mxu0
        %v997 = vadd.f32 0.0, %v996
        %v998 = vpop.f32.mrb[0].mxu0
        %v999 = vpop.f32.mrb[0].mxu0
        %v1000 = vpop.f32.mrb[0].mxu0
        %1001 = vdwg.mxu0
        %v1003 = vsel %vm909, %v858, 0
        %v1006 = vsel %vm909, %v876, 0
        %1008 = vmatprep.subr.bf16.mxu0 0
        %1009 = vmatpush1.bf16.xpose.msra.mxu0 %v1006
        %1010 = vmatprep.subr.bf16.mxu0 0
        %1011 = vmatpush1.bf16.xpose.msra.mxu0 0
        %1012 = vmatprep.subr.bf16.mxu0 0
        %1013 = vmatpush1.bf16.xpose.msra.mxu0 0
        %1014 = vmatprep.subr.bf16.mxu0 0
        %1015 = vmatpush1.bf16.xpose.msra.mxu0 0
        %1016 = vmatprep.subr.bf16.mxu0 0
        %1017 = vmatpush1.bf16.xpose.msra.mxu0 0
        %1018 = vmatprep.subr.bf16.mxu0 0
        %1019 = vmatpush1.bf16.xpose.msra.mxu0 0
        %1020 = vmatprep.subr.bf16.mxu0 0
        %1021 = vmatpush1.bf16.xpose.msra.mxu0 0
        %1022 = vmatprep.subr.bf16.mxu0 0
        %1023 = vmatpush1.bf16.xpose.msra.mxu0 0
        %1024 = vmatprep.subr.bf16.mxu0 0
        %1025 = vmatpush1.bf16.xpose.msra.mxu0 0
        %1026 = vmatprep.subr.bf16.mxu0 0
        %1027 = vmatpush1.bf16.xpose.msra.mxu0 0
        %1028 = vmatprep.subr.bf16.mxu0 0
        %1029 = vmatpush1.bf16.xpose.msra.mxu0 0
        %1030 = vmatprep.subr.bf16.mxu0 0
        %1031 = vmatpush1.bf16.xpose.msra.mxu0 0
        %1032 = vmatprep.subr.bf16.mxu0 0
        %1033 = vmatpush1.bf16.xpose.msra.mxu0 0
        %1034 = vmatprep.subr.bf16.mxu0 0
        %1035 = vmatpush1.bf16.xpose.msra.mxu0 0
        %1036 = vmatprep.subr.bf16.mxu0 0
        %1037 = vmatpush1.bf16.xpose.msra.mxu0 0
        %1038 = vmatprep.subr.bf16.mxu0 0
        %1039 = vmatpush1.bf16.xpose.msra.mxu0 0
        %1040 = vmatprep.mubr.bf16.mxu0 0
        %1041 = vmatmul.mubr.bf16.gmra.mrb[0].mxu0 %v1003
        %v1042 = vpop.f32.mrb[0].mxu0
        %v1043 = vadd.f32 0.0, %v1042
        %v1044 = vpop.f32.mrb[0].mxu0
        %v1045 = vpop.f32.mrb[0].mxu0
        %v1046 = vpop.f32.mrb[0].mxu0
        %1047 = vdwg.mxu0
        %v1049 = vsel %vm909, %v860, 0
        %v1052 = vsel %vm909, %v878, 0
        %1054 = vmatprep.subr.bf16.mxu0 0
        %1055 = vmatpush1.bf16.xpose.msra.mxu0 %v1052
        %1056 = vmatprep.subr.bf16.mxu0 0
        %1057 = vmatpush1.bf16.xpose.msra.mxu0 0
        %1058 = vmatprep.subr.bf16.mxu0 0
        %1059 = vmatpush1.bf16.xpose.msra.mxu0 0
        %1060 = vmatprep.subr.bf16.mxu0 0
        %1061 = vmatpush1.bf16.xpose.msra.mxu0 0
        %1062 = vmatprep.subr.bf16.mxu0 0
        %1063 = vmatpush1.bf16.xpose.msra.mxu0 0
        %1064 = vmatprep.subr.bf16.mxu0 0
        %1065 = vmatpush1.bf16.xpose.msra.mxu0 0
        %1066 = vmatprep.subr.bf16.mxu0 0
        %1067 = vmatpush1.bf16.xpose.msra.mxu0 0
        %1068 = vmatprep.subr.bf16.mxu0 0
        %1069 = vmatpush1.bf16.xpose.msra.mxu0 0
        %1070 = vmatprep.subr.bf16.mxu0 0
        %1071 = vmatpush1.bf16.xpose.msra.mxu0 0
        %1072 = vmatprep.subr.bf16.mxu0 0
        %1073 = vmatpush1.bf16.xpose.msra.mxu0 0
        %1074 = vmatprep.subr.bf16.mxu0 0
        %1075 = vmatpush1.bf16.xpose.msra.mxu0 0
        %1076 = vmatprep.subr.bf16.mxu0 0
        %1077 = vmatpush1.bf16.xpose.msra.mxu0 0
        %1078 = vmatprep.subr.bf16.mxu0 0
        %1079 = vmatpush1.bf16.xpose.msra.mxu0 0
        %1080 = vmatprep.subr.bf16.mxu0 0
        %1081 = vmatpush1.bf16.xpose.msra.mxu0 0
        %1082 = vmatprep.subr.bf16.mxu0 0
        %1083 = vmatpush1.bf16.xpose.msra.mxu0 0
        %1084 = vmatprep.subr.bf16.mxu0 0
        %1085 = vmatpush1.bf16.xpose.msra.mxu0 0
        %1086 = vmatprep.mubr.bf16.mxu0 0
        %1087 = vmatmul.mubr.bf16.gmra.mrb[0].mxu0 %v1049
        %v1088 = vpop.f32.mrb[0].mxu0
        %v1089 = vadd.f32 0.0, %v1088
        %v1090 = vpop.f32.mrb[0].mxu0
        %v1091 = vpop.f32.mrb[0].mxu0
        %v1092 = vpop.f32.mrb[0].mxu0
        %1093 = vdwg.mxu0
        %v1095 = vsel %vm909, %v862, 0
        %v1098 = vsel %vm909, %v880, 0
        %1100 = vmatprep.subr.bf16.mxu0 0
        %1101 = vmatpush1.bf16.xpose.msra.mxu0 %v1098
        %1102 = vmatprep.subr.bf16.mxu0 0
        %1103 = vmatpush1.bf16.xpose.msra.mxu0 0
        %1104 = vmatprep.subr.bf16.mxu0 0
        %1105 = vmatpush1.bf16.xpose.msra.mxu0 0
        %1106 = vmatprep.subr.bf16.mxu0 0
        %1107 = vmatpush1.bf16.xpose.msra.mxu0 0
        %1108 = vmatprep.subr.bf16.mxu0 0
        %1109 = vmatpush1.bf16.xpose.msra.mxu0 0
        %1110 = vmatprep.subr.bf16.mxu0 0
        %1111 = vmatpush1.bf16.xpose.msra.mxu0 0
        %1112 = vmatprep.subr.bf16.mxu0 0
        %1113 = vmatpush1.bf16.xpose.msra.mxu0 0
        %1114 = vmatprep.subr.bf16.mxu0 0
        %1115 = vmatpush1.bf16.xpose.msra.mxu0 0
        %1116 = vmatprep.subr.bf16.mxu0 0
        %1117 = vmatpush1.bf16.xpose.msra.mxu0 0
        %1118 = vmatprep.subr.bf16.mxu0 0
        %1119 = vmatpush1.bf16.xpose.msra.mxu0 0
        %1120 = vmatprep.subr.bf16.mxu0 0
        %1121 = vmatpush1.bf16.xpose.msra.mxu0 0
        %1122 = vmatprep.subr.bf16.mxu0 0
        %1123 = vmatpush1.bf16.xpose.msra.mxu0 0
        %1124 = vmatprep.subr.bf16.mxu0 0
        %1125 = vmatpush1.bf16.xpose.msra.mxu0 0
        %1126 = vmatprep.subr.bf16.mxu0 0
        %1127 = vmatpush1.bf16.xpose.msra.mxu0 0
        %1128 = vmatprep.subr.bf16.mxu0 0
        %1129 = vmatpush1.bf16.xpose.msra.mxu0 0
        %1130 = vmatprep.subr.bf16.mxu0 0
        %1131 = vmatpush1.bf16.xpose.msra.mxu0 0
        %1132 = vmatprep.mubr.bf16.mxu0 0
        %1133 = vmatmul.mubr.bf16.gmra.mrb[0].mxu0 %v1095
        %v1134 = vpop.f32.mrb[0].mxu0
        %v1135 = vadd.f32 0.0, %v1134
        %v1136 = vpop.f32.mrb[0].mxu0
        %v1137 = vpop.f32.mrb[0].mxu0
        %v1138 = vpop.f32.mrb[0].mxu0
        %1139 = vdwg.mxu0
        %v1141 = vsel %vm909, %v864, 0
        %v1144 = vsel %vm909, %v882, 0
        %1146 = vmatprep.subr.bf16.mxu0 0
        %1147 = vmatpush1.bf16.xpose.msra.mxu0 %v1144
        %1148 = vmatprep.subr.bf16.mxu0 0
        %1149 = vmatpush1.bf16.xpose.msra.mxu0 0
        %1150 = vmatprep.subr.bf16.mxu0 0
        %1151 = vmatpush1.bf16.xpose.msra.mxu0 0
        %1152 = vmatprep.subr.bf16.mxu0 0
        %1153 = vmatpush1.bf16.xpose.msra.mxu0 0
        %1154 = vmatprep.subr.bf16.mxu0 0
        %1155 = vmatpush1.bf16.xpose.msra.mxu0 0
        %1156 = vmatprep.subr.bf16.mxu0 0
        %1157 = vmatpush1.bf16.xpose.msra.mxu0 0
        %1158 = vmatprep.subr.bf16.mxu0 0
        %1159 = vmatpush1.bf16.xpose.msra.mxu0 0
        %1160 = vmatprep.subr.bf16.mxu0 0
        %1161 = vmatpush1.bf16.xpose.msra.mxu0 0
        %1162 = vmatprep.subr.bf16.mxu0 0
        %1163 = vmatpush1.bf16.xpose.msra.mxu0 0
        %1164 = vmatprep.subr.bf16.mxu0 0
        %1165 = vmatpush1.bf16.xpose.msra.mxu0 0
        %1166 = vmatprep.subr.bf16.mxu0 0
        %1167 = vmatpush1.bf16.xpose.msra.mxu0 0
        %1168 = vmatprep.subr.bf16.mxu0 0
        %1169 = vmatpush1.bf16.xpose.msra.mxu0 0
        %1170 = vmatprep.subr.bf16.mxu0 0
        %1171 = vmatpush1.bf16.xpose.msra.mxu0 0
        %1172 = vmatprep.subr.bf16.mxu0 0
        %1173 = vmatpush1.bf16.xpose.msra.mxu0 0
        %1174 = vmatprep.subr.bf16.mxu0 0
        %1175 = vmatpush1.bf16.xpose.msra.mxu0 0
        %1176 = vmatprep.subr.bf16.mxu0 0
        %1177 = vmatpush1.bf16.xpose.msra.mxu0 0
        %1178 = vmatprep.mubr.bf16.mxu0 0
        %1179 = vmatmul.mubr.bf16.gmra.mrb[0].mxu0 %v1141
        %v1180 = vpop.f32.mrb[0].mxu0
        %v1181 = vadd.f32 0.0, %v1180
        %v1182 = vpop.f32.mrb[0].mxu0
        %v1183 = vpop.f32.mrb[0].mxu0
        %v1184 = vpop.f32.mrb[0].mxu0
        %1185 = vdwg.mxu0
        %v1187 = vsel %vm909, %v866, 0
        %v1190 = vsel %vm909, %v884, 0
        %1192 = vmatprep.subr.bf16.mxu0 0
        %1193 = vmatpush1.bf16.xpose.msra.mxu0 %v1190
        %1194 = vmatprep.subr.bf16.mxu0 0
        %1195 = vmatpush1.bf16.xpose.msra.mxu0 0
        %1196 = vmatprep.subr.bf16.mxu0 0
        %1197 = vmatpush1.bf16.xpose.msra.mxu0 0
        %1198 = vmatprep.subr.bf16.mxu0 0
        %1199 = vmatpush1.bf16.xpose.msra.mxu0 0
        %1200 = vmatprep.subr.bf16.mxu0 0
        %1201 = vmatpush1.bf16.xpose.msra.mxu0 0
        %1202 = vmatprep.subr.bf16.mxu0 0
        %1203 = vmatpush1.bf16.xpose.msra.mxu0 0
        %1204 = vmatprep.subr.bf16.mxu0 0
        %1205 = vmatpush1.bf16.xpose.msra.mxu0 0
        %1206 = vmatprep.subr.bf16.mxu0 0
        %1207 = vmatpush1.bf16.xpose.msra.mxu0 0
        %1208 = vmatprep.subr.bf16.mxu0 0
        %1209 = vmatpush1.bf16.xpose.msra.mxu0 0
        %1210 = vmatprep.subr.bf16.mxu0 0
        %1211 = vmatpush1.bf16.xpose.msra.mxu0 0
        %1212 = vmatprep.subr.bf16.mxu0 0
        %1213 = vmatpush1.bf16.xpose.msra.mxu0 0
        %1214 = vmatprep.subr.bf16.mxu0 0
        %1215 = vmatpush1.bf16.xpose.msra.mxu0 0
        %1216 = vmatprep.subr.bf16.mxu0 0
        %1217 = vmatpush1.bf16.xpose.msra.mxu0 0
        %1218 = vmatprep.subr.bf16.mxu0 0
        %1219 = vmatpush1.bf16.xpose.msra.mxu0 0
        %1220 = vmatprep.subr.bf16.mxu0 0
        %1221 = vmatpush1.bf16.xpose.msra.mxu0 0
        %1222 = vmatprep.subr.bf16.mxu0 0
        %1223 = vmatpush1.bf16.xpose.msra.mxu0 0
        %1224 = vmatprep.mubr.bf16.mxu0 0
        %1225 = vmatmul.mubr.bf16.gmra.mrb[0].mxu0 %v1187
        %v1226 = vpop.f32.mrb[0].mxu0
        %v1227 = vadd.f32 0.0, %v1226
        %v1228 = vpop.f32.mrb[0].mxu0
        %v1229 = vpop.f32.mrb[0].mxu0
        %v1230 = vpop.f32.mrb[0].mxu0
        %1231 = vdwg.mxu0
        %v1233 = vsel %vm909, %v868, 0
        %v1236 = vsel %vm909, %v886, 0
        %1238 = vmatprep.subr.bf16.mxu0 0
        %1239 = vmatpush1.bf16.xpose.msra.mxu0 %v1236
        %1240 = vmatprep.subr.bf16.mxu0 0
        %1241 = vmatpush1.bf16.xpose.msra.mxu0 0
        %1242 = vmatprep.subr.bf16.mxu0 0
        %1243 = vmatpush1.bf16.xpose.msra.mxu0 0
        %1244 = vmatprep.subr.bf16.mxu0 0
        %1245 = vmatpush1.bf16.xpose.msra.mxu0 0
        %1246 = vmatprep.subr.bf16.mxu0 0
        %1247 = vmatpush1.bf16.xpose.msra.mxu0 0
        %1248 = vmatprep.subr.bf16.mxu0 0
        %1249 = vmatpush1.bf16.xpose.msra.mxu0 0
        %1250 = vmatprep.subr.bf16.mxu0 0
        %1251 = vmatpush1.bf16.xpose.msra.mxu0 0
        %1252 = vmatprep.subr.bf16.mxu0 0
        %1253 = vmatpush1.bf16.xpose.msra.mxu0 0
        %1254 = vmatprep.subr.bf16.mxu0 0
        %1255 = vmatpush1.bf16.xpose.msra.mxu0 0
        %1256 = vmatprep.subr.bf16.mxu0 0
        %1257 = vmatpush1.bf16.xpose.msra.mxu0 0
        %1258 = vmatprep.subr.bf16.mxu0 0
        %1259 = vmatpush1.bf16.xpose.msra.mxu0 0
        %1260 = vmatprep.subr.bf16.mxu0 0
        %1261 = vmatpush1.bf16.xpose.msra.mxu0 0
        %1262 = vmatprep.subr.bf16.mxu0 0
        %1263 = vmatpush1.bf16.xpose.msra.mxu0 0
        %1264 = vmatprep.subr.bf16.mxu0 0
        %1265 = vmatpush1.bf16.xpose.msra.mxu0 0
        %1266 = vmatprep.subr.bf16.mxu0 0
        %1267 = vmatpush1.bf16.xpose.msra.mxu0 0
        %1268 = vmatprep.subr.bf16.mxu0 0
        %1269 = vmatpush1.bf16.xpose.msra.mxu0 0
        %1270 = vmatprep.mubr.bf16.mxu0 0
        %1271 = vmatmul.mubr.bf16.gmra.mrb[0].mxu0 %v1233
        %v1272 = vpop.f32.mrb[0].mxu0
        %v1273 = vadd.f32 0.0, %v1272
        %v1274 = vpop.f32.mrb[0].mxu0
        %v1275 = vpop.f32.mrb[0].mxu0
        %v1276 = vpop.f32.mrb[0].mxu0
        %1277 = vdwg.mxu0
        %v1278 = vsel %vm907, 1, 0
        %v1279 = vsel %vm908, 1, 0
        %v1280 = vlaneseq
        %v1281 = vshrl.u32 %v1280, 7
        %v1282 = vsub.s32 0, %v1281
        %v1283 = vrot.slane %v1278, %v1282
        %v1284 = vlaneseq
        %v1285 = vshrl.u32 %v1284, 7
        %v1286 = vsub.s32 0, %v1285
        %v1287 = vrot.slane %v1279, %v1286
        %vm1288 = vcmp.eq.s32.totalorder %v1283, 1
        %vm1289 = vcmp.eq.s32.totalorder %v1287, 1
        %v1290 = vsel %vm1288, %v951, -1e+09
        %v1291 = vsel %vm1289, %v997, -1e+09
        %v1292 = vsel %vm1288, %v1043, -1e+09
        %v1293 = vsel %vm1289, %v1089, -1e+09
        %v1294 = vsel %vm1288, %v1135, -1e+09
        %v1295 = vsel %vm1289, %v1181, -1e+09
        %v1296 = vsel %vm1288, %v1227, -1e+09
        %v1297 = vsel %vm1289, %v1273, -1e+09
        %v1298 = vsel %vm909, %v1290, -inf
        %1299 = vmax.xlane.f32.xlu0 %v1298
        %v1300 = vpop.xlane.xlu0 %1299
        %v1301 = vsel %vm909, %v1291, -inf
        %1302 = vmax.xlane.f32.xlu0 %v1301
        %v1303 = vpop.xlane.xlu0 %1302
        %v1304 = vsel %vm909, %v1292, -inf
        %1305 = vmax.xlane.f32.xlu0 %v1304
        %v1306 = vpop.xlane.xlu0 %1305
        %v1307 = vsel %vm909, %v1293, -inf
        %1308 = vmax.xlane.f32.xlu0 %v1307
        %v1309 = vpop.xlane.xlu0 %1308
        %v1310 = vsel %vm909, %v1294, -inf
        %1311 = vmax.xlane.f32.xlu0 %v1310
        %v1312 = vpop.xlane.xlu0 %1311
        %v1313 = vsel %vm909, %v1295, -inf
        %1314 = vmax.xlane.f32.xlu0 %v1313
        %v1315 = vpop.xlane.xlu0 %1314
        %v1316 = vsel %vm909, %v1296, -inf
        %1317 = vmax.xlane.f32.xlu0 %v1316
        %v1318 = vpop.xlane.xlu0 %1317
        %v1319 = vsel %vm909, %v1297, -inf
        %1320 = vmax.xlane.f32.xlu0 %v1319
        %v1321 = vpop.xlane.xlu0 %1320
        %v1322 = vsub.f32 %v1290, %v1300
        %v1323 = vsub.f32 %v1291, %v1303
        %v1324 = vsub.f32 %v1292, %v1306
        %v1325 = vsub.f32 %v1293, %v1309
        %v1326 = vsub.f32 %v1294, %v1312
        %v1327 = vsub.f32 %v1295, %v1315
        %v1328 = vsub.f32 %v1296, %v1318
        %v1329 = vsub.f32 %v1297, %v1321
        %v1330 = vmul.f32 %v1322, 1.442695
        %v1331 = vpow.pop %v1330
        %v1332 = vmul.f32 %v1323, 1.442695
        %v1333 = vpow.pop %v1332
        %v1334 = vmul.f32 %v1324, 1.442695
        %v1335 = vpow.pop %v1334
        %v1336 = vmul.f32 %v1325, 1.442695
        %v1337 = vpow.pop %v1336
        %v1338 = vmul.f32 %v1326, 1.442695
        %v1339 = vpow.pop %v1338
        %v1340 = vmul.f32 %v1327, 1.442695
        %v1341 = vpow.pop %v1340
        %v1342 = vmul.f32 %v1328, 1.442695
        %v1343 = vpow.pop %v1342
        %v1344 = vmul.f32 %v1329, 1.442695
        %v1345 = vpow.pop %v1344
        %v1346 = vsel %vm909, %v1331, 0.0
        %1347 = vadd.xlane.f32.xlu0 %v1346
        %v1348 = vpop.xlane.xlu0 %1347
        %v1349 = vsel %vm909, %v1333, 0.0
        %1350 = vadd.xlane.f32.xlu0 %v1349
        %v1351 = vpop.xlane.xlu0 %1350
        %v1352 = vsel %vm909, %v1335, 0.0
        %1353 = vadd.xlane.f32.xlu0 %v1352
        %v1354 = vpop.xlane.xlu0 %1353
        %v1355 = vsel %vm909, %v1337, 0.0
        %1356 = vadd.xlane.f32.xlu0 %v1355
        %v1357 = vpop.xlane.xlu0 %1356
        %v1358 = vsel %vm909, %v1339, 0.0
        %1359 = vadd.xlane.f32.xlu0 %v1358
        %v1360 = vpop.xlane.xlu0 %1359
        %v1361 = vsel %vm909, %v1341, 0.0
        %1362 = vadd.xlane.f32.xlu0 %v1361
        %v1363 = vpop.xlane.xlu0 %1362
        %v1364 = vsel %vm909, %v1343, 0.0
        %1365 = vadd.xlane.f32.xlu0 %v1364
        %v1366 = vpop.xlane.xlu0 %1365
        %v1367 = vsel %vm909, %v1345, 0.0
        %1368 = vadd.xlane.f32.xlu0 %v1367
        %v1369 = vpop.xlane.xlu0 %1368
        %v1370 = vrcp.pop %v1348
        %v1371 = vrcp.pop %v1351
        %v1372 = vrcp.pop %v1354
        %v1373 = vrcp.pop %v1357
        %v1374 = vrcp.pop %v1360
        %v1375 = vrcp.pop %v1363
        %v1376 = vrcp.pop %v1366
        %v1377 = vrcp.pop %v1369
        %v1378 = vmul.f32 %v1331, %v1370
        %v1379 = vmul.f32 %v1333, %v1371
        %v1380 = vmul.f32 %v1335, %v1372
        %v1381 = vmul.f32 %v1337, %v1373
        %v1382 = vmul.f32 %v1339, %v1374
        %v1383 = vmul.f32 %v1341, %v1375
        %v1384 = vmul.f32 %v1343, %v1376
        %v1385 = vmul.f32 %v1345, %v1377
        %v1386 = vpack.c.bf16 %v1378, %v1378
        %v1387 = vpack.c.bf16 %v1379, %v1379
        %v1388 = vpack.c.bf16 %v1380, %v1380
        %v1389 = vpack.c.bf16 %v1381, %v1381
        %v1390 = vpack.c.bf16 %v1382, %v1382
        %v1391 = vpack.c.bf16 %v1383, %v1383
        %v1392 = vpack.c.bf16 %v1384, %v1384
        %v1393 = vpack.c.bf16 %v1385, %v1385
        %v1395 = vsel %vm909, %v1386, 0
        %vm1397 = vcmask 1043456
        %v1399 = vsel %vm1397, %v891, 0
        %1401 = vmatprep.subr.bf16.mxu0 0
        %1402 = vmatpush1.bf16.msra.mxu0 %v1399
        %1403 = vmatprep.subr.bf16.mxu0 0
        %1404 = vmatpush1.bf16.msra.mxu0 0
        %1405 = vmatprep.subr.bf16.mxu0 0
        %1406 = vmatpush1.bf16.msra.mxu0 0
        %1407 = vmatprep.subr.bf16.mxu0 0
        %1408 = vmatpush1.bf16.msra.mxu0 0
        %1409 = vmatprep.subr.bf16.mxu0 0
        %1410 = vmatpush1.bf16.msra.mxu0 0
        %1411 = vmatprep.subr.bf16.mxu0 0
        %1412 = vmatpush1.bf16.msra.mxu0 0
        %1413 = vmatprep.subr.bf16.mxu0 0
        %1414 = vmatpush1.bf16.msra.mxu0 0
        %1415 = vmatprep.subr.bf16.mxu0 0
        %1416 = vmatpush1.bf16.msra.mxu0 0
        %1417 = vmatprep.subr.bf16.mxu0 0
        %1418 = vmatpush1.bf16.msra.mxu0 0
        %1419 = vmatprep.subr.bf16.mxu0 0
        %1420 = vmatpush1.bf16.msra.mxu0 0
        %1421 = vmatprep.subr.bf16.mxu0 0
        %1422 = vmatpush1.bf16.msra.mxu0 0
        %1423 = vmatprep.subr.bf16.mxu0 0
        %1424 = vmatpush1.bf16.msra.mxu0 0
        %1425 = vmatprep.subr.bf16.mxu0 0
        %1426 = vmatpush1.bf16.msra.mxu0 0
        %1427 = vmatprep.subr.bf16.mxu0 0
        %1428 = vmatpush1.bf16.msra.mxu0 0
        %1429 = vmatprep.subr.bf16.mxu0 0
        %1430 = vmatpush1.bf16.msra.mxu0 0
        %1431 = vmatprep.subr.bf16.mxu0 0
        %1432 = vmatpush1.bf16.msra.mxu0 0
        %1433 = vmatprep.mubr.bf16.mxu0 0
        %1434 = vmatmul.mubr.bf16.gmra.mrb[0].mxu0 %v1395
        %v1435 = vpop.f32.mrb[0].mxu0
        %v1436 = vadd.f32 0.0, %v1435
        %v1437 = vpop.f32.mrb[0].mxu0
        %v1438 = vpop.f32.mrb[0].mxu0
        %v1439 = vpop.f32.mrb[0].mxu0
        %1440 = vdwg.mxu0
        %v1442 = vsel %vm909, %v1387, 0
        %v1445 = vsel %vm1397, %v892, 0
        %1447 = vmatprep.subr.bf16.mxu0 0
        %1448 = vmatpush1.bf16.msra.mxu0 %v1445
        %1449 = vmatprep.subr.bf16.mxu0 0
        %1450 = vmatpush1.bf16.msra.mxu0 0
        %1451 = vmatprep.subr.bf16.mxu0 0
        %1452 = vmatpush1.bf16.msra.mxu0 0
        %1453 = vmatprep.subr.bf16.mxu0 0
        %1454 = vmatpush1.bf16.msra.mxu0 0
        %1455 = vmatprep.subr.bf16.mxu0 0
        %1456 = vmatpush1.bf16.msra.mxu0 0
        %1457 = vmatprep.subr.bf16.mxu0 0
        %1458 = vmatpush1.bf16.msra.mxu0 0
        %1459 = vmatprep.subr.bf16.mxu0 0
        %1460 = vmatpush1.bf16.msra.mxu0 0
        %1461 = vmatprep.subr.bf16.mxu0 0
        %1462 = vmatpush1.bf16.msra.mxu0 0
        %1463 = vmatprep.subr.bf16.mxu0 0
        %1464 = vmatpush1.bf16.msra.mxu0 0
        %1465 = vmatprep.subr.bf16.mxu0 0
        %1466 = vmatpush1.bf16.msra.mxu0 0
        %1467 = vmatprep.subr.bf16.mxu0 0
        %1468 = vmatpush1.bf16.msra.mxu0 0
        %1469 = vmatprep.subr.bf16.mxu0 0
        %1470 = vmatpush1.bf16.msra.mxu0 0
        %1471 = vmatprep.subr.bf16.mxu0 0
        %1472 = vmatpush1.bf16.msra.mxu0 0
        %1473 = vmatprep.subr.bf16.mxu0 0
        %1474 = vmatpush1.bf16.msra.mxu0 0
        %1475 = vmatprep.subr.bf16.mxu0 0
        %1476 = vmatpush1.bf16.msra.mxu0 0
        %1477 = vmatprep.subr.bf16.mxu0 0
        %1478 = vmatpush1.bf16.msra.mxu0 0
        %1479 = vmatprep.mubr.bf16.mxu0 0
        %1480 = vmatmul.mubr.bf16.gmra.mrb[0].mxu0 %v1442
        %v1481 = vpop.f32.mrb[0].mxu0
        %v1482 = vadd.f32 0.0, %v1481
        %v1483 = vpop.f32.mrb[0].mxu0
        %v1484 = vpop.f32.mrb[0].mxu0
        %v1485 = vpop.f32.mrb[0].mxu0
        %1486 = vdwg.mxu0
        %v1488 = vsel %vm909, %v1388, 0
        %v1491 = vsel %vm1397, %v894, 0
        %1493 = vmatprep.subr.bf16.mxu0 0
        %1494 = vmatpush1.bf16.msra.mxu0 %v1491
        %1495 = vmatprep.subr.bf16.mxu0 0
        %1496 = vmatpush1.bf16.msra.mxu0 0
        %1497 = vmatprep.subr.bf16.mxu0 0
        %1498 = vmatpush1.bf16.msra.mxu0 0
        %1499 = vmatprep.subr.bf16.mxu0 0
        %1500 = vmatpush1.bf16.msra.mxu0 0
        %1501 = vmatprep.subr.bf16.mxu0 0
        %1502 = vmatpush1.bf16.msra.mxu0 0
        %1503 = vmatprep.subr.bf16.mxu0 0
        %1504 = vmatpush1.bf16.msra.mxu0 0
        %1505 = vmatprep.subr.bf16.mxu0 0
        %1506 = vmatpush1.bf16.msra.mxu0 0
        %1507 = vmatprep.subr.bf16.mxu0 0
        %1508 = vmatpush1.bf16.msra.mxu0 0
        %1509 = vmatprep.subr.bf16.mxu0 0
        %1510 = vmatpush1.bf16.msra.mxu0 0
        %1511 = vmatprep.subr.bf16.mxu0 0
        %1512 = vmatpush1.bf16.msra.mxu0 0
        %1513 = vmatprep.subr.bf16.mxu0 0
        %1514 = vmatpush1.bf16.msra.mxu0 0
        %1515 = vmatprep.subr.bf16.mxu0 0
        %1516 = vmatpush1.bf16.msra.mxu0 0
        %1517 = vmatprep.subr.bf16.mxu0 0
        %1518 = vmatpush1.bf16.msra.mxu0 0
        %1519 = vmatprep.subr.bf16.mxu0 0
        %1520 = vmatpush1.bf16.msra.mxu0 0
        %1521 = vmatprep.subr.bf16.mxu0 0
        %1522 = vmatpush1.bf16.msra.mxu0 0
        %1523 = vmatprep.subr.bf16.mxu0 0
        %1524 = vmatpush1.bf16.msra.mxu0 0
        %1525 = vmatprep.mubr.bf16.mxu0 0
        %1526 = vmatmul.mubr.bf16.gmra.mrb[0].mxu0 %v1488
        %v1527 = vpop.f32.mrb[0].mxu0
        %v1528 = vadd.f32 0.0, %v1527
        %v1529 = vpop.f32.mrb[0].mxu0
        %v1530 = vpop.f32.mrb[0].mxu0
        %v1531 = vpop.f32.mrb[0].mxu0
        %1532 = vdwg.mxu0
        %v1534 = vsel %vm909, %v1389, 0
        %v1537 = vsel %vm1397, %v896, 0
        %1539 = vmatprep.subr.bf16.mxu0 0
        %1540 = vmatpush1.bf16.msra.mxu0 %v1537
        %1541 = vmatprep.subr.bf16.mxu0 0
        %1542 = vmatpush1.bf16.msra.mxu0 0
        %1543 = vmatprep.subr.bf16.mxu0 0
        %1544 = vmatpush1.bf16.msra.mxu0 0
        %1545 = vmatprep.subr.bf16.mxu0 0
        %1546 = vmatpush1.bf16.msra.mxu0 0
        %1547 = vmatprep.subr.bf16.mxu0 0
        %1548 = vmatpush1.bf16.msra.mxu0 0
        %1549 = vmatprep.subr.bf16.mxu0 0
        %1550 = vmatpush1.bf16.msra.mxu0 0
        %1551 = vmatprep.subr.bf16.mxu0 0
        %1552 = vmatpush1.bf16.msra.mxu0 0
        %1553 = vmatprep.subr.bf16.mxu0 0
        %1554 = vmatpush1.bf16.msra.mxu0 0
        %1555 = vmatprep.subr.bf16.mxu0 0
        %1556 = vmatpush1.bf16.msra.mxu0 0
        %1557 = vmatprep.subr.bf16.mxu0 0
        %1558 = vmatpush1.bf16.msra.mxu0 0
        %1559 = vmatprep.subr.bf16.mxu0 0
        %1560 = vmatpush1.bf16.msra.mxu0 0
        %1561 = vmatprep.subr.bf16.mxu0 0
        %1562 = vmatpush1.bf16.msra.mxu0 0
        %1563 = vmatprep.subr.bf16.mxu0 0
        %1564 = vmatpush1.bf16.msra.mxu0 0
        %1565 = vmatprep.subr.bf16.mxu0 0
        %1566 = vmatpush1.bf16.msra.mxu0 0
        %1567 = vmatprep.subr.bf16.mxu0 0
        %1568 = vmatpush1.bf16.msra.mxu0 0
        %1569 = vmatprep.subr.bf16.mxu0 0
        %1570 = vmatpush1.bf16.msra.mxu0 0
        %1571 = vmatprep.mubr.bf16.mxu0 0
        %1572 = vmatmul.mubr.bf16.gmra.mrb[0].mxu0 %v1534
        %v1573 = vpop.f32.mrb[0].mxu0
        %v1574 = vadd.f32 0.0, %v1573
        %v1575 = vpop.f32.mrb[0].mxu0
        %v1576 = vpop.f32.mrb[0].mxu0
        %v1577 = vpop.f32.mrb[0].mxu0
        %1578 = vdwg.mxu0
        %v1580 = vsel %vm909, %v1390, 0
        %v1583 = vsel %vm1397, %v898, 0
        %1585 = vmatprep.subr.bf16.mxu0 0
        %1586 = vmatpush1.bf16.msra.mxu0 %v1583
        %1587 = vmatprep.subr.bf16.mxu0 0
        %1588 = vmatpush1.bf16.msra.mxu0 0
        %1589 = vmatprep.subr.bf16.mxu0 0
        %1590 = vmatpush1.bf16.msra.mxu0 0
        %1591 = vmatprep.subr.bf16.mxu0 0
        %1592 = vmatpush1.bf16.msra.mxu0 0
        %1593 = vmatprep.subr.bf16.mxu0 0
        %1594 = vmatpush1.bf16.msra.mxu0 0
        %1595 = vmatprep.subr.bf16.mxu0 0
        %1596 = vmatpush1.bf16.msra.mxu0 0
        %1597 = vmatprep.subr.bf16.mxu0 0
        %1598 = vmatpush1.bf16.msra.mxu0 0
        %1599 = vmatprep.subr.bf16.mxu0 0
        %1600 = vmatpush1.bf16.msra.mxu0 0
        %1601 = vmatprep.subr.bf16.mxu0 0
        %1602 = vmatpush1.bf16.msra.mxu0 0
        %1603 = vmatprep.subr.bf16.mxu0 0
        %1604 = vmatpush1.bf16.msra.mxu0 0
        %1605 = vmatprep.subr.bf16.mxu0 0
        %1606 = vmatpush1.bf16.msra.mxu0 0
        %1607 = vmatprep.subr.bf16.mxu0 0
        %1608 = vmatpush1.bf16.msra.mxu0 0
        %1609 = vmatprep.subr.bf16.mxu0 0
        %1610 = vmatpush1.bf16.msra.mxu0 0
        %1611 = vmatprep.subr.bf16.mxu0 0
        %1612 = vmatpush1.bf16.msra.mxu0 0
        %1613 = vmatprep.subr.bf16.mxu0 0
        %1614 = vmatpush1.bf16.msra.mxu0 0
        %1615 = vmatprep.subr.bf16.mxu0 0
        %1616 = vmatpush1.bf16.msra.mxu0 0
        %1617 = vmatprep.mubr.bf16.mxu0 0
        %1618 = vmatmul.mubr.bf16.gmra.mrb[0].mxu0 %v1580
        %v1619 = vpop.f32.mrb[0].mxu0
        %v1620 = vadd.f32 0.0, %v1619
        %v1621 = vpop.f32.mrb[0].mxu0
        %v1622 = vpop.f32.mrb[0].mxu0
        %v1623 = vpop.f32.mrb[0].mxu0
        %1624 = vdwg.mxu0
        %v1626 = vsel %vm909, %v1391, 0
        %v1629 = vsel %vm1397, %v900, 0
        %1631 = vmatprep.subr.bf16.mxu0 0
        %1632 = vmatpush1.bf16.msra.mxu0 %v1629
        %1633 = vmatprep.subr.bf16.mxu0 0
        %1634 = vmatpush1.bf16.msra.mxu0 0
        %1635 = vmatprep.subr.bf16.mxu0 0
        %1636 = vmatpush1.bf16.msra.mxu0 0
        %1637 = vmatprep.subr.bf16.mxu0 0
        %1638 = vmatpush1.bf16.msra.mxu0 0
        %1639 = vmatprep.subr.bf16.mxu0 0
        %1640 = vmatpush1.bf16.msra.mxu0 0
        %1641 = vmatprep.subr.bf16.mxu0 0
        %1642 = vmatpush1.bf16.msra.mxu0 0
        %1643 = vmatprep.subr.bf16.mxu0 0
        %1644 = vmatpush1.bf16.msra.mxu0 0
        %1645 = vmatprep.subr.bf16.mxu0 0
        %1646 = vmatpush1.bf16.msra.mxu0 0
        %1647 = vmatprep.subr.bf16.mxu0 0
        %1648 = vmatpush1.bf16.msra.mxu0 0
        %1649 = vmatprep.subr.bf16.mxu0 0
        %1650 = vmatpush1.bf16.msra.mxu0 0
        %1651 = vmatprep.subr.bf16.mxu0 0
        %1652 = vmatpush1.bf16.msra.mxu0 0
        %1653 = vmatprep.subr.bf16.mxu0 0
        %1654 = vmatpush1.bf16.msra.mxu0 0
        %1655 = vmatprep.subr.bf16.mxu0 0
        %1656 = vmatpush1.bf16.msra.mxu0 0
        %1657 = vmatprep.subr.bf16.mxu0 0
        %1658 = vmatpush1.bf16.msra.mxu0 0
        %1659 = vmatprep.subr.bf16.mxu0 0
        %1660 = vmatpush1.bf16.msra.mxu0 0
        %1661 = vmatprep.subr.bf16.mxu0 0
        %1662 = vmatpush1.bf16.msra.mxu0 0
        %1663 = vmatprep.mubr.bf16.mxu0 0
        %1664 = vmatmul.mubr.bf16.gmra.mrb[0].mxu0 %v1626
        %v1665 = vpop.f32.mrb[0].mxu0
        %v1666 = vadd.f32 0.0, %v1665
        %v1667 = vpop.f32.mrb[0].mxu0
        %v1668 = vpop.f32.mrb[0].mxu0
        %v1669 = vpop.f32.mrb[0].mxu0
        %1670 = vdwg.mxu0
        %v1672 = vsel %vm909, %v1392, 0
        %v1675 = vsel %vm1397, %v902, 0
        %1677 = vmatprep.subr.bf16.mxu0 0
        %1678 = vmatpush1.bf16.msra.mxu0 %v1675
        %1679 = vmatprep.subr.bf16.mxu0 0
        %1680 = vmatpush1.bf16.msra.mxu0 0
        %1681 = vmatprep.subr.bf16.mxu0 0
        %1682 = vmatpush1.bf16.msra.mxu0 0
        %1683 = vmatprep.subr.bf16.mxu0 0
        %1684 = vmatpush1.bf16.msra.mxu0 0
        %1685 = vmatprep.subr.bf16.mxu0 0
        %1686 = vmatpush1.bf16.msra.mxu0 0
        %1687 = vmatprep.subr.bf16.mxu0 0
        %1688 = vmatpush1.bf16.msra.mxu0 0
        %1689 = vmatprep.subr.bf16.mxu0 0
        %1690 = vmatpush1.bf16.msra.mxu0 0
        %1691 = vmatprep.subr.bf16.mxu0 0
        %1692 = vmatpush1.bf16.msra.mxu0 0
        %1693 = vmatprep.subr.bf16.mxu0 0
        %1694 = vmatpush1.bf16.msra.mxu0 0
        %1695 = vmatprep.subr.bf16.mxu0 0
        %1696 = vmatpush1.bf16.msra.mxu0 0
        %1697 = vmatprep.subr.bf16.mxu0 0
        %1698 = vmatpush1.bf16.msra.mxu0 0
        %1699 = vmatprep.subr.bf16.mxu0 0
        %1700 = vmatpush1.bf16.msra.mxu0 0
        %1701 = vmatprep.subr.bf16.mxu0 0
        %1702 = vmatpush1.bf16.msra.mxu0 0
        %1703 = vmatprep.subr.bf16.mxu0 0
        %1704 = vmatpush1.bf16.msra.mxu0 0
        %1705 = vmatprep.subr.bf16.mxu0 0
        %1706 = vmatpush1.bf16.msra.mxu0 0
        %1707 = vmatprep.subr.bf16.mxu0 0
        %1708 = vmatpush1.bf16.msra.mxu0 0
        %1709 = vmatprep.mubr.bf16.mxu0 0
        %1710 = vmatmul.mubr.bf16.gmra.mrb[0].mxu0 %v1672
        %v1711 = vpop.f32.mrb[0].mxu0
        %v1712 = vadd.f32 0.0, %v1711
        %v1713 = vpop.f32.mrb[0].mxu0
        %v1714 = vpop.f32.mrb[0].mxu0
        %v1715 = vpop.f32.mrb[0].mxu0
        %1716 = vdwg.mxu0
        %v1718 = vsel %vm909, %v1393, 0
        %v1721 = vsel %vm1397, %v904, 0
        %1723 = vmatprep.subr.bf16.mxu0 0
        %1724 = vmatpush1.bf16.msra.mxu0 %v1721
        %1725 = vmatprep.subr.bf16.mxu0 0
        %1726 = vmatpush1.bf16.msra.mxu0 0
        %1727 = vmatprep.subr.bf16.mxu0 0
        %1728 = vmatpush1.bf16.msra.mxu0 0
        %1729 = vmatprep.subr.bf16.mxu0 0
        %1730 = vmatpush1.bf16.msra.mxu0 0
        %1731 = vmatprep.subr.bf16.mxu0 0
        %1732 = vmatpush1.bf16.msra.mxu0 0
        %1733 = vmatprep.subr.bf16.mxu0 0
        %1734 = vmatpush1.bf16.msra.mxu0 0
        %1735 = vmatprep.subr.bf16.mxu0 0
        %1736 = vmatpush1.bf16.msra.mxu0 0
        %1737 = vmatprep.subr.bf16.mxu0 0
        %1738 = vmatpush1.bf16.msra.mxu0 0
        %1739 = vmatprep.subr.bf16.mxu0 0
        %1740 = vmatpush1.bf16.msra.mxu0 0
        %1741 = vmatprep.subr.bf16.mxu0 0
        %1742 = vmatpush1.bf16.msra.mxu0 0
        %1743 = vmatprep.subr.bf16.mxu0 0
        %1744 = vmatpush1.bf16.msra.mxu0 0
        %1745 = vmatprep.subr.bf16.mxu0 0
        %1746 = vmatpush1.bf16.msra.mxu0 0
        %1747 = vmatprep.subr.bf16.mxu0 0
        %1748 = vmatpush1.bf16.msra.mxu0 0
        %1749 = vmatprep.subr.bf16.mxu0 0
        %1750 = vmatpush1.bf16.msra.mxu0 0
        %1751 = vmatprep.subr.bf16.mxu0 0
        %1752 = vmatpush1.bf16.msra.mxu0 0
        %1753 = vmatprep.subr.bf16.mxu0 0
        %1754 = vmatpush1.bf16.msra.mxu0 0
        %1755 = vmatprep.mubr.bf16.mxu0 0
        %1756 = vmatmul.mubr.bf16.gmra.mrb[0].mxu0 %v1718
        %v1757 = vpop.f32.mrb[0].mxu0
        %v1758 = vadd.f32 0.0, %v1757
        %v1759 = vpop.f32.mrb[0].mxu0
        %v1760 = vpop.f32.mrb[0].mxu0
        %v1761 = vpop.f32.mrb[0].mxu0
        %1762 = vdwg.mxu0
        %1765 = vrot.lane.b32.xlu0 %v1528, 8
        %v1766 = vpop.permute.xlu0 %1765
        %1767 = vrot.lane.b32.xlu0 %v1574, 8
        %v1768 = vpop.permute.xlu0 %1767
        %1773 = vrot.lane.b32.xlu0 %v1620, 16
        %v1774 = vpop.permute.xlu0 %1773
        %1775 = vrot.lane.b32.xlu0 %v1666, 16
        %v1776 = vpop.permute.xlu0 %1775
        %1781 = vrot.lane.b32.xlu0 %v1712, 24
        %v1782 = vpop.permute.xlu0 %1781
        %1783 = vrot.lane.b32.xlu0 %v1758, 24
        %v1784 = vpop.permute.xlu0 %1783
        %v1787 = vsel %vm909, %v1436, %v1766
        %v1788 = vsel %vm909, %v1482, %v1768
        %vm1789 = vcmask 130048
        %v1790 = vsel %vm1789, %v1787, %v1774
        %v1791 = vsel %vm1789, %v1788, %v1776
        %vm1792 = vcmask 195584
        %v1793 = vsel %vm1792, %v1790, %v1782
        %v1794 = vsel %vm1792, %v1791, %v1784
        %v1795 = vpack.c.bf16 %v1794, %v1793
        %v1796 = vld [vmem:[#allocation11] sm:$0xf]
        %v1797 = vld [vmem:[#allocation11 + $0x4] sm:$0xf]
        %v1798 = vld [vmem:[#allocation11 + $0x8] sm:$0xf]
        %v1799 = vld [vmem:[#allocation11 + $0xc] sm:$0xf]
        %v1800 = vld [vmem:[#allocation13] sm:$0x1]
        %v1802 = vlaneseq
        %v1803 = vshrl.u32 %v1802, 7
        %v1804 = vsub.s32 0, %v1803
        %v1805 = vrot.slane %v1800, %v1804
        %v1811 = vunpack.c.l.b16 %v1796
        %v1812 = vunpack.c.l.b16 %v1797
        %v1813 = vunpack.c.l.b16 %v1798
        %v1814 = vunpack.c.l.b16 %v1799
        %v1815 = vpack.c.b16 %v1812, %v1811
        %v1816 = vpack.c.b16 %v1814, %v1813
        %v1820 = vsel %vm678, %v1795, 0
        %1822 = vmatprep.subr.bf16.mxu0 0
        %1823 = vmatpush1.bf16.msra.mxu0 %v1815
        %1824 = vmatprep.subr.bf16.mxu0 0
        %1825 = vmatpush1.bf16.msra.mxu0 %v1816
        %1826 = vmatprep.subr.bf16.mxu0 0
        %1827 = vmatpush1.bf16.msra.mxu0 0
        %1828 = vmatprep.subr.bf16.mxu0 0
        %1829 = vmatpush1.bf16.msra.mxu0 0
        %1830 = vmatprep.subr.bf16.mxu0 0
        %1831 = vmatpush1.bf16.msra.mxu0 0
        %1832 = vmatprep.subr.bf16.mxu0 0
        %1833 = vmatpush1.bf16.msra.mxu0 0
        %1834 = vmatprep.subr.bf16.mxu0 0
        %1835 = vmatpush1.bf16.msra.mxu0 0
        %1836 = vmatprep.subr.bf16.mxu0 0
        %1837 = vmatpush1.bf16.msra.mxu0 0
        %1838 = vmatprep.subr.bf16.mxu0 0
        %1839 = vmatpush1.bf16.msra.mxu0 0
        %1840 = vmatprep.subr.bf16.mxu0 0
        %1841 = vmatpush1.bf16.msra.mxu0 0
        %1842 = vmatprep.subr.bf16.mxu0 0
        %1843 = vmatpush1.bf16.msra.mxu0 0
        %1844 = vmatprep.subr.bf16.mxu0 0
        %1845 = vmatpush1.bf16.msra.mxu0 0
        %1846 = vmatprep.subr.bf16.mxu0 0
        %1847 = vmatpush1.bf16.msra.mxu0 0
        %1848 = vmatprep.subr.bf16.mxu0 0
        %1849 = vmatpush1.bf16.msra.mxu0 0
        %1850 = vmatprep.subr.bf16.mxu0 0
        %1851 = vmatpush1.bf16.msra.mxu0 0
        %1852 = vmatprep.subr.bf16.mxu0 0
        %1853 = vmatpush1.bf16.msra.mxu0 0
        %1854 = vmatprep.mubr.bf16.mxu0 0
        %1855 = vmatmul.mubr.bf16.gmra.mrb[0].mxu0 %v1820
        %v1856 = vpop.f32.mrb[0].mxu0
        %v1857 = vadd.f32 %v1805, %v1856
        %v1858 = vpop.f32.mrb[0].mxu0
        %v1859 = vpop.f32.mrb[0].mxu0
        %v1860 = vadd.f32 %v1805, %v1859
        %v1861 = vpop.f32.mrb[0].mxu0
        %1862 = vdwg.mxu0
        %v1863 = vadd.f32 %v652, %v1857
        %v1864 = vadd.f32 %v653, %v1860
        %v1865 = vld [vmem:[%s10] sm:$0x1]
        %v1866 = vld [vmem:[%s11] sm:$0x1]
        %v1867 = vsel %vm678, %v1863, 0.0
        %1868 = vadd.xlane.f32.xlu0 %v1867
        %v1869 = vpop.xlane.xlu0 %1868
        %v1870 = vsel %vm678, %v1864, 0.0
        %1871 = vadd.xlane.f32.xlu0 %v1870
        %v1872 = vpop.xlane.xlu0 %1871
        %v1873 = vrcp.pop 32.0
        %v1874 = vmul.f32 %v1869, %v1873
        %v1875 = vmul.f32 %v1872, %v1873
        %v1876 = vsub.f32 %v1863, %v1874
        %v1877 = vsub.f32 %v1864, %v1875
        %v1878 = vmul.f32 %v1876, %v1876
        %v1879 = vmul.f32 %v1877, %v1877
        %v1880 = vsel %vm678, %v1878, 0.0
        %1881 = vadd.xlane.f32.xlu0 %v1880
        %v1882 = vpop.xlane.xlu0 %1881
        %v1883 = vsel %vm678, %v1879, 0.0
        %1884 = vadd.xlane.f32.xlu0 %v1883
        %v1885 = vpop.xlane.xlu0 %1884
        %v1886 = vmul.f32 %v1882, %v1873
        %v1887 = vmul.f32 %v1885, %v1873
        %v1888 = vadd.f32 %v1886, 1e-05
        %v1889 = vadd.f32 %v1887, 1e-05
        %v1890 = vrsqrt.pop %v1888
        %v1891 = vrsqrt.pop %v1889
        %v1892 = vmul.f32 %v1876, %v1890
        %v1893 = vmul.f32 %v1877, %v1891
        %v1895 = vlaneseq
        %v1896 = vshrl.u32 %v1895, 7
        %v1897 = vsub.s32 0, %v1896
        %v1898 = vrot.slane %v1865, %v1897
        %v1900 = vmul.f32 %v1892, %v1898
        %v1901 = vmul.f32 %v1893, %v1898
        %v1903 = vlaneseq
        %v1904 = vshrl.u32 %v1903, 7
        %v1905 = vsub.s32 0, %v1904
        %v1906 = vrot.slane %v1866, %v1905
        %v1908 = vadd.f32 %v1900, %v1906
        %v1909 = vadd.f32 %v1901, %v1906
        %v1910 = vpack.c.bf16 %v1909, %v1908
        %v1911 = vld [vmem:[%s12] sm:$0xf]
        %v1912 = vld [vmem:[%s12 + $0x4] sm:$0xf]
        %v1913 = vld [vmem:[%s12 + $0x8] sm:$0xf]
        %v1914 = vld [vmem:[%s12 + $0xc] sm:$0xf]
        %v1915 = vld [vmem:[%s13] sm:$0x1]
        %v1917 = vlaneseq
        %v1918 = vshrl.u32 %v1917, 7
        %v1919 = vsub.s32 0, %v1918
        %v1920 = vrot.slane %v1915, %v1919
        %v1926 = vunpack.c.l.b16 %v1911
        %v1927 = vunpack.c.l.b16 %v1912
        %v1928 = vunpack.c.l.b16 %v1913
        %v1929 = vunpack.c.l.b16 %v1914
        %v1930 = vpack.c.b16 %v1927, %v1926
        %v1931 = vpack.c.b16 %v1929, %v1928
        %v1935 = vsel %vm678, %v1910, 0
        %1937 = vmatprep.subr.bf16.mxu0 0
        %1938 = vmatpush1.bf16.msra.mxu0 %v1930
        %1939 = vmatprep.subr.bf16.mxu0 0
        %1940 = vmatpush1.bf16.msra.mxu0 %v1931
        %1941 = vmatprep.subr.bf16.mxu0 0
        %1942 = vmatpush1.bf16.msra.mxu0 0
        %1943 = vmatprep.subr.bf16.mxu0 0
        %1944 = vmatpush1.bf16.msra.mxu0 0
        %1945 = vmatprep.subr.bf16.mxu0 0
        %1946 = vmatpush1.bf16.msra.mxu0 0
        %1947 = vmatprep.subr.bf16.mxu0 0
        %1948 = vmatpush1.bf16.msra.mxu0 0
        %1949 = vmatprep.subr.bf16.mxu0 0
        %1950 = vmatpush1.bf16.msra.mxu0 0
        %1951 = vmatprep.subr.bf16.mxu0 0
        %1952 = vmatpush1.bf16.msra.mxu0 0
        %1953 = vmatprep.subr.bf16.mxu0 0
        %1954 = vmatpush1.bf16.msra.mxu0 0
        %1955 = vmatprep.subr.bf16.mxu0 0
        %1956 = vmatpush1.bf16.msra.mxu0 0
        %1957 = vmatprep.subr.bf16.mxu0 0
        %1958 = vmatpush1.bf16.msra.mxu0 0
        %1959 = vmatprep.subr.bf16.mxu0 0
        %1960 = vmatpush1.bf16.msra.mxu0 0
        %1961 = vmatprep.subr.bf16.mxu0 0
        %1962 = vmatpush1.bf16.msra.mxu0 0
        %1963 = vmatprep.subr.bf16.mxu0 0
        %1964 = vmatpush1.bf16.msra.mxu0 0
        %1965 = vmatprep.subr.bf16.mxu0 0
        %1966 = vmatpush1.bf16.msra.mxu0 0
        %1967 = vmatprep.subr.bf16.mxu0 0
        %1968 = vmatpush1.bf16.msra.mxu0 0
        %1969 = vmatprep.mubr.bf16.mxu0 0
        %1970 = vmatmul.mubr.bf16.gmra.mrb[0].mxu0 %v1935
        %v1971 = vpop.f32.mrb[0].mxu0
        %v1972 = vadd.f32 %v1920, %v1971
        %v1973 = vpop.f32.mrb[0].mxu0
        %v1974 = vpop.f32.mrb[0].mxu0
        %v1975 = vadd.f32 %v1920, %v1974
        %v1976 = vpop.f32.mrb[0].mxu0
        %1977 = vdwg.mxu0
        %v1978 = vmax.f32 %v1972, 0.0
        %v1979 = vmax.f32 %v1975, 0.0
        %v1980 = vadd.f32 %v1908, %v1978
        %v1981 = vadd.f32 %v1909, %v1979
        %v1982 = vld [vmem:[%s14] sm:$0x1]
        %v1983 = vld [vmem:[%s15] sm:$0x1]
        %v1984 = vsel %vm678, %v1980, 0.0
        %1985 = vadd.xlane.f32.xlu0 %v1984
        %v1986 = vpop.xlane.xlu0 %1985
        %v1987 = vsel %vm678, %v1981, 0.0
        %1988 = vadd.xlane.f32.xlu0 %v1987
        %v1989 = vpop.xlane.xlu0 %1988
        %v1990 = vmul.f32 %v1986, %v1873
        %v1991 = vmul.f32 %v1989, %v1873
        %v1992 = vsub.f32 %v1980, %v1990
        %v1993 = vsub.f32 %v1981, %v1991
        %v1994 = vmul.f32 %v1992, %v1992
        %v1995 = vmul.f32 %v1993, %v1993
        %v1996 = vsel %vm678, %v1994, 0.0
        %1997 = vadd.xlane.f32.xlu0 %v1996
        %v1998 = vpop.xlane.xlu0 %1997
        %v1999 = vsel %vm678, %v1995, 0.0
        %2000 = vadd.xlane.f32.xlu0 %v1999
        %v2001 = vpop.xlane.xlu0 %2000
        %v2002 = vmul.f32 %v1998, %v1873
        %v2003 = vmul.f32 %v2001, %v1873
        %v2004 = vadd.f32 %v2002, 1e-05
        %v2005 = vadd.f32 %v2003, 1e-05
        %v2006 = vrsqrt.pop %v2004
        %v2007 = vrsqrt.pop %v2005
        %v2008 = vmul.f32 %v1992, %v2006
        %v2009 = vmul.f32 %v1993, %v2007
        %v2011 = vlaneseq
        %v2012 = vshrl.u32 %v2011, 7
        %v2013 = vsub.s32 0, %v2012
        %v2014 = vrot.slane %v1982, %v2013
        %v2016 = vmul.f32 %v2008, %v2014
        %v2017 = vmul.f32 %v2009, %v2014
        %v2019 = vlaneseq
        %v2020 = vshrl.u32 %v2019, 7
        %v2021 = vsub.s32 0, %v2020
        %v2022 = vrot.slane %v1983, %v2021
        %v2024 = vadd.f32 %v2016, %v2022
        %v2025 = vadd.f32 %v2017, %v2022
        %2026 = vst.msk [vmem:[%s647] sm:$0xff] %vm678, %v2024
        %2027 = vst.msk [vmem:[%s647 + $0x8] sm:$0xff] %vm678, %v2025
        %s2028 = sand.u32 %s392, 1
        %s2029 = scalar_lea.sflag [#allocation4], %s2028
        %s2030 = sand.u32 %s392, 1
        %s2031 = smul.addr %s2030, 16
        %s2032 = scalar_lea.vmem [#allocation14], %s2031
        // Predicated region
        $region113: #{tpu_custom_call.1} parent=83 // pred_check
          %p2033 = pneg %p402
        $region114: #{tpu_custom_call.1} parent=83 // pred_check_branch
          %2035 = sbr.rel (%p2033) target = $region116
        $region115: #{tpu_custom_call.1} parent=83 // pred_region
          %s2036 = smul.u32 2, %s38
          %s2038 = ssub.s32 256, 256
          %2039 = vsyncadd %s2029, %s2038
          %s2040 = smul.addr %s2036, 128
          %s2041 = scalar_lea.hbm %s16, %s2040
          %s2042 = sshll.u32 %s2032, 4
          %s2043 = int_to_ptr.vmem [resolvable:$true] %s2042
          %2048 = dma.vmem_to_hbm [thread:$0]  %s2043, 256, %s2041, %s2029, 128, 128, 8
        $region116: #{tpu_custom_call.1} parent=83 // pred_fallthru
          _
      $region84: #{tpu_custom_call.1} parent=5 // pred_fallthru
        _
      %p2049 = scmp.le.s32.totalorder 2, %s33
      // Predicated region
      $region117: #{tpu_custom_call.1} parent=5 // pred_check
        %p2050 = pneg %p2049
      $region118: #{tpu_custom_call.1} parent=5 // pred_check_branch
        %2052 = sbr.rel (%p2050) target = $region120
      $region119: #{tpu_custom_call.1} parent=5 // pred_region
        %s2053 = ssub.s32 %s33, 2
        // Predicated region
        $region121: #{tpu_custom_call.1} parent=119 // pred_check
          %p2054 = pneg %p408
        $region122: #{tpu_custom_call.1} parent=119 // pred_check_branch
          %2056 = sbr.rel (%p2054) target = $region124
        $region123: #{tpu_custom_call.1} parent=119 // pred_region
          %s2057 = sand.u32 %s393, 1
          %s2058 = scalar_lea.sflag [#allocation4], %s2057
          %s2059 = sand.u32 %s393, 1
          %s2060 = smul.addr %s2059, 16
          %s2061 = scalar_lea.vmem [#allocation14], %s2060
          %2062 = dma.done %s2058, 256
        $region124: #{tpu_custom_call.1} parent=119 // pred_fallthru
          _
      $region120: #{tpu_custom_call.1} parent=5 // pred_fallthru
        _
    $region6: #{tpu_custom_call.1} parent=1 // loop_footer
      %s37 = sadd.s32 1, %s33
    $region7: #{tpu_custom_call.1} parent=1 // loop_footer_branch
      %32 = sbr.rel target = $region3
    $region8: #{tpu_custom_call.1} parent=1 // loop_exit
      _
    %2063 = vsyncpa [#allocation3], 1
    %s2064 = scalar_lea.sflag [#allocation3], 1
    %2065 = vsyncpa %s2064, 1
    %2066 = vsyncpa [#allocation6], 1
    %s2067 = scalar_lea.sflag [#allocation6], 1
    %2068 = vsyncpa %s2067, 1
    %2069 = vsyncpa [#allocation9], 1
    %2070 = vsyncpa [#allocation12], 1
    %2071 = vsyncpa [#allocation4], 1
    %s2072 = scalar_lea.sflag [#allocation4], 1
    %2073 = vsyncpa %s2072, 1

// kernel: tpu_custom_call.1
$region0: #{tpu_custom_call.1}
  #allocation0 [shape = 'u32[]', space=smem, size = 0x4, offset = 0x4, fixed_abs, tag = 'smem constant byte address 0x4 - core index']
  #allocation1 [shape = 'u32[144,128]{1,0:T(1,128)}', space=vmem, size = 0x12000, scoped, tag = 'internal scratch']
  %s0 = inlined_call_operand.hbm [shape: f32[4,8,32], index: 0, kind: input, shape index: {}]
  %s1 = inlined_call_operand.hbm [shape: f32[4,1,8], index: 1, kind: input, shape index: {}]
  %s2 = inlined_call_operand.hbm [shape: bf16[32,32], index: 2, kind: input, shape index: {}]
  %s3 = inlined_call_operand.vmem [shape: f32[1,32], index: 3, kind: input, shape index: {}]
  %s4 = inlined_call_operand.hbm [shape: bf16[32,32], index: 4, kind: input, shape index: {}]
  %s5 = inlined_call_operand.vmem [shape: f32[1,32], index: 5, kind: input, shape index: {}]
  %s6 = inlined_call_operand.vmem [shape: bf16[32,32], index: 6, kind: input, shape index: {}]
  %s7 = inlined_call_operand.hbm [shape: f32[1,32], index: 7, kind: input, shape index: {}]
  %s8 = inlined_call_operand.hbm [shape: bf16[32,32], index: 8, kind: input, shape index: {}]
  %s9 = inlined_call_operand.hbm [shape: f32[1,32], index: 9, kind: input, shape index: {}]
  %s10 = inlined_call_operand.vmem [shape: f32[1,32], index: 10, kind: input, shape index: {}]
  %s11 = inlined_call_operand.vmem [shape: f32[1,32], index: 11, kind: input, shape index: {}]
  %s12 = inlined_call_operand.vmem [shape: bf16[32,32], index: 12, kind: input, shape index: {}]
  %s13 = inlined_call_operand.vmem [shape: f32[1,32], index: 13, kind: input, shape index: {}]
  %s14 = inlined_call_operand.vmem [shape: f32[1,32], index: 14, kind: input, shape index: {}]
  %s15 = inlined_call_operand.vmem [shape: f32[1,32], index: 15, kind: input, shape index: {}]
  %s16 = inlined_call_operand.hbm [shape: f32[4,8,32], index: 16, kind: output, shape index: {}]
  %s17 = sld [smem:[#allocation0]]
  $region125: #{tpu_custom_call.1} parent=0
    _
  %s19 = ssub.s32 1, %s17
  %s20 = scalar_select 0, %s19, %s17
  $region1: #{tpu_custom_call.1} parent=0
    #allocation2 [shape = 'u8[16384]{0}', space=vmem, size = 0x4000, scoped, tag = 'input window, operand 0']
    #allocation3 [shape = 's32[2]{0}', space=sflag, size = 0x8, scoped, tag = 'scoped memory for tpu_custom_call.1']
    #allocation4 [shape = 's32[2]{0}', space=sflag, size = 0x8, scoped, tag = 'scoped memory for tpu_custom_call.1']
    #allocation5 [shape = 'u8[2048]{0}', space=vmem, size = 0x800, scoped, tag = 'input window, operand 1']
    #allocation6 [shape = 's32[2]{0}', space=sflag, size = 0x8, scoped, tag = 'scoped memory for tpu_custom_call.1']
    #allocation7 [shape = 'u8[8192]{0}', space=vmem, size = 0x2000, scoped, tag = 'input window, operand 2, single buffered']
    #allocation8 [shape = 'u8[8192]{0}', space=vmem, size = 0x2000, scoped, tag = 'input window, operand 4, single buffered']
    #allocation9 [shape = 's32[1]{0}', space=sflag, size = 0x4, scoped, tag = 'scoped memory for tpu_custom_call.1']
    #allocation10 [shape = 'u8[512]{0}', space=vmem, size = 0x400, scoped, tag = 'input window, operand 7, single buffered']
    #allocation11 [shape = 'u8[8192]{0}', space=vmem, size = 0x2000, scoped, tag = 'input window, operand 8, single buffered']
    #allocation12 [shape = 's32[1]{0}', space=sflag, size = 0x4, scoped, tag = 'scoped memory for tpu_custom_call.1']
    #allocation13 [shape = 'u8[512]{0}', space=vmem, size = 0x400, scoped, tag = 'input window, operand 9, single buffered']
    #allocation14 [shape = 'u8[16384]{0}', space=vmem, size = 0x4000, scoped, tag = 'output window, operand 0']
    %21 = vsyncpa [#allocation3], 0
    %s22 = scalar_lea.sflag [#allocation3], 1
    %23 = vsyncpa %s22, 0
    %24 = vsyncpa [#allocation6], 0
    %s25 = scalar_lea.sflag [#allocation6], 1
    %26 = vsyncpa %s25, 0
    %27 = vsyncpa [#allocation9], 0
    %28 = vsyncpa [#allocation12], 0
    %29 = vsyncpa [#allocation4], 0
    %s30 = scalar_lea.sflag [#allocation4], 1
    %31 = vsyncpa %s30, 0
    loop: start=0, step=1, limit=4
    $region2: #{tpu_custom_call.1} parent=1 // loop_pre_header
      _
    $region3: #{tpu_custom_call.1} parent=1 // loop_header
      %s33 = sphi 0, %s37
      %p34 = scmp.ge.s32.totalorder %s33, 4
      %s43 = sphi 0, %s45
      %s46 = sphi 0, %s43
      %s47 = sphi 0, %s46
      %s63 = sphi 0, %s47
      %s69 = sphi 0, %s71
      %s72 = sphi 0, %s69
      %s73 = sphi 0, %s72
      %s89 = sphi 0, %s73
      %s93 = sphi 0, %s93
      %s95 = sphi 0, %s93
      %s96 = sphi 0, %s95
      %s110 = sphi 0, %s96
      %s114 = sphi 0, %s114
      %s116 = sphi 0, %s114
      %s117 = sphi 0, %s116
      %s131 = sphi 0, %s117
      %s135 = sphi 0, %s135
      %s137 = sphi 0, %s135
      %s138 = sphi 0, %s137
      %s152 = sphi 0, %s138
      %s156 = sphi 0, %s156
      %s158 = sphi 0, %s156
      %s159 = sphi 0, %s158
      %s173 = sphi 0, %s159
      %s177 = sphi 0, %s177
      %s179 = sphi 0, %s177
      %s180 = sphi 0, %s179
      %s194 = sphi 0, %s180
      %s198 = sphi 0, %s198
      %s200 = sphi 0, %s198
      %s201 = sphi 0, %s200
      %s215 = sphi 0, %s201
      %s219 = sphi 0, %s219
      %s221 = sphi 0, %s219
      %s222 = sphi 0, %s221
      %s236 = sphi 0, %s222
      %s240 = sphi 0, %s240
      %s242 = sphi 0, %s240
      %s243 = sphi 0, %s242
      %s257 = sphi 0, %s243
      %s261 = sphi 0, %s261
      %s263 = sphi 0, %s261
      %s264 = sphi 0, %s263
      %s278 = sphi 0, %s264
      %s282 = sphi 0, %s282
      %s284 = sphi 0, %s282
      %s285 = sphi 0, %s284
      %s299 = sphi 0, %s285
      %s303 = sphi 0, %s303
      %s305 = sphi 0, %s303
      %s306 = sphi 0, %s305
      %s320 = sphi 0, %s306
      %s324 = sphi 0, %s324
      %s326 = sphi 0, %s324
      %s327 = sphi 0, %s326
      %s341 = sphi 0, %s327
      %s345 = sphi 0, %s345
      %s347 = sphi 0, %s345
      %s348 = sphi 0, %s347
      %s362 = sphi 0, %s348
      %s366 = sphi 0, %s366
      %s368 = sphi 0, %s366
      %s369 = sphi 0, %s368
      %s383 = sphi 0, %s369
      %s389 = sphi 0, %s391
      %s392 = sphi 0, %s389
      %s393 = sphi 0, %s392
      %s409 = sphi 0, %s393
    $region4: #{tpu_custom_call.1} parent=1 // loop_header_branch
      %36 = sbr.rel (%p34) target = $region8
    $region5: #{tpu_custom_call.1} parent=1 // loop_body
      %s38 = ssub.s32 %s33, 1
      %s39 = ssub.s32 %s33, 2
      %s40 = sadd.s32 %s33, 1
      %s41 = ssub.s32 %s33, %s40
      %p42 = scmp.eq.s32.totalorder %s41, 0
      %s44 = sadd.s32 %s43, 1
      %s45 = scalar_select %p42, %s43, %s44
      %p48 = pneg %p42
      %p49 = scmp.eq.s32.totalorder %s33, 1
      %p50 = por %p48, %p49
      %p51 = scmp.ne.s32.totalorder %s43, %s46
      %p52 = scmp.eq.s32.totalorder %s33, 0
      %p53 = por %p51, %p52
      %p54 = scmp.ne.s32.totalorder %s43, %s46
      %p55 = scmp.eq.s32.totalorder %s38, 1
      %p56 = por %p54, %p55
      %p57 = scmp.ne.s32.totalorder %s46, %s47
      %p58 = scmp.eq.s32.totalorder %s38, 0
      %p59 = por %p57, %p58
      %p60 = scmp.ne.s32.totalorder %s46, %s47
      %p61 = scmp.eq.s32.totalorder %s39, 1
      %p62 = por %p60, %p61
      %p64 = scmp.ne.s32.totalorder %s47, %s63
      %p65 = scmp.eq.s32.totalorder %s39, 0
      %p66 = por %p64, %p65
      %s67 = ssub.s32 %s33, %s40
      %p68 = scmp.eq.s32.totalorder %s67, 0
      %s70 = sadd.s32 %s69, 1
      %s71 = scalar_select %p68, %s69, %s70
      %p74 = pneg %p68
      %p75 = scmp.eq.s32.totalorder %s33, 1
      %p76 = por %p74, %p75
      %p77 = scmp.ne.s32.totalorder %s69, %s72
      %p78 = scmp.eq.s32.totalorder %s33, 0
      %p79 = por %p77, %p78
      %p80 = scmp.ne.s32.totalorder %s69, %s72
      %p81 = scmp.eq.s32.totalorder %s38, 1
      %p82 = por %p80, %p81
      %p83 = scmp.ne.s32.totalorder %s72, %s73
      %p84 = scmp.eq.s32.totalorder %s38, 0
      %p85 = por %p83, %p84
      %p86 = scmp.ne.s32.totalorder %s72, %s73
      %p87 = scmp.eq.s32.totalorder %s39, 1
      %p88 = por %p86, %p87
      %p90 = scmp.ne.s32.totalorder %s73, %s89
      %p91 = scmp.eq.s32.totalorder %s39, 0
      %p92 = por %p90, %p91
      %s94 = sadd.s32 %s93, 1
      %p97 = scmp.eq.s32.totalorder %s33, 1
      %p98 = scmp.ne.s32.totalorder %s93, %s95
      %p99 = scmp.eq.s32.totalorder %s33, 0
      %p100 = por %p98, %p99
      %p101 = scmp.ne.s32.totalorder %s93, %s95
      %p102 = scmp.eq.s32.totalorder %s38, 1
      %p103 = por %p101, %p102
      %p104 = scmp.ne.s32.totalorder %s95, %s96
      %p105 = scmp.eq.s32.totalorder %s38, 0
      %p106 = por %p104, %p105
      %p107 = scmp.ne.s32.totalorder %s95, %s96
      %p108 = scmp.eq.s32.totalorder %s39, 1
      %p109 = por %p107, %p108
      %p111 = scmp.ne.s32.totalorder %s96, %s110
      %p112 = scmp.eq.s32.totalorder %s39, 0
      %p113 = por %p111, %p112
      %s115 = sadd.s32 %s114, 1
      %p118 = scmp.eq.s32.totalorder %s33, 1
      %p119 = scmp.ne.s32.totalorder %s114, %s116
      %p120 = scmp.eq.s32.totalorder %s33, 0
      %p121 = por %p119, %p120
      %p122 = scmp.ne.s32.totalorder %s114, %s116
      %p123 = scmp.eq.s32.totalorder %s38, 1
      %p124 = por %p122, %p123
      %p125 = scmp.ne.s32.totalorder %s116, %s117
      %p126 = scmp.eq.s32.totalorder %s38, 0
      %p127 = por %p125, %p126
      %p128 = scmp.ne.s32.totalorder %s116, %s117
      %p129 = scmp.eq.s32.totalorder %s39, 1
      %p130 = por %p128, %p129
      %p132 = scmp.ne.s32.totalorder %s117, %s131
      %p133 = scmp.eq.s32.totalorder %s39, 0
      %p134 = por %p132, %p133
      %s136 = sadd.s32 %s135, 1
      %p139 = scmp.eq.s32.totalorder %s33, 1
      %p140 = scmp.ne.s32.totalorder %s135, %s137
      %p141 = scmp.eq.s32.totalorder %s33, 0
      %p142 = por %p140, %p141
      %p143 = scmp.ne.s32.totalorder %s135, %s137
      %p144 = scmp.eq.s32.totalorder %s38, 1
      %p145 = por %p143, %p144
      %p146 = scmp.ne.s32.totalorder %s137, %s138
      %p147 = scmp.eq.s32.totalorder %s38, 0
      %p148 = por %p146, %p147
      %p149 = scmp.ne.s32.totalorder %s137, %s138
      %p150 = scmp.eq.s32.totalorder %s39, 1
      %p151 = por %p149, %p150
      %p153 = scmp.ne.s32.totalorder %s138, %s152
      %p154 = scmp.eq.s32.totalorder %s39, 0
      %p155 = por %p153, %p154
      %s157 = sadd.s32 %s156, 1
      %p160 = scmp.eq.s32.totalorder %s33, 1
      %p161 = scmp.ne.s32.totalorder %s156, %s158
      %p162 = scmp.eq.s32.totalorder %s33, 0
      %p163 = por %p161, %p162
      %p164 = scmp.ne.s32.totalorder %s156, %s158
      %p165 = scmp.eq.s32.totalorder %s38, 1
      %p166 = por %p164, %p165
      %p167 = scmp.ne.s32.totalorder %s158, %s159
      %p168 = scmp.eq.s32.totalorder %s38, 0
      %p169 = por %p167, %p168
      %p170 = scmp.ne.s32.totalorder %s158, %s159
      %p171 = scmp.eq.s32.totalorder %s39, 1
      %p172 = por %p170, %p171
      %p174 = scmp.ne.s32.totalorder %s159, %s173
      %p175 = scmp.eq.s32.totalorder %s39, 0
      %p176 = por %p174, %p175
      %s178 = sadd.s32 %s177, 1
      %p181 = scmp.eq.s32.totalorder %s33, 1
      %p182 = scmp.ne.s32.totalorder %s177, %s179
      %p183 = scmp.eq.s32.totalorder %s33, 0
      %p184 = por %p182, %p183
      %p185 = scmp.ne.s32.totalorder %s177, %s179
      %p186 = scmp.eq.s32.totalorder %s38, 1
      %p187 = por %p185, %p186
      %p188 = scmp.ne.s32.totalorder %s179, %s180
      %p189 = scmp.eq.s32.totalorder %s38, 0
      %p190 = por %p188, %p189
      %p191 = scmp.ne.s32.totalorder %s179, %s180
      %p192 = scmp.eq.s32.totalorder %s39, 1
      %p193 = por %p191, %p192
      %p195 = scmp.ne.s32.totalorder %s180, %s194
      %p196 = scmp.eq.s32.totalorder %s39, 0
      %p197 = por %p195, %p196
      %s199 = sadd.s32 %s198, 1
      %p202 = scmp.eq.s32.totalorder %s33, 1
      %p203 = scmp.ne.s32.totalorder %s198, %s200
      %p204 = scmp.eq.s32.totalorder %s33, 0
      %p205 = por %p203, %p204
      %p206 = scmp.ne.s32.totalorder %s198, %s200
      %p207 = scmp.eq.s32.totalorder %s38, 1
      %p208 = por %p206, %p207
      %p209 = scmp.ne.s32.totalorder %s200, %s201
      %p210 = scmp.eq.s32.totalorder %s38, 0
      %p211 = por %p209, %p210
      %p212 = scmp.ne.s32.totalorder %s200, %s201
      %p213 = scmp.eq.s32.totalorder %s39, 1
      %p214 = por %p212, %p213
      %p216 = scmp.ne.s32.totalorder %s201, %s215
      %p217 = scmp.eq.s32.totalorder %s39, 0
      %p218 = por %p216, %p217
      %s220 = sadd.s32 %s219, 1
      %p223 = scmp.eq.s32.totalorder %s33, 1
      %p224 = scmp.ne.s32.totalorder %s219, %s221
      %p225 = scmp.eq.s32.totalorder %s33, 0
      %p226 = por %p224, %p225
      %p227 = scmp.ne.s32.totalorder %s219, %s221
      %p228 = scmp.eq.s32.totalorder %s38, 1
      %p229 = por %p227, %p228
      %p230 = scmp.ne.s32.totalorder %s221, %s222
      %p231 = scmp.eq.s32.totalorder %s38, 0
      %p232 = por %p230, %p231
      %p233 = scmp.ne.s32.totalorder %s221, %s222
      %p234 = scmp.eq.s32.totalorder %s39, 1
      %p235 = por %p233, %p234
      %p237 = scmp.ne.s32.totalorder %s222, %s236
      %p238 = scmp.eq.s32.totalorder %s39, 0
      %p239 = por %p237, %p238
      %s241 = sadd.s32 %s240, 1
      %p244 = scmp.eq.s32.totalorder %s33, 1
      %p245 = scmp.ne.s32.totalorder %s240, %s242
      %p246 = scmp.eq.s32.totalorder %s33, 0
      %p247 = por %p245, %p246
      %p248 = scmp.ne.s32.totalorder %s240, %s242
      %p249 = scmp.eq.s32.totalorder %s38, 1
      %p250 = por %p248, %p249
      %p251 = scmp.ne.s32.totalorder %s242, %s243
      %p252 = scmp.eq.s32.totalorder %s38, 0
      %p253 = por %p251, %p252
      %p254 = scmp.ne.s32.totalorder %s242, %s243
      %p255 = scmp.eq.s32.totalorder %s39, 1
      %p256 = por %p254, %p255
      %p258 = scmp.ne.s32.totalorder %s243, %s257
      %p259 = scmp.eq.s32.totalorder %s39, 0
      %p260 = por %p258, %p259
      %s262 = sadd.s32 %s261, 1
      %p265 = scmp.eq.s32.totalorder %s33, 1
      %p266 = scmp.ne.s32.totalorder %s261, %s263
      %p267 = scmp.eq.s32.totalorder %s33, 0
      %p268 = por %p266, %p267
      %p269 = scmp.ne.s32.totalorder %s261, %s263
      %p270 = scmp.eq.s32.totalorder %s38, 1
      %p271 = por %p269, %p270
      %p272 = scmp.ne.s32.totalorder %s263, %s264
      %p273 = scmp.eq.s32.totalorder %s38, 0
      %p274 = por %p272, %p273
      %p275 = scmp.ne.s32.totalorder %s263, %s264
      %p276 = scmp.eq.s32.totalorder %s39, 1
      %p277 = por %p275, %p276
      %p279 = scmp.ne.s32.totalorder %s264, %s278
      %p280 = scmp.eq.s32.totalorder %s39, 0
      %p281 = por %p279, %p280
      %s283 = sadd.s32 %s282, 1
      %p286 = scmp.eq.s32.totalorder %s33, 1
      %p287 = scmp.ne.s32.totalorder %s282, %s284
      %p288 = scmp.eq.s32.totalorder %s33, 0
      %p289 = por %p287, %p288
      %p290 = scmp.ne.s32.totalorder %s282, %s284
      %p291 = scmp.eq.s32.totalorder %s38, 1
      %p292 = por %p290, %p291
      %p293 = scmp.ne.s32.totalorder %s284, %s285
      %p294 = scmp.eq.s32.totalorder %s38, 0
      %p295 = por %p293, %p294
      %p296 = scmp.ne.s32.totalorder %s284, %s285
      %p297 = scmp.eq.s32.totalorder %s39, 1
      %p298 = por %p296, %p297
      %p300 = scmp.ne.s32.totalorder %s285, %s299
      %p301 = scmp.eq.s32.totalorder %s39, 0
      %p302 = por %p300, %p301
      %s304 = sadd.s32 %s303, 1
      %p307 = scmp.eq.s32.totalorder %s33, 1
      %p308 = scmp.ne.s32.totalorder %s303, %s305
      %p309 = scmp.eq.s32.totalorder %s33, 0
      %p310 = por %p308, %p309
      %p311 = scmp.ne.s32.totalorder %s303, %s305
      %p312 = scmp.eq.s32.totalorder %s38, 1
      %p313 = por %p311, %p312
      %p314 = scmp.ne.s32.totalorder %s305, %s306
      %p315 = scmp.eq.s32.totalorder %s38, 0
      %p316 = por %p314, %p315
      %p317 = scmp.ne.s32.totalorder %s305, %s306
      %p318 = scmp.eq.s32.totalorder %s39, 1
      %p319 = por %p317, %p318
      %p321 = scmp.ne.s32.totalorder %s306, %s320
      %p322 = scmp.eq.s32.totalorder %s39, 0
      %p323 = por %p321, %p322
      %s325 = sadd.s32 %s324, 1
      %p328 = scmp.eq.s32.totalorder %s33, 1
      %p329 = scmp.ne.s32.totalorder %s324, %s326
      %p330 = scmp.eq.s32.totalorder %s33, 0
      %p331 = por %p329, %p330
      %p332 = scmp.ne.s32.totalorder %s324, %s326
      %p333 = scmp.eq.s32.totalorder %s38, 1
      %p334 = por %p332, %p333
      %p335 = scmp.ne.s32.totalorder %s326, %s327
      %p336 = scmp.eq.s32.totalorder %s38, 0
      %p337 = por %p335, %p336
      %p338 = scmp.ne.s32.totalorder %s326, %s327
      %p339 = scmp.eq.s32.totalorder %s39, 1
      %p340 = por %p338, %p339
      %p342 = scmp.ne.s32.totalorder %s327, %s341
      %p343 = scmp.eq.s32.totalorder %s39, 0
      %p344 = por %p342, %p343
      %s346 = sadd.s32 %s345, 1
      %p349 = scmp.eq.s32.totalorder %s33, 1
      %p350 = scmp.ne.s32.totalorder %s345, %s347
      %p351 = scmp.eq.s32.totalorder %s33, 0
      %p352 = por %p350, %p351
      %p353 = scmp.ne.s32.totalorder %s345, %s347
      %p354 = scmp.eq.s32.totalorder %s38, 1
      %p355 = por %p353, %p354
      %p356 = scmp.ne.s32.totalorder %s347, %s348
      %p357 = scmp.eq.s32.totalorder %s38, 0
      %p358 = por %p356, %p357
      %p359 = scmp.ne.s32.totalorder %s347, %s348
      %p360 = scmp.eq.s32.totalorder %s39, 1
      %p361 = por %p359, %p360
      %p363 = scmp.ne.s32.totalorder %s348, %s362
      %p364 = scmp.eq.s32.totalorder %s39, 0
      %p365 = por %p363, %p364
      %s367 = sadd.s32 %s366, 1
      %p370 = scmp.eq.s32.totalorder %s33, 1
      %p371 = scmp.ne.s32.totalorder %s366, %s368
      %p372 = scmp.eq.s32.totalorder %s33, 0
      %p373 = por %p371, %p372
      %p374 = scmp.ne.s32.totalorder %s366, %s368
      %p375 = scmp.eq.s32.totalorder %s38, 1
      %p376 = por %p374, %p375
      %p377 = scmp.ne.s32.totalorder %s368, %s369
      %p378 = scmp.eq.s32.totalorder %s38, 0
      %p379 = por %p377, %p378
      %p380 = scmp.ne.s32.totalorder %s368, %s369
      %p381 = scmp.eq.s32.totalorder %s39, 1
      %p382 = por %p380, %p381
      %p384 = scmp.ne.s32.totalorder %s369, %s383
      %p385 = scmp.eq.s32.totalorder %s39, 0
      %p386 = por %p384, %p385
      %s387 = ssub.s32 %s33, %s40
      %p388 = scmp.eq.s32.totalorder %s387, 0
      %s390 = sadd.s32 %s389, 1
      %s391 = scalar_select %p388, %s389, %s390
      %p394 = pneg %p388
      %p395 = scmp.eq.s32.totalorder %s33, 1
      %p396 = por %p394, %p395
      %p397 = scmp.ne.s32.totalorder %s389, %s392
      %p398 = scmp.eq.s32.totalorder %s33, 0
      %p399 = por %p397, %p398
      %p400 = scmp.ne.s32.totalorder %s389, %s392
      %p401 = scmp.eq.s32.totalorder %s38, 1
      %p402 = por %p400, %p401
      %p403 = scmp.ne.s32.totalorder %s392, %s393
      %p404 = scmp.eq.s32.totalorder %s38, 0
      %p405 = por %p403, %p404
      %p406 = scmp.ne.s32.totalorder %s392, %s393
      %p407 = scmp.eq.s32.totalorder %s39, 1
      %p408 = por %p406, %p407
      %p410 = scmp.ne.s32.totalorder %s393, %s409
      %p411 = scmp.eq.s32.totalorder %s39, 0
      %p412 = por %p410, %p411
      %p413 = scmp.le.s32.totalorder 1, %s33
      %p414 = scmp.lt.s32.totalorder %s33, 3
      %p415 = pnand %p413, %p414
      %p416 = pneg %p415
      // Predicated region
      $region9: #{tpu_custom_call.1} parent=5 // pred_check
        _
      $region10: #{tpu_custom_call.1} parent=5 // pred_check_branch
        %418 = sbr.rel (%p415) target = $region12
      $region11: #{tpu_custom_call.1} parent=5 // pred_region
        %s419 = ssub.s32 %s33, 1
        // Predicated region
        $region13: #{tpu_custom_call.1} parent=11 // pred_check
          %p420 = pneg %p106
        $region14: #{tpu_custom_call.1} parent=11 // pred_check_branch
          %422 = sbr.rel (%p420) target = $region16
        $region15: #{tpu_custom_call.1} parent=11 // pred_region
          %s424 = ssub.s32 256, 256
          %425 = vsyncadd [#allocation6], %s424
          %s426 = sshll.u32 [#allocation7], 4
          %s427 = int_to_ptr.vmem [resolvable:$true] %s426
          %432 = dma.hbm_to_vmem [thread:$0]  %s2, 256, %s427, [#allocation6], 64, 64, 4
        $region16: #{tpu_custom_call.1} parent=11 // pred_fallthru
          _
        // Predicated region
        $region17: #{tpu_custom_call.1} parent=11 // pred_check
          %p433 = pneg %p127
        $region18: #{tpu_custom_call.1} parent=11 // pred_check_branch
          %435 = sbr.rel (%p433) target = $region20
        $region19: #{tpu_custom_call.1} parent=11 // pred_region
          _
        $region20: #{tpu_custom_call.1} parent=11 // pred_fallthru
          _
        // Predicated region
        $region21: #{tpu_custom_call.1} parent=11 // pred_check
          %p436 = pneg %p148
        $region22: #{tpu_custom_call.1} parent=11 // pred_check_branch
          %438 = sbr.rel (%p436) target = $region24
        $region23: #{tpu_custom_call.1} parent=11 // pred_region
          %s440 = ssub.s32 256, 256
          %441 = vsyncadd [#allocation9], %s440
          %s442 = sshll.u32 [#allocation8], 4
          %s443 = int_to_ptr.vmem [resolvable:$true] %s442
          %448 = dma.hbm_to_vmem [thread:$0]  %s4, 256, %s443, [#allocation9], 64, 64, 4
        $region24: #{tpu_custom_call.1} parent=11 // pred_fallthru
          _
        // Predicated region
        $region25: #{tpu_custom_call.1} parent=11 // pred_check
          %p449 = pneg %p169
        $region26: #{tpu_custom_call.1} parent=11 // pred_check_branch
          %451 = sbr.rel (%p449) target = $region28
        $region27: #{tpu_custom_call.1} parent=11 // pred_region
          _
        $region28: #{tpu_custom_call.1} parent=11 // pred_fallthru
          _
        // Predicated region
        $region29: #{tpu_custom_call.1} parent=11 // pred_check
          %p452 = pneg %p190
        $region30: #{tpu_custom_call.1} parent=11 // pred_check_branch
          %454 = sbr.rel (%p452) target = $region32
        $region31: #{tpu_custom_call.1} parent=11 // pred_region
          _
        $region32: #{tpu_custom_call.1} parent=11 // pred_fallthru
          _
        // Predicated region
        $region33: #{tpu_custom_call.1} parent=11 // pred_check
          %p455 = pneg %p211
        $region34: #{tpu_custom_call.1} parent=11 // pred_check_branch
          %457 = sbr.rel (%p455) target = $region36
        $region35: #{tpu_custom_call.1} parent=11 // pred_region
          %s459 = ssub.s32 16, 16
          %460 = vsyncadd [#allocation9], %s459
          %s462 = sshll.u32 [#allocation10], 4
          %s463 = int_to_ptr.vmem [resolvable:$true] %s462
          %465 = dma.hbm_to_vmem [thread:$0]  %s7, 16, %s463, [#allocation9]
        $region36: #{tpu_custom_call.1} parent=11 // pred_fallthru
          _
        // Predicated region
        $region37: #{tpu_custom_call.1} parent=11 // pred_check
          %p466 = pneg %p232
        $region38: #{tpu_custom_call.1} parent=11 // pred_check_branch
          %468 = sbr.rel (%p466) target = $region40
        $region39: #{tpu_custom_call.1} parent=11 // pred_region
          %s470 = ssub.s32 256, 256
          %471 = vsyncadd [#allocation12], %s470
          %s472 = sshll.u32 [#allocation11], 4
          %s473 = int_to_ptr.vmem [resolvable:$true] %s472
          %478 = dma.hbm_to_vmem [thread:$0]  %s8, 256, %s473, [#allocation12], 64, 64, 4
        $region40: #{tpu_custom_call.1} parent=11 // pred_fallthru
          _
        // Predicated region
        $region41: #{tpu_custom_call.1} parent=11 // pred_check
          %p479 = pneg %p253
        $region42: #{tpu_custom_call.1} parent=11 // pred_check_branch
          %481 = sbr.rel (%p479) target = $region44
        $region43: #{tpu_custom_call.1} parent=11 // pred_region
          %s483 = ssub.s32 16, 16
          %484 = vsyncadd [#allocation12], %s483
          %s486 = sshll.u32 [#allocation13], 4
          %s487 = int_to_ptr.vmem [resolvable:$true] %s486
          %489 = dma.hbm_to_vmem [thread:$0]  %s9, 16, %s487, [#allocation12]
        $region44: #{tpu_custom_call.1} parent=11 // pred_fallthru
          _
        // Predicated region
        $region45: #{tpu_custom_call.1} parent=11 // pred_check
          %p490 = pneg %p274
        $region46: #{tpu_custom_call.1} parent=11 // pred_check_branch
          %492 = sbr.rel (%p490) target = $region48
        $region47: #{tpu_custom_call.1} parent=11 // pred_region
          _
        $region48: #{tpu_custom_call.1} parent=11 // pred_fallthru
          _
        // Predicated region
        $region49: #{tpu_custom_call.1} parent=11 // pred_check
          %p493 = pneg %p295
        $region50: #{tpu_custom_call.1} parent=11 // pred_check_branch
          %495 = sbr.rel (%p493) target = $region52
        $region51: #{tpu_custom_call.1} parent=11 // pred_region
          _
        $region52: #{tpu_custom_call.1} parent=11 // pred_fallthru
          _
        // Predicated region
        $region53: #{tpu_custom_call.1} parent=11 // pred_check
          %p496 = pneg %p316
        $region54: #{tpu_custom_call.1} parent=11 // pred_check_branch
          %498 = sbr.rel (%p496) target = $region56
        $region55: #{tpu_custom_call.1} parent=11 // pred_region
          _
        $region56: #{tpu_custom_call.1} parent=11 // pred_fallthru
          _
        // Predicated region
        $region57: #{tpu_custom_call.1} parent=11 // pred_check
          %p499 = pneg %p337
        $region58: #{tpu_custom_call.1} parent=11 // pred_check_branch
          %501 = sbr.rel (%p499) target = $region60
        $region59: #{tpu_custom_call.1} parent=11 // pred_region
          _
        $region60: #{tpu_custom_call.1} parent=11 // pred_fallthru
          _
        // Predicated region
        $region61: #{tpu_custom_call.1} parent=11 // pred_check
          %p502 = pneg %p358
        $region62: #{tpu_custom_call.1} parent=11 // pred_check_branch
          %504 = sbr.rel (%p502) target = $region64
        $region63: #{tpu_custom_call.1} parent=11 // pred_region
          _
        $region64: #{tpu_custom_call.1} parent=11 // pred_fallthru
          _
        // Predicated region
        $region65: #{tpu_custom_call.1} parent=11 // pred_check
          %p505 = pneg %p379
        $region66: #{tpu_custom_call.1} parent=11 // pred_check_branch
          %507 = sbr.rel (%p505) target = $region68
        $region67: #{tpu_custom_call.1} parent=11 // pred_region
          _
        $region68: #{tpu_custom_call.1} parent=11 // pred_fallthru
          _
      $region12: #{tpu_custom_call.1} parent=5 // pred_fallthru
        _
      %p508 = scmp.lt.s32.totalorder %s33, 2
      // Predicated region
      $region69: #{tpu_custom_call.1} parent=5 // pred_check
        %p509 = pneg %p508
      $region70: #{tpu_custom_call.1} parent=5 // pred_check_branch
        %511 = sbr.rel (%p509) target = $region72
      $region71: #{tpu_custom_call.1} parent=5 // pred_region
        // Predicated region
        $region73: #{tpu_custom_call.1} parent=71 // pred_check
          %p512 = pneg %p53
        $region74: #{tpu_custom_call.1} parent=71 // pred_check_branch
          %514 = sbr.rel (%p512) target = $region76
        $region75: #{tpu_custom_call.1} parent=71 // pred_region
          %s515 = sand.u32 %s43, 1
          %s516 = scalar_lea.sflag [#allocation3], %s515
          %s517 = sand.u32 %s43, 1
          %s518 = smul.addr %s517, 16
          %s519 = scalar_lea.vmem [#allocation2], %s518
          %s520 = smul.u32 2, %s33
          %s522 = ssub.s32 256, 256
          %523 = vsyncadd %s516, %s522
          %s524 = smul.addr %s520, 128
          %s525 = scalar_lea.hbm %s0, %s524
          %s526 = sshll.u32 %s519, 4
          %s527 = int_to_ptr.vmem [resolvable:$true] %s526
          %532 = dma.hbm_to_vmem [thread:$0]  %s525, 256, %s527, %s516, 128, 128, 8
        $region76: #{tpu_custom_call.1} parent=71 // pred_fallthru
          _
        // Predicated region
        $region77: #{tpu_custom_call.1} parent=71 // pred_check
          %p533 = pneg %p79
        $region78: #{tpu_custom_call.1} parent=71 // pred_check_branch
          %535 = sbr.rel (%p533) target = $region80
        $region79: #{tpu_custom_call.1} parent=71 // pred_region
          %s536 = sand.u32 %s33, 1
          %s537 = scalar_lea.sflag [#allocation6], %s536
          %s538 = sand.u32 %s69, 1
          %s539 = smul.addr %s538, 2
          %s540 = scalar_lea.vmem [#allocation5], %s539
          %s541 = smul.u32 2, %s33
          %s543 = ssub.s32 32, 32
          %544 = vsyncadd %s537, %s543
          %s545 = smul.addr %s541, 16
          %s546 = scalar_lea.hbm %s1, %s545
          %s547 = sshll.u32 %s540, 4
          %s548 = int_to_ptr.vmem [resolvable:$true] %s547
          %553 = dma.hbm_to_vmem [thread:$0]  %s546, 32, %s548, %s537, 16, 16, 1
        $region80: #{tpu_custom_call.1} parent=71 // pred_fallthru
          _
      $region72: #{tpu_custom_call.1} parent=5 // pred_fallthru
        _
      %p554 = scmp.le.s32.totalorder 1, %s33
      %p555 = scmp.lt.s32.totalorder %s33, 3
      %p556 = pnand %p554, %p555
      %p557 = pneg %p556
      // Predicated region
      $region81: #{tpu_custom_call.1} parent=5 // pred_check
        _
      $region82: #{tpu_custom_call.1} parent=5 // pred_check_branch
        %559 = sbr.rel (%p556) target = $region84
      $region83: #{tpu_custom_call.1} parent=5 // pred_region
        %s560 = ssub.s32 %s33, 1
        %s561 = sand.u32 %s46, 1
        %s562 = scalar_lea.sflag [#allocation3], %s561
        %s563 = sand.u32 %s46, 1
        %s564 = smul.addr %s563, 16
        %s565 = scalar_lea.vmem [#allocation2], %s564
        // Predicated region
        $region85: #{tpu_custom_call.1} parent=83 // pred_check
          %p566 = pneg %p59
        $region86: #{tpu_custom_call.1} parent=83 // pred_check_branch
          %568 = sbr.rel (%p566) target = $region88
        $region87: #{tpu_custom_call.1} parent=83 // pred_region
          %569 = dma.done %s562, 256
        $region88: #{tpu_custom_call.1} parent=83 // pred_fallthru
          _
        %s570 = sand.u32 %s38, 1
        %s571 = scalar_lea.sflag [#allocation6], %s570
        %s572 = sand.u32 %s72, 1
        %s573 = smul.addr %s572, 2
        %s574 = scalar_lea.vmem [#allocation5], %s573
        // Predicated region
        $region89: #{tpu_custom_call.1} parent=83 // pred_check
          %p575 = pneg %p85
        $region90: #{tpu_custom_call.1} parent=83 // pred_check_branch
          %577 = sbr.rel (%p575) target = $region92
        $region91: #{tpu_custom_call.1} parent=83 // pred_region
          %578 = dma.done %s571, 32
        $region92: #{tpu_custom_call.1} parent=83 // pred_fallthru
          _
        // Predicated region
        $region93: #{tpu_custom_call.1} parent=83 // pred_check
          %p579 = pneg %p106
        $region94: #{tpu_custom_call.1} parent=83 // pred_check_branch
          %581 = sbr.rel (%p579) target = $region96
        $region95: #{tpu_custom_call.1} parent=83 // pred_region
          %582 = dma.done [#allocation6], 256
        $region96: #{tpu_custom_call.1} parent=83 // pred_fallthru
          _
        // Predicated region
        $region97: #{tpu_custom_call.1} parent=83 // pred_check
          %p583 = pneg %p148
        $region98: #{tpu_custom_call.1} parent=83 // pred_check_branch
          %585 = sbr.rel (%p583) target = $region100
        $region99: #{tpu_custom_call.1} parent=83 // pred_region
          %586 = dma.done [#allocation9], 256
        $region100: #{tpu_custom_call.1} parent=83 // pred_fallthru
          _
        // Predicated region
        $region101: #{tpu_custom_call.1} parent=83 // pred_check
          %p587 = pneg %p211
        $region102: #{tpu_custom_call.1} parent=83 // pred_check_branch
          %589 = sbr.rel (%p587) target = $region104
        $region103: #{tpu_custom_call.1} parent=83 // pred_region
          %590 = dma.done [#allocation9], 16
        $region104: #{tpu_custom_call.1} parent=83 // pred_fallthru
          _
        // Predicated region
        $region105: #{tpu_custom_call.1} parent=83 // pred_check
          %p591 = pneg %p232
        $region106: #{tpu_custom_call.1} parent=83 // pred_check_branch
          %593 = sbr.rel (%p591) target = $region108
        $region107: #{tpu_custom_call.1} parent=83 // pred_region
          %594 = dma.done [#allocation12], 256
        $region108: #{tpu_custom_call.1} parent=83 // pred_fallthru
          _
        // Predicated region
        $region109: #{tpu_custom_call.1} parent=83 // pred_check
          %p595 = pneg %p253
        $region110: #{tpu_custom_call.1} parent=83 // pred_check_branch
          %597 = sbr.rel (%p595) target = $region112
        $region111: #{tpu_custom_call.1} parent=83 // pred_region
          %598 = dma.done [#allocation12], 16
        $region112: #{tpu_custom_call.1} parent=83 // pred_fallthru
          _
        %s599 = sand.u32 %s46, 1
        %s600 = scalar_lea.sflag [#allocation3], %s599
        %s601 = sand.u32 %s46, 1
        %s602 = smul.addr %s601, 16
        %s603 = scalar_lea.vmem [#allocation2], %s602
        %p604 = pneg %p59
        %p605 = pneg %p56
        %s606 = sand.u32 %s38, 1
        %s607 = scalar_lea.sflag [#allocation6], %s606
        %s608 = sand.u32 %s72, 1
        %s609 = smul.addr %s608, 2
        %s610 = scalar_lea.vmem [#allocation5], %s609
        %p611 = pneg %p85
        %p612 = pneg %p82
        %p613 = pneg %p106
        %p614 = pneg %p103
        %p615 = pneg %p127
        %p616 = pneg %p124
        %p617 = pneg %p148
        %p618 = pneg %p145
        %p619 = pneg %p169
        %p620 = pneg %p166
        %p621 = pneg %p190
        %p622 = pneg %p187
        %p623 = pneg %p211
        %p624 = pneg %p208
        %p625 = pneg %p232
        %p626 = pneg %p229
        %p627 = pneg %p253
        %p628 = pneg %p250
        %p629 = pneg %p274
        %p630 = pneg %p271
        %p631 = pneg %p295
        %p632 = pneg %p292
        %p633 = pneg %p316
        %p634 = pneg %p313
        %p635 = pneg %p337
        %p636 = pneg %p334
        %p637 = pneg %p358
        %p638 = pneg %p355
        %p639 = pneg %p379
        %p640 = pneg %p376
        %p641 = pneg %p405
        %p642 = pneg %p402
        %s643 = sand.u32 %s392, 1
        %s644 = scalar_lea.sflag [#allocation4], %s643
        %s645 = sand.u32 %s392, 1
        %s646 = smul.addr %s645, 16
        %s647 = scalar_lea.vmem [#allocation14], %s646
        %s648 = smul.u32 2, %s38
        %s649 = smul.u32 2, %s38
        %s650 = smul.u32 2, %s38
        %v652 = vld [vmem:[%s565] sm:$0xff]
        %v653 = vld [vmem:[%s565 + $0x8] sm:$0xff]
        %v654 = vpack.c.bf16 %v653, %v652
        %v655 = vld [vmem:[#allocation7] sm:$0xf]
        %v656 = vld [vmem:[#allocation7 + $0x4] sm:$0xf]
        %v657 = vld [vmem:[#allocation7 + $0x8] sm:$0xf]
        %v658 = vld [vmem:[#allocation7 + $0xc] sm:$0xf]
        %v659 = vld [vmem:[%s3] sm:$0x1]
        %v661 = vlaneseq
        %v662 = vshrl.u32 %v661, 7
        %v663 = vsub.s32 0, %v662
        %v664 = vrot.slane %v659, %v663
        %v670 = vunpack.c.l.b16 %v655
        %v671 = vunpack.c.l.b16 %v656
        %v672 = vunpack.c.l.b16 %v657
        %v673 = vunpack.c.l.b16 %v658
        %v674 = vpack.c.b16 %v671, %v670
        %v675 = vpack.c.b16 %v673, %v672
        %vm678 = vcmask 261120
        %v680 = vsel %vm678, %v654, 0
        %682 = vmatprep.subr.bf16.mxu0 0
        %683 = vmatpush1.bf16.msra.mxu0 %v674
        %684 = vmatprep.subr.bf16.mxu0 0
        %685 = vmatpush1.bf16.msra.mxu0 %v675
        %686 = vmatprep.subr.bf16.mxu0 0
        %687 = vmatpush1.bf16.msra.mxu0 0
        %688 = vmatprep.subr.bf16.mxu0 0
        %689 = vmatpush1.bf16.msra.mxu0 0
        %690 = vmatprep.subr.bf16.mxu0 0
        %691 = vmatpush1.bf16.msra.mxu0 0
        %692 = vmatprep.subr.bf16.mxu0 0
        %693 = vmatpush1.bf16.msra.mxu0 0
        %694 = vmatprep.subr.bf16.mxu0 0
        %695 = vmatpush1.bf16.msra.mxu0 0
        %696 = vmatprep.subr.bf16.mxu0 0
        %697 = vmatpush1.bf16.msra.mxu0 0
        %698 = vmatprep.subr.bf16.mxu0 0
        %699 = vmatpush1.bf16.msra.mxu0 0
        %700 = vmatprep.subr.bf16.mxu0 0
        %701 = vmatpush1.bf16.msra.mxu0 0
        %702 = vmatprep.subr.bf16.mxu0 0
        %703 = vmatpush1.bf16.msra.mxu0 0
        %704 = vmatprep.subr.bf16.mxu0 0
        %705 = vmatpush1.bf16.msra.mxu0 0
        %706 = vmatprep.subr.bf16.mxu0 0
        %707 = vmatpush1.bf16.msra.mxu0 0
        %708 = vmatprep.subr.bf16.mxu0 0
        %709 = vmatpush1.bf16.msra.mxu0 0
        %710 = vmatprep.subr.bf16.mxu0 0
        %711 = vmatpush1.bf16.msra.mxu0 0
        %712 = vmatprep.subr.bf16.mxu0 0
        %713 = vmatpush1.bf16.msra.mxu0 0
        %714 = vmatprep.mubr.bf16.mxu0 0
        %715 = vmatmul.mubr.bf16.gmra.mrb[0].mxu0 %v680
        %v716 = vpop.f32.mrb[0].mxu0
        %v717 = vadd.f32 %v664, %v716
        %v718 = vpop.f32.mrb[0].mxu0
        %v719 = vpop.f32.mrb[0].mxu0
        %v720 = vadd.f32 %v664, %v719
        %v721 = vpop.f32.mrb[0].mxu0
        %722 = vdwg.mxu0
        %v723 = vld [vmem:[#allocation8] sm:$0xf]
        %v724 = vld [vmem:[#allocation8 + $0x4] sm:$0xf]
        %v725 = vld [vmem:[#allocation8 + $0x8] sm:$0xf]
        %v726 = vld [vmem:[#allocation8 + $0xc] sm:$0xf]
        %v727 = vld [vmem:[%s5] sm:$0x1]
        %v729 = vlaneseq
        %v730 = vshrl.u32 %v729, 7
        %v731 = vsub.s32 0, %v730
        %v732 = vrot.slane %v727, %v731
        %v738 = vunpack.c.l.b16 %v723
        %v739 = vunpack.c.l.b16 %v724
        %v740 = vunpack.c.l.b16 %v725
        %v741 = vunpack.c.l.b16 %v726
        %v742 = vpack.c.b16 %v739, %v738
        %v743 = vpack.c.b16 %v741, %v740
        %746 = vmatprep.subr.bf16.mxu0 0
        %747 = vmatpush1.bf16.msra.mxu0 %v742
        %748 = vmatprep.subr.bf16.mxu0 0
        %749 = vmatpush1.bf16.msra.mxu0 %v743
        %750 = vmatprep.subr.bf16.mxu0 0
        %751 = vmatpush1.bf16.msra.mxu0 0
        %752 = vmatprep.subr.bf16.mxu0 0
        %753 = vmatpush1.bf16.msra.mxu0 0
        %754 = vmatprep.subr.bf16.mxu0 0
        %755 = vmatpush1.bf16.msra.mxu0 0
        %756 = vmatprep.subr.bf16.mxu0 0
        %757 = vmatpush1.bf16.msra.mxu0 0
        %758 = vmatprep.subr.bf16.mxu0 0
        %759 = vmatpush1.bf16.msra.mxu0 0
        %760 = vmatprep.subr.bf16.mxu0 0
        %761 = vmatpush1.bf16.msra.mxu0 0
        %762 = vmatprep.subr.bf16.mxu0 0
        %763 = vmatpush1.bf16.msra.mxu0 0
        %764 = vmatprep.subr.bf16.mxu0 0
        %765 = vmatpush1.bf16.msra.mxu0 0
        %766 = vmatprep.subr.bf16.mxu0 0
        %767 = vmatpush1.bf16.msra.mxu0 0
        %768 = vmatprep.subr.bf16.mxu0 0
        %769 = vmatpush1.bf16.msra.mxu0 0
        %770 = vmatprep.subr.bf16.mxu0 0
        %771 = vmatpush1.bf16.msra.mxu0 0
        %772 = vmatprep.subr.bf16.mxu0 0
        %773 = vmatpush1.bf16.msra.mxu0 0
        %774 = vmatprep.subr.bf16.mxu0 0
        %775 = vmatpush1.bf16.msra.mxu0 0
        %776 = vmatprep.subr.bf16.mxu0 0
        %777 = vmatpush1.bf16.msra.mxu0 0
        %778 = vmatprep.mubr.bf16.mxu0 0
        %779 = vmatmul.mubr.bf16.gmra.mrb[0].mxu0 %v680
        %v780 = vpop.f32.mrb[0].mxu0
        %v781 = vadd.f32 %v732, %v780
        %v782 = vpop.f32.mrb[0].mxu0
        %v783 = vpop.f32.mrb[0].mxu0
        %v784 = vadd.f32 %v732, %v783
        %v785 = vpop.f32.mrb[0].mxu0
        %786 = vdwg.mxu0
        %v787 = vld [vmem:[%s6] sm:$0xf]
        %v788 = vld [vmem:[%s6 + $0x4] sm:$0xf]
        %v789 = vld [vmem:[%s6 + $0x8] sm:$0xf]
        %v790 = vld [vmem:[%s6 + $0xc] sm:$0xf]
        %v791 = vld [vmem:[#allocation10] sm:$0x1]
        %v793 = vlaneseq
        %v794 = vshrl.u32 %v793, 7
        %v795 = vsub.s32 0, %v794
        %v796 = vrot.slane %v791, %v795
        %v802 = vunpack.c.l.b16 %v787
        %v803 = vunpack.c.l.b16 %v788
        %v804 = vunpack.c.l.b16 %v789
        %v805 = vunpack.c.l.b16 %v790
        %v806 = vpack.c.b16 %v803, %v802
        %v807 = vpack.c.b16 %v805, %v804
        %810 = vmatprep.subr.bf16.mxu0 0
        %811 = vmatpush1.bf16.msra.mxu0 %v806
        %812 = vmatprep.subr.bf16.mxu0 0
        %813 = vmatpush1.bf16.msra.mxu0 %v807
        %814 = vmatprep.subr.bf16.mxu0 0
        %815 = vmatpush1.bf16.msra.mxu0 0
        %816 = vmatprep.subr.bf16.mxu0 0
        %817 = vmatpush1.bf16.msra.mxu0 0
        %818 = vmatprep.subr.bf16.mxu0 0
        %819 = vmatpush1.bf16.msra.mxu0 0
        %820 = vmatprep.subr.bf16.mxu0 0
        %821 = vmatpush1.bf16.msra.mxu0 0
        %822 = vmatprep.subr.bf16.mxu0 0
        %823 = vmatpush1.bf16.msra.mxu0 0
        %824 = vmatprep.subr.bf16.mxu0 0
        %825 = vmatpush1.bf16.msra.mxu0 0
        %826 = vmatprep.subr.bf16.mxu0 0
        %827 = vmatpush1.bf16.msra.mxu0 0
        %828 = vmatprep.subr.bf16.mxu0 0
        %829 = vmatpush1.bf16.msra.mxu0 0
        %830 = vmatprep.subr.bf16.mxu0 0
        %831 = vmatpush1.bf16.msra.mxu0 0
        %832 = vmatprep.subr.bf16.mxu0 0
        %833 = vmatpush1.bf16.msra.mxu0 0
        %834 = vmatprep.subr.bf16.mxu0 0
        %835 = vmatpush1.bf16.msra.mxu0 0
        %836 = vmatprep.subr.bf16.mxu0 0
        %837 = vmatpush1.bf16.msra.mxu0 0
        %838 = vmatprep.subr.bf16.mxu0 0
        %839 = vmatpush1.bf16.msra.mxu0 0
        %840 = vmatprep.subr.bf16.mxu0 0
        %841 = vmatpush1.bf16.msra.mxu0 0
        %842 = vmatprep.mubr.bf16.mxu0 0
        %843 = vmatmul.mubr.bf16.gmra.mrb[0].mxu0 %v680
        %v844 = vpop.f32.mrb[0].mxu0
        %v845 = vadd.f32 %v796, %v844
        %v846 = vpop.f32.mrb[0].mxu0
        %v847 = vpop.f32.mrb[0].mxu0
        %v848 = vadd.f32 %v796, %v847
        %v849 = vpop.f32.mrb[0].mxu0
        %850 = vdwg.mxu0
        %v851 = vpack.c.bf16 %v720, %v717
        %v853 = vunpack.c.l.b16 %v851
        %v854 = vunpack.c.h.b16 %v851
        %v855 = vpack.c.b16 %v853, %v853
        %v856 = vpack.c.b16 %v854, %v854
        %857 = vrot.lane.b32.xlu0 %v855, 120
        %v858 = vpop.permute.xlu0 %857
        %859 = vrot.lane.b32.xlu0 %v856, 120
        %v860 = vpop.permute.xlu0 %859
        %861 = vrot.lane.b32.xlu0 %v855, 112
        %v862 = vpop.permute.xlu0 %861
        %863 = vrot.lane.b32.xlu0 %v856, 112
        %v864 = vpop.permute.xlu0 %863
        %865 = vrot.lane.b32.xlu0 %v855, 104
        %v866 = vpop.permute.xlu0 %865
        %867 = vrot.lane.b32.xlu0 %v856, 104
        %v868 = vpop.permute.xlu0 %867
        %v869 = vpack.c.bf16 %v784, %v781
        %v871 = vunpack.c.l.b16 %v869
        %v872 = vunpack.c.h.b16 %v869
        %v873 = vpack.c.b16 %v871, %v871
        %v874 = vpack.c.b16 %v872, %v872
        %875 = vrot.lane.b32.xlu0 %v873, 120
        %v876 = vpop.permute.xlu0 %875
        %877 = vrot.lane.b32.xlu0 %v874, 120
        %v878 = vpop.permute.xlu0 %877
        %879 = vrot.lane.b32.xlu0 %v873, 112
        %v880 = vpop.permute.xlu0 %879
        %881 = vrot.lane.b32.xlu0 %v874, 112
        %v882 = vpop.permute.xlu0 %881
        %883 = vrot.lane.b32.xlu0 %v873, 104
        %v884 = vpop.permute.xlu0 %883
        %885 = vrot.lane.b32.xlu0 %v874, 104
        %v886 = vpop.permute.xlu0 %885
        %v887 = vpack.c.bf16 %v848, %v845
        %v889 = vunpack.c.l.b16 %v887
        %v890 = vunpack.c.h.b16 %v887
        %v891 = vpack.c.b16 %v889, %v889
        %v892 = vpack.c.b16 %v890, %v890
        %893 = vrot.lane.b32.xlu0 %v891, 120
        %v894 = vpop.permute.xlu0 %893
        %895 = vrot.lane.b32.xlu0 %v892, 120
        %v896 = vpop.permute.xlu0 %895
        %897 = vrot.lane.b32.xlu0 %v891, 112
        %v898 = vpop.permute.xlu0 %897
        %899 = vrot.lane.b32.xlu0 %v892, 112
        %v900 = vpop.permute.xlu0 %899
        %901 = vrot.lane.b32.xlu0 %v891, 104
        %v902 = vpop.permute.xlu0 %901
        %903 = vrot.lane.b32.xlu0 %v892, 104
        %v904 = vpop.permute.xlu0 %903
        %v905 = vld [vmem:[%s574] sm:$0x1]
        %v906 = vld [vmem:[%s574 + $0x1] sm:$0x1]
        %vm907 = vcmp.gt.f32.partialorder %v905, 0.0
        %vm908 = vcmp.gt.f32.partialorder %v906, 0.0
        %vm909 = vcmask 64512
        %v911 = vsel %vm909, %v855, 0
        %v914 = vsel %vm909, %v873, 0
        %916 = vmatprep.subr.bf16.mxu0 0
        %917 = vmatpush1.bf16.xpose.msra.mxu0 %v914
        %918 = vmatprep.subr.bf16.mxu0 0
        %919 = vmatpush1.bf16.xpose.msra.mxu0 0
        %920 = vmatprep.subr.bf16.mxu0 0
        %921 = vmatpush1.bf16.xpose.msra.mxu0 0
        %922 = vmatprep.subr.bf16.mxu0 0
        %923 = vmatpush1.bf16.xpose.msra.mxu0 0
        %924 = vmatprep.subr.bf16.mxu0 0
        %925 = vmatpush1.bf16.xpose.msra.mxu0 0
        %926 = vmatprep.subr.bf16.mxu0 0
        %927 = vmatpush1.bf16.xpose.msra.mxu0 0
        %928 = vmatprep.subr.bf16.mxu0 0
        %929 = vmatpush1.bf16.xpose.msra.mxu0 0
        %930 = vmatprep.subr.bf16.mxu0 0
        %931 = vmatpush1.bf16.xpose.msra.mxu0 0
        %932 = vmatprep.subr.bf16.mxu0 0
        %933 = vmatpush1.bf16.xpose.msra.mxu0 0
        %934 = vmatprep.subr.bf16.mxu0 0
        %935 = vmatpush1.bf16.xpose.msra.mxu0 0
        %936 = vmatprep.subr.bf16.mxu0 0
        %937 = vmatpush1.bf16.xpose.msra.mxu0 0
        %938 = vmatprep.subr.bf16.mxu0 0
        %939 = vmatpush1.bf16.xpose.msra.mxu0 0
        %940 = vmatprep.subr.bf16.mxu0 0
        %941 = vmatpush1.bf16.xpose.msra.mxu0 0
        %942 = vmatprep.subr.bf16.mxu0 0
        %943 = vmatpush1.bf16.xpose.msra.mxu0 0
        %944 = vmatprep.subr.bf16.mxu0 0
        %945 = vmatpush1.bf16.xpose.msra.mxu0 0
        %946 = vmatprep.subr.bf16.mxu0 0
        %947 = vmatpush1.bf16.xpose.msra.mxu0 0
        %948 = vmatprep.mubr.bf16.mxu0 0
        %949 = vmatmul.mubr.bf16.gmra.mrb[0].mxu0 %v911
        %v950 = vpop.f32.mrb[0].mxu0
        %v951 = vadd.f32 0.0, %v950
        %v952 = vpop.f32.mrb[0].mxu0
        %v953 = vpop.f32.mrb[0].mxu0
        %v954 = vpop.f32.mrb[0].mxu0
        %955 = vdwg.mxu0
        %v957 = vsel %vm909, %v856, 0
        %v960 = vsel %vm909, %v874, 0
        %962 = vmatprep.subr.bf16.mxu0 0
        %963 = vmatpush1.bf16.xpose.msra.mxu0 %v960
        %964 = vmatprep.subr.bf16.mxu0 0
        %965 = vmatpush1.bf16.xpose.msra.mxu0 0
        %966 = vmatprep.subr.bf16.mxu0 0
        %967 = vmatpush1.bf16.xpose.msra.mxu0 0
        %968 = vmatprep.subr.bf16.mxu0 0
        %969 = vmatpush1.bf16.xpose.msra.mxu0 0
        %970 = vmatprep.subr.bf16.mxu0 0
        %971 = vmatpush1.bf16.xpose.msra.mxu0 0
        %972 = vmatprep.subr.bf16.mxu0 0
        %973 = vmatpush1.bf16.xpose.msra.mxu0 0
        %974 = vmatprep.subr.bf16.mxu0 0
        %975 = vmatpush1.bf16.xpose.msra.mxu0 0
        %976 = vmatprep.subr.bf16.mxu0 0
        %977 = vmatpush1.bf16.xpose.msra.mxu0 0
        %978 = vmatprep.subr.bf16.mxu0 0
        %979 = vmatpush1.bf16.xpose.msra.mxu0 0
        %980 = vmatprep.subr.bf16.mxu0 0
        %981 = vmatpush1.bf16.xpose.msra.mxu0 0
        %982 = vmatprep.subr.bf16.mxu0 0
        %983 = vmatpush1.bf16.xpose.msra.mxu0 0
        %984 = vmatprep.subr.bf16.mxu0 0
        %985 = vmatpush1.bf16.xpose.msra.mxu0 0
        %986 = vmatprep.subr.bf16.mxu0 0
        %987 = vmatpush1.bf16.xpose.msra.mxu0 0
        %988 = vmatprep.subr.bf16.mxu0 0
        %989 = vmatpush1.bf16.xpose.msra.mxu0 0
        %990 = vmatprep.subr.bf16.mxu0 0
        %991 = vmatpush1.bf16.xpose.msra.mxu0 0
        %992 = vmatprep.subr.bf16.mxu0 0
        %993 = vmatpush1.bf16.xpose.msra.mxu0 0
        %994 = vmatprep.mubr.bf16.mxu0 0
        %995 = vmatmul.mubr.bf16.gmra.mrb[0].mxu0 %v957
        %v996 = vpop.f32.mrb[0].mxu0
        %v997 = vadd.f32 0.0, %v996
        %v998 = vpop.f32.mrb[0].mxu0
        %v999 = vpop.f32.mrb[0].mxu0
        %v1000 = vpop.f32.mrb[0].mxu0
        %1001 = vdwg.mxu0
        %v1003 = vsel %vm909, %v858, 0
        %v1006 = vsel %vm909, %v876, 0
        %1008 = vmatprep.subr.bf16.mxu0 0
        %1009 = vmatpush1.bf16.xpose.msra.mxu0 %v1006
        %1010 = vmatprep.subr.bf16.mxu0 0
        %1011 = vmatpush1.bf16.xpose.msra.mxu0 0
        %1012 = vmatprep.subr.bf16.mxu0 0
        %1013 = vmatpush1.bf16.xpose.msra.mxu0 0
        %1014 = vmatprep.subr.bf16.mxu0 0
        %1015 = vmatpush1.bf16.xpose.msra.mxu0 0
        %1016 = vmatprep.subr.bf16.mxu0 0
        %1017 = vmatpush1.bf16.xpose.msra.mxu0 0
        %1018 = vmatprep.subr.bf16.mxu0 0
        %1019 = vmatpush1.bf16.xpose.msra.mxu0 0
        %1020 = vmatprep.subr.bf16.mxu0 0
        %1021 = vmatpush1.bf16.xpose.msra.mxu0 0
        %1022 = vmatprep.subr.bf16.mxu0 0
        %1023 = vmatpush1.bf16.xpose.msra.mxu0 0
        %1024 = vmatprep.subr.bf16.mxu0 0
        %1025 = vmatpush1.bf16.xpose.msra.mxu0 0
        %1026 = vmatprep.subr.bf16.mxu0 0
        %1027 = vmatpush1.bf16.xpose.msra.mxu0 0
        %1028 = vmatprep.subr.bf16.mxu0 0
        %1029 = vmatpush1.bf16.xpose.msra.mxu0 0
        %1030 = vmatprep.subr.bf16.mxu0 0
        %1031 = vmatpush1.bf16.xpose.msra.mxu0 0
        %1032 = vmatprep.subr.bf16.mxu0 0
        %1033 = vmatpush1.bf16.xpose.msra.mxu0 0
        %1034 = vmatprep.subr.bf16.mxu0 0
        %1035 = vmatpush1.bf16.xpose.msra.mxu0 0
        %1036 = vmatprep.subr.bf16.mxu0 0
        %1037 = vmatpush1.bf16.xpose.msra.mxu0 0
        %1038 = vmatprep.subr.bf16.mxu0 0
        %1039 = vmatpush1.bf16.xpose.msra.mxu0 0
        %1040 = vmatprep.mubr.bf16.mxu0 0
        %1041 = vmatmul.mubr.bf16.gmra.mrb[0].mxu0 %v1003
        %v1042 = vpop.f32.mrb[0].mxu0
        %v1043 = vadd.f32 0.0, %v1042
        %v1044 = vpop.f32.mrb[0].mxu0
        %v1045 = vpop.f32.mrb[0].mxu0
        %v1046 = vpop.f32.mrb[0].mxu0
        %1047 = vdwg.mxu0
        %v1049 = vsel %vm909, %v860, 0
        %v1052 = vsel %vm909, %v878, 0
        %1054 = vmatprep.subr.bf16.mxu0 0
        %1055 = vmatpush1.bf16.xpose.msra.mxu0 %v1052
        %1056 = vmatprep.subr.bf16.mxu0 0
        %1057 = vmatpush1.bf16.xpose.msra.mxu0 0
        %1058 = vmatprep.subr.bf16.mxu0 0
        %1059 = vmatpush1.bf16.xpose.msra.mxu0 0
        %1060 = vmatprep.subr.bf16.mxu0 0
        %1061 = vmatpush1.bf16.xpose.msra.mxu0 0
        %1062 = vmatprep.subr.bf16.mxu0 0
        %1063 = vmatpush1.bf16.xpose.msra.mxu0 0
        %1064 = vmatprep.subr.bf16.mxu0 0
        %1065 = vmatpush1.bf16.xpose.msra.mxu0 0
        %1066 = vmatprep.subr.bf16.mxu0 0
        %1067 = vmatpush1.bf16.xpose.msra.mxu0 0
        %1068 = vmatprep.subr.bf16.mxu0 0
        %1069 = vmatpush1.bf16.xpose.msra.mxu0 0
        %1070 = vmatprep.subr.bf16.mxu0 0
        %1071 = vmatpush1.bf16.xpose.msra.mxu0 0
        %1072 = vmatprep.subr.bf16.mxu0 0
        %1073 = vmatpush1.bf16.xpose.msra.mxu0 0
        %1074 = vmatprep.subr.bf16.mxu0 0
        %1075 = vmatpush1.bf16.xpose.msra.mxu0 0
        %1076 = vmatprep.subr.bf16.mxu0 0
        %1077 = vmatpush1.bf16.xpose.msra.mxu0 0
        %1078 = vmatprep.subr.bf16.mxu0 0
        %1079 = vmatpush1.bf16.xpose.msra.mxu0 0
        %1080 = vmatprep.subr.bf16.mxu0 0
        %1081 = vmatpush1.bf16.xpose.msra.mxu0 0
        %1082 = vmatprep.subr.bf16.mxu0 0
        %1083 = vmatpush1.bf16.xpose.msra.mxu0 0
        %1084 = vmatprep.subr.bf16.mxu0 0
        %1085 = vmatpush1.bf16.xpose.msra.mxu0 0
        %1086 = vmatprep.mubr.bf16.mxu0 0
        %1087 = vmatmul.mubr.bf16.gmra.mrb[0].mxu0 %v1049
        %v1088 = vpop.f32.mrb[0].mxu0
        %v1089 = vadd.f32 0.0, %v1088
        %v1090 = vpop.f32.mrb[0].mxu0
        %v1091 = vpop.f32.mrb[0].mxu0
        %v1092 = vpop.f32.mrb[0].mxu0
        %1093 = vdwg.mxu0
        %v1095 = vsel %vm909, %v862, 0
        %v1098 = vsel %vm909, %v880, 0
        %1100 = vmatprep.subr.bf16.mxu0 0
        %1101 = vmatpush1.bf16.xpose.msra.mxu0 %v1098
        %1102 = vmatprep.subr.bf16.mxu0 0
        %1103 = vmatpush1.bf16.xpose.msra.mxu0 0
        %1104 = vmatprep.subr.bf16.mxu0 0
        %1105 = vmatpush1.bf16.xpose.msra.mxu0 0
        %1106 = vmatprep.subr.bf16.mxu0 0
        %1107 = vmatpush1.bf16.xpose.msra.mxu0 0
        %1108 = vmatprep.subr.bf16.mxu0 0
        %1109 = vmatpush1.bf16.xpose.msra.mxu0 0
        %1110 = vmatprep.subr.bf16.mxu0 0
        %1111 = vmatpush1.bf16.xpose.msra.mxu0 0
        %1112 = vmatprep.subr.bf16.mxu0 0
        %1113 = vmatpush1.bf16.xpose.msra.mxu0 0
        %1114 = vmatprep.subr.bf16.mxu0 0
        %1115 = vmatpush1.bf16.xpose.msra.mxu0 0
        %1116 = vmatprep.subr.bf16.mxu0 0
        %1117 = vmatpush1.bf16.xpose.msra.mxu0 0
        %1118 = vmatprep.subr.bf16.mxu0 0
        %1119 = vmatpush1.bf16.xpose.msra.mxu0 0
        %1120 = vmatprep.subr.bf16.mxu0 0
        %1121 = vmatpush1.bf16.xpose.msra.mxu0 0
        %1122 = vmatprep.subr.bf16.mxu0 0
        %1123 = vmatpush1.bf16.xpose.msra.mxu0 0
        %1124 = vmatprep.subr.bf16.mxu0 0
        %1125 = vmatpush1.bf16.xpose.msra.mxu0 0
        %1126 = vmatprep.subr.bf16.mxu0 0
        %1127 = vmatpush1.bf16.xpose.msra.mxu0 0
        %1128 = vmatprep.subr.bf16.mxu0 0
        %1129 = vmatpush1.bf16.xpose.msra.mxu0 0
        %1130 = vmatprep.subr.bf16.mxu0 0
        %1131 = vmatpush1.bf16.xpose.msra.mxu0 0
        %1132 = vmatprep.mubr.bf16.mxu0 0
        %1133 = vmatmul.mubr.bf16.gmra.mrb[0].mxu0 %v1095
        %v1134 = vpop.f32.mrb[0].mxu0
        %v1135 = vadd.f32 0.0, %v1134
        %v1136 = vpop.f32.mrb[0].mxu0
        %v1137 = vpop.f32.mrb[0].mxu0
        %v1138 = vpop.f32.mrb[0].mxu0
        %1139 = vdwg.mxu0
        %v1141 = vsel %vm909, %v864, 0
        %v1144 = vsel %vm909, %v882, 0
        %1146 = vmatprep.subr.bf16.mxu0 0
        %1147 = vmatpush1.bf16.xpose.msra.mxu0 %v1144
        %1148 = vmatprep.subr.bf16.mxu0 0
        %1149 = vmatpush1.bf16.xpose.msra.mxu0 0
        %1150 = vmatprep.subr.bf16.mxu0 0
        %1151 = vmatpush1.bf16.xpose.msra.mxu0 0
        %1152 = vmatprep.subr.bf16.mxu0 0
        %1153 = vmatpush1.bf16.xpose.msra.mxu0 0
        %1154 = vmatprep.subr.bf16.mxu0 0
        %1155 = vmatpush1.bf16.xpose.msra.mxu0 0
        %1156 = vmatprep.subr.bf16.mxu0 0
        %1157 = vmatpush1.bf16.xpose.msra.mxu0 0
        %1158 = vmatprep.subr.bf16.mxu0 0
        %1159 = vmatpush1.bf16.xpose.msra.mxu0 0
        %1160 = vmatprep.subr.bf16.mxu0 0
        %1161 = vmatpush1.bf16.xpose.msra.mxu0 0
        %1162 = vmatprep.subr.bf16.mxu0 0
        %1163 = vmatpush1.bf16.xpose.msra.mxu0 0
        %1164 = vmatprep.subr.bf16.mxu0 0
        %1165 = vmatpush1.bf16.xpose.msra.mxu0 0
        %1166 = vmatprep.subr.bf16.mxu0 0
        %1167 = vmatpush1.bf16.xpose.msra.mxu0 0
        %1168 = vmatprep.subr.bf16.mxu0 0
        %1169 = vmatpush1.bf16.xpose.msra.mxu0 0
        %1170 = vmatprep.subr.bf16.mxu0 0
        %1171 = vmatpush1.bf16.xpose.msra.mxu0 0
        %1172 = vmatprep.subr.bf16.mxu0 0
        %1173 = vmatpush1.bf16.xpose.msra.mxu0 0
        %1174 = vmatprep.subr.bf16.mxu0 0
        %1175 = vmatpush1.bf16.xpose.msra.mxu0 0
        %1176 = vmatprep.subr.bf16.mxu0 0
        %1177 = vmatpush1.bf16.xpose.msra.mxu0 0
        %1178 = vmatprep.mubr.bf16.mxu0 0
        %1179 = vmatmul.mubr.bf16.gmra.mrb[0].mxu0 %v1141
        %v1180 = vpop.f32.mrb[0].mxu0
        %v1181 = vadd.f32 0.0, %v1180
        %v1182 = vpop.f32.mrb[0].mxu0
        %v1183 = vpop.f32.mrb[0].mxu0
        %v1184 = vpop.f32.mrb[0].mxu0
        %1185 = vdwg.mxu0
        %v1187 = vsel %vm909, %v866, 0
        %v1190 = vsel %vm909, %v884, 0
        %1192 = vmatprep.subr.bf16.mxu0 0
        %1193 = vmatpush1.bf16.xpose.msra.mxu0 %v1190
        %1194 = vmatprep.subr.bf16.mxu0 0
        %1195 = vmatpush1.bf16.xpose.msra.mxu0 0
        %1196 = vmatprep.subr.bf16.mxu0 0
        %1197 = vmatpush1.bf16.xpose.msra.mxu0 0
        %1198 = vmatprep.subr.bf16.mxu0 0
        %1199 = vmatpush1.bf16.xpose.msra.mxu0 0
        %1200 = vmatprep.subr.bf16.mxu0 0
        %1201 = vmatpush1.bf16.xpose.msra.mxu0 0
        %1202 = vmatprep.subr.bf16.mxu0 0
        %1203 = vmatpush1.bf16.xpose.msra.mxu0 0
        %1204 = vmatprep.subr.bf16.mxu0 0
        %1205 = vmatpush1.bf16.xpose.msra.mxu0 0
        %1206 = vmatprep.subr.bf16.mxu0 0
        %1207 = vmatpush1.bf16.xpose.msra.mxu0 0
        %1208 = vmatprep.subr.bf16.mxu0 0
        %1209 = vmatpush1.bf16.xpose.msra.mxu0 0
        %1210 = vmatprep.subr.bf16.mxu0 0
        %1211 = vmatpush1.bf16.xpose.msra.mxu0 0
        %1212 = vmatprep.subr.bf16.mxu0 0
        %1213 = vmatpush1.bf16.xpose.msra.mxu0 0
        %1214 = vmatprep.subr.bf16.mxu0 0
        %1215 = vmatpush1.bf16.xpose.msra.mxu0 0
        %1216 = vmatprep.subr.bf16.mxu0 0
        %1217 = vmatpush1.bf16.xpose.msra.mxu0 0
        %1218 = vmatprep.subr.bf16.mxu0 0
        %1219 = vmatpush1.bf16.xpose.msra.mxu0 0
        %1220 = vmatprep.subr.bf16.mxu0 0
        %1221 = vmatpush1.bf16.xpose.msra.mxu0 0
        %1222 = vmatprep.subr.bf16.mxu0 0
        %1223 = vmatpush1.bf16.xpose.msra.mxu0 0
        %1224 = vmatprep.mubr.bf16.mxu0 0
        %1225 = vmatmul.mubr.bf16.gmra.mrb[0].mxu0 %v1187
        %v1226 = vpop.f32.mrb[0].mxu0
        %v1227 = vadd.f32 0.0, %v1226
        %v1228 = vpop.f32.mrb[0].mxu0
        %v1229 = vpop.f32.mrb[0].mxu0
        %v1230 = vpop.f32.mrb[0].mxu0
        %1231 = vdwg.mxu0
        %v1233 = vsel %vm909, %v868, 0
        %v1236 = vsel %vm909, %v886, 0
        %1238 = vmatprep.subr.bf16.mxu0 0
        %1239 = vmatpush1.bf16.xpose.msra.mxu0 %v1236
        %1240 = vmatprep.subr.bf16.mxu0 0
        %1241 = vmatpush1.bf16.xpose.msra.mxu0 0
        %1242 = vmatprep.subr.bf16.mxu0 0
        %1243 = vmatpush1.bf16.xpose.msra.mxu0 0
        %1244 = vmatprep.subr.bf16.mxu0 0
        %1245 = vmatpush1.bf16.xpose.msra.mxu0 0
        %1246 = vmatprep.subr.bf16.mxu0 0
        %1247 = vmatpush1.bf16.xpose.msra.mxu0 0
        %1248 = vmatprep.subr.bf16.mxu0 0
        %1249 = vmatpush1.bf16.xpose.msra.mxu0 0
        %1250 = vmatprep.subr.bf16.mxu0 0
        %1251 = vmatpush1.bf16.xpose.msra.mxu0 0
        %1252 = vmatprep.subr.bf16.mxu0 0
        %1253 = vmatpush1.bf16.xpose.msra.mxu0 0
        %1254 = vmatprep.subr.bf16.mxu0 0
        %1255 = vmatpush1.bf16.xpose.msra.mxu0 0
        %1256 = vmatprep.subr.bf16.mxu0 0
        %1257 = vmatpush1.bf16.xpose.msra.mxu0 0
        %1258 = vmatprep.subr.bf16.mxu0 0
        %1259 = vmatpush1.bf16.xpose.msra.mxu0 0
        %1260 = vmatprep.subr.bf16.mxu0 0
        %1261 = vmatpush1.bf16.xpose.msra.mxu0 0
        %1262 = vmatprep.subr.bf16.mxu0 0
        %1263 = vmatpush1.bf16.xpose.msra.mxu0 0
        %1264 = vmatprep.subr.bf16.mxu0 0
        %1265 = vmatpush1.bf16.xpose.msra.mxu0 0
        %1266 = vmatprep.subr.bf16.mxu0 0
        %1267 = vmatpush1.bf16.xpose.msra.mxu0 0
        %1268 = vmatprep.subr.bf16.mxu0 0
        %1269 = vmatpush1.bf16.xpose.msra.mxu0 0
        %1270 = vmatprep.mubr.bf16.mxu0 0
        %1271 = vmatmul.mubr.bf16.gmra.mrb[0].mxu0 %v1233
        %v1272 = vpop.f32.mrb[0].mxu0
        %v1273 = vadd.f32 0.0, %v1272
        %v1274 = vpop.f32.mrb[0].mxu0
        %v1275 = vpop.f32.mrb[0].mxu0
        %v1276 = vpop.f32.mrb[0].mxu0
        %1277 = vdwg.mxu0
        %v1278 = vsel %vm907, 1, 0
        %v1279 = vsel %vm908, 1, 0
        %v1280 = vlaneseq
        %v1281 = vshrl.u32 %v1280, 7
        %v1282 = vsub.s32 0, %v1281
        %v1283 = vrot.slane %v1278, %v1282
        %v1284 = vlaneseq
        %v1285 = vshrl.u32 %v1284, 7
        %v1286 = vsub.s32 0, %v1285
        %v1287 = vrot.slane %v1279, %v1286
        %vm1288 = vcmp.eq.s32.totalorder %v1283, 1
        %vm1289 = vcmp.eq.s32.totalorder %v1287, 1
        %v1290 = vsel %vm1288, %v951, -1e+09
        %v1291 = vsel %vm1289, %v997, -1e+09
        %v1292 = vsel %vm1288, %v1043, -1e+09
        %v1293 = vsel %vm1289, %v1089, -1e+09
        %v1294 = vsel %vm1288, %v1135, -1e+09
        %v1295 = vsel %vm1289, %v1181, -1e+09
        %v1296 = vsel %vm1288, %v1227, -1e+09
        %v1297 = vsel %vm1289, %v1273, -1e+09
        %v1298 = vsel %vm909, %v1290, -inf
        %1299 = vmax.xlane.f32.xlu0 %v1298
        %v1300 = vpop.xlane.xlu0 %1299
        %v1301 = vsel %vm909, %v1291, -inf
        %1302 = vmax.xlane.f32.xlu0 %v1301
        %v1303 = vpop.xlane.xlu0 %1302
        %v1304 = vsel %vm909, %v1292, -inf
        %1305 = vmax.xlane.f32.xlu0 %v1304
        %v1306 = vpop.xlane.xlu0 %1305
        %v1307 = vsel %vm909, %v1293, -inf
        %1308 = vmax.xlane.f32.xlu0 %v1307
        %v1309 = vpop.xlane.xlu0 %1308
        %v1310 = vsel %vm909, %v1294, -inf
        %1311 = vmax.xlane.f32.xlu0 %v1310
        %v1312 = vpop.xlane.xlu0 %1311
        %v1313 = vsel %vm909, %v1295, -inf
        %1314 = vmax.xlane.f32.xlu0 %v1313
        %v1315 = vpop.xlane.xlu0 %1314
        %v1316 = vsel %vm909, %v1296, -inf
        %1317 = vmax.xlane.f32.xlu0 %v1316
        %v1318 = vpop.xlane.xlu0 %1317
        %v1319 = vsel %vm909, %v1297, -inf
        %1320 = vmax.xlane.f32.xlu0 %v1319
        %v1321 = vpop.xlane.xlu0 %1320
        %v1322 = vsub.f32 %v1290, %v1300
        %v1323 = vsub.f32 %v1291, %v1303
        %v1324 = vsub.f32 %v1292, %v1306
        %v1325 = vsub.f32 %v1293, %v1309
        %v1326 = vsub.f32 %v1294, %v1312
        %v1327 = vsub.f32 %v1295, %v1315
        %v1328 = vsub.f32 %v1296, %v1318
        %v1329 = vsub.f32 %v1297, %v1321
        %v1330 = vmul.f32 %v1322, 1.442695
        %v1331 = vpow.pop %v1330
        %v1332 = vmul.f32 %v1323, 1.442695
        %v1333 = vpow.pop %v1332
        %v1334 = vmul.f32 %v1324, 1.442695
        %v1335 = vpow.pop %v1334
        %v1336 = vmul.f32 %v1325, 1.442695
        %v1337 = vpow.pop %v1336
        %v1338 = vmul.f32 %v1326, 1.442695
        %v1339 = vpow.pop %v1338
        %v1340 = vmul.f32 %v1327, 1.442695
        %v1341 = vpow.pop %v1340
        %v1342 = vmul.f32 %v1328, 1.442695
        %v1343 = vpow.pop %v1342
        %v1344 = vmul.f32 %v1329, 1.442695
        %v1345 = vpow.pop %v1344
        %v1346 = vsel %vm909, %v1331, 0.0
        %1347 = vadd.xlane.f32.xlu0 %v1346
        %v1348 = vpop.xlane.xlu0 %1347
        %v1349 = vsel %vm909, %v1333, 0.0
        %1350 = vadd.xlane.f32.xlu0 %v1349
        %v1351 = vpop.xlane.xlu0 %1350
        %v1352 = vsel %vm909, %v1335, 0.0
        %1353 = vadd.xlane.f32.xlu0 %v1352
        %v1354 = vpop.xlane.xlu0 %1353
        %v1355 = vsel %vm909, %v1337, 0.0
        %1356 = vadd.xlane.f32.xlu0 %v1355
        %v1357 = vpop.xlane.xlu0 %1356
        %v1358 = vsel %vm909, %v1339, 0.0
        %1359 = vadd.xlane.f32.xlu0 %v1358
        %v1360 = vpop.xlane.xlu0 %1359
        %v1361 = vsel %vm909, %v1341, 0.0
        %1362 = vadd.xlane.f32.xlu0 %v1361
        %v1363 = vpop.xlane.xlu0 %1362
        %v1364 = vsel %vm909, %v1343, 0.0
        %1365 = vadd.xlane.f32.xlu0 %v1364
        %v1366 = vpop.xlane.xlu0 %1365
        %v1367 = vsel %vm909, %v1345, 0.0
        %1368 = vadd.xlane.f32.xlu0 %v1367
        %v1369 = vpop.xlane.xlu0 %1368
        %v1370 = vrcp.pop %v1348
        %v1371 = vrcp.pop %v1351
        %v1372 = vrcp.pop %v1354
        %v1373 = vrcp.pop %v1357
        %v1374 = vrcp.pop %v1360
        %v1375 = vrcp.pop %v1363
        %v1376 = vrcp.pop %v1366
        %v1377 = vrcp.pop %v1369
        %v1378 = vmul.f32 %v1331, %v1370
        %v1379 = vmul.f32 %v1333, %v1371
        %v1380 = vmul.f32 %v1335, %v1372
        %v1381 = vmul.f32 %v1337, %v1373
        %v1382 = vmul.f32 %v1339, %v1374
        %v1383 = vmul.f32 %v1341, %v1375
        %v1384 = vmul.f32 %v1343, %v1376
        %v1385 = vmul.f32 %v1345, %v1377
        %v1386 = vpack.c.bf16 %v1378, %v1378
        %v1387 = vpack.c.bf16 %v1379, %v1379
        %v1388 = vpack.c.bf16 %v1380, %v1380
        %v1389 = vpack.c.bf16 %v1381, %v1381
        %v1390 = vpack.c.bf16 %v1382, %v1382
        %v1391 = vpack.c.bf16 %v1383, %v1383
        %v1392 = vpack.c.bf16 %v1384, %v1384
        %v1393 = vpack.c.bf16 %v1385, %v1385
        %v1395 = vsel %vm909, %v1386, 0
        %vm1397 = vcmask 1043456
        %v1399 = vsel %vm1397, %v891, 0
        %1401 = vmatprep.subr.bf16.mxu0 0
        %1402 = vmatpush1.bf16.msra.mxu0 %v1399
        %1403 = vmatprep.subr.bf16.mxu0 0
        %1404 = vmatpush1.bf16.msra.mxu0 0
        %1405 = vmatprep.subr.bf16.mxu0 0
        %1406 = vmatpush1.bf16.msra.mxu0 0
        %1407 = vmatprep.subr.bf16.mxu0 0
        %1408 = vmatpush1.bf16.msra.mxu0 0
        %1409 = vmatprep.subr.bf16.mxu0 0
        %1410 = vmatpush1.bf16.msra.mxu0 0
        %1411 = vmatprep.subr.bf16.mxu0 0
        %1412 = vmatpush1.bf16.msra.mxu0 0
        %1413 = vmatprep.subr.bf16.mxu0 0
        %1414 = vmatpush1.bf16.msra.mxu0 0
        %1415 = vmatprep.subr.bf16.mxu0 0
        %1416 = vmatpush1.bf16.msra.mxu0 0
        %1417 = vmatprep.subr.bf16.mxu0 0
        %1418 = vmatpush1.bf16.msra.mxu0 0
        %1419 = vmatprep.subr.bf16.mxu0 0
        %1420 = vmatpush1.bf16.msra.mxu0 0
        %1421 = vmatprep.subr.bf16.mxu0 0
        %1422 = vmatpush1.bf16.msra.mxu0 0
        %1423 = vmatprep.subr.bf16.mxu0 0
        %1424 = vmatpush1.bf16.msra.mxu0 0
        %1425 = vmatprep.subr.bf16.mxu0 0
        %1426 = vmatpush1.bf16.msra.mxu0 0
        %1427 = vmatprep.subr.bf16.mxu0 0
        %1428 = vmatpush1.bf16.msra.mxu0 0
        %1429 = vmatprep.subr.bf16.mxu0 0
        %1430 = vmatpush1.bf16.msra.mxu0 0
        %1431 = vmatprep.subr.bf16.mxu0 0
        %1432 = vmatpush1.bf16.msra.mxu0 0
        %1433 = vmatprep.mubr.bf16.mxu0 0
        %1434 = vmatmul.mubr.bf16.gmra.mrb[0].mxu0 %v1395
        %v1435 = vpop.f32.mrb[0].mxu0
        %v1436 = vadd.f32 0.0, %v1435
        %v1437 = vpop.f32.mrb[0].mxu0
        %v1438 = vpop.f32.mrb[0].mxu0
        %v1439 = vpop.f32.mrb[0].mxu0
        %1440 = vdwg.mxu0
        %v1442 = vsel %vm909, %v1387, 0
        %v1445 = vsel %vm1397, %v892, 0
        %1447 = vmatprep.subr.bf16.mxu0 0
        %1448 = vmatpush1.bf16.msra.mxu0 %v1445
        %1449 = vmatprep.subr.bf16.mxu0 0
        %1450 = vmatpush1.bf16.msra.mxu0 0
        %1451 = vmatprep.subr.bf16.mxu0 0
        %1452 = vmatpush1.bf16.msra.mxu0 0
        %1453 = vmatprep.subr.bf16.mxu0 0
        %1454 = vmatpush1.bf16.msra.mxu0 0
        %1455 = vmatprep.subr.bf16.mxu0 0
        %1456 = vmatpush1.bf16.msra.mxu0 0
        %1457 = vmatprep.subr.bf16.mxu0 0
        %1458 = vmatpush1.bf16.msra.mxu0 0
        %1459 = vmatprep.subr.bf16.mxu0 0
        %1460 = vmatpush1.bf16.msra.mxu0 0
        %1461 = vmatprep.subr.bf16.mxu0 0
        %1462 = vmatpush1.bf16.msra.mxu0 0
        %1463 = vmatprep.subr.bf16.mxu0 0
        %1464 = vmatpush1.bf16.msra.mxu0 0
        %1465 = vmatprep.subr.bf16.mxu0 0
        %1466 = vmatpush1.bf16.msra.mxu0 0
        %1467 = vmatprep.subr.bf16.mxu0 0
        %1468 = vmatpush1.bf16.msra.mxu0 0
        %1469 = vmatprep.subr.bf16.mxu0 0
        %1470 = vmatpush1.bf16.msra.mxu0 0
        %1471 = vmatprep.subr.bf16.mxu0 0
        %1472 = vmatpush1.bf16.msra.mxu0 0
        %1473 = vmatprep.subr.bf16.mxu0 0
        %1474 = vmatpush1.bf16.msra.mxu0 0
        %1475 = vmatprep.subr.bf16.mxu0 0
        %1476 = vmatpush1.bf16.msra.mxu0 0
        %1477 = vmatprep.subr.bf16.mxu0 0
        %1478 = vmatpush1.bf16.msra.mxu0 0
        %1479 = vmatprep.mubr.bf16.mxu0 0
        %1480 = vmatmul.mubr.bf16.gmra.mrb[0].mxu0 %v1442
        %v1481 = vpop.f32.mrb[0].mxu0
        %v1482 = vadd.f32 0.0, %v1481
        %v1483 = vpop.f32.mrb[0].mxu0
        %v1484 = vpop.f32.mrb[0].mxu0
        %v1485 = vpop.f32.mrb[0].mxu0
        %1486 = vdwg.mxu0
        %v1488 = vsel %vm909, %v1388, 0
        %v1491 = vsel %vm1397, %v894, 0
        %1493 = vmatprep.subr.bf16.mxu0 0
        %1494 = vmatpush1.bf16.msra.mxu0 %v1491
        %1495 = vmatprep.subr.bf16.mxu0 0
        %1496 = vmatpush1.bf16.msra.mxu0 0
        %1497 = vmatprep.subr.bf16.mxu0 0
        %1498 = vmatpush1.bf16.msra.mxu0 0
        %1499 = vmatprep.subr.bf16.mxu0 0
        %1500 = vmatpush1.bf16.msra.mxu0 0
        %1501 = vmatprep.subr.bf16.mxu0 0
        %1502 = vmatpush1.bf16.msra.mxu0 0
        %1503 = vmatprep.subr.bf16.mxu0 0
        %1504 = vmatpush1.bf16.msra.mxu0 0
        %1505 = vmatprep.subr.bf16.mxu0 0
        %1506 = vmatpush1.bf16.msra.mxu0 0
        %1507 = vmatprep.subr.bf16.mxu0 0
        %1508 = vmatpush1.bf16.msra.mxu0 0
        %1509 = vmatprep.subr.bf16.mxu0 0
        %1510 = vmatpush1.bf16.msra.mxu0 0
        %1511 = vmatprep.subr.bf16.mxu0 0
        %1512 = vmatpush1.bf16.msra.mxu0 0
        %1513 = vmatprep.subr.bf16.mxu0 0
        %1514 = vmatpush1.bf16.msra.mxu0 0
        %1515 = vmatprep.subr.bf16.mxu0 0
        %1516 = vmatpush1.bf16.msra.mxu0 0
        %1517 = vmatprep.subr.bf16.mxu0 0
        %1518 = vmatpush1.bf16.msra.mxu0 0
        %1519 = vmatprep.subr.bf16.mxu0 0
        %1520 = vmatpush1.bf16.msra.mxu0 0
        %1521 = vmatprep.subr.bf16.mxu0 0
        %1522 = vmatpush1.bf16.msra.mxu0 0
        %1523 = vmatprep.subr.bf16.mxu0 0
        %1524 = vmatpush1.bf16.msra.mxu0 0
        %1525 = vmatprep.mubr.bf16.mxu0 0
        %1526 = vmatmul.mubr.bf16.gmra.mrb[0].mxu0 %v1488
        %v1527 = vpop.f32.mrb[0].mxu0
        %v1528 = vadd.f32 0.0, %v1527
        %v1529 = vpop.f32.mrb[0].mxu0
        %v1530 = vpop.f32.mrb[0].mxu0
        %v1531 = vpop.f32.mrb[0].mxu0
        %1532 = vdwg.mxu0
        %v1534 = vsel %vm909, %v1389, 0
        %v1537 = vsel %vm1397, %v896, 0
        %1539 = vmatprep.subr.bf16.mxu0 0
        %1540 = vmatpush1.bf16.msra.mxu0 %v1537
        %1541 = vmatprep.subr.bf16.mxu0 0
        %1542 = vmatpush1.bf16.msra.mxu0 0
        %1543 = vmatprep.subr.bf16.mxu0 0
        %1544 = vmatpush1.bf16.msra.mxu0 0
        %1545 = vmatprep.subr.bf16.mxu0 0
        %1546 = vmatpush1.bf16.msra.mxu0 0
        %1547 = vmatprep.subr.bf16.mxu0 0
        %1548 = vmatpush1.bf16.msra.mxu0 0
        %1549 = vmatprep.subr.bf16.mxu0 0
        %1550 = vmatpush1.bf16.msra.mxu0 0
        %1551 = vmatprep.subr.bf16.mxu0 0
        %1552 = vmatpush1.bf16.msra.mxu0 0
        %1553 = vmatprep.subr.bf16.mxu0 0
        %1554 = vmatpush1.bf16.msra.mxu0 0
        %1555 = vmatprep.subr.bf16.mxu0 0
        %1556 = vmatpush1.bf16.msra.mxu0 0
        %1557 = vmatprep.subr.bf16.mxu0 0
        %1558 = vmatpush1.bf16.msra.mxu0 0
        %1559 = vmatprep.subr.bf16.mxu0 0
        %1560 = vmatpush1.bf16.msra.mxu0 0
        %1561 = vmatprep.subr.bf16.mxu0 0
        %1562 = vmatpush1.bf16.msra.mxu0 0
        %1563 = vmatprep.subr.bf16.mxu0 0
        %1564 = vmatpush1.bf16.msra.mxu0 0
        %1565 = vmatprep.subr.bf16.mxu0 0
        %1566 = vmatpush1.bf16.msra.mxu0 0
        %1567 = vmatprep.subr.bf16.mxu0 0
        %1568 = vmatpush1.bf16.msra.mxu0 0
        %1569 = vmatprep.subr.bf16.mxu0 0
        %1570 = vmatpush1.bf16.msra.mxu0 0
        %1571 = vmatprep.mubr.bf16.mxu0 0
        %1572 = vmatmul.mubr.bf16.gmra.mrb[0].mxu0 %v1534
        %v1573 = vpop.f32.mrb[0].mxu0
        %v1574 = vadd.f32 0.0, %v1573
        %v1575 = vpop.f32.mrb[0].mxu0
        %v1576 = vpop.f32.mrb[0].mxu0
        %v1577 = vpop.f32.mrb[0].mxu0
        %1578 = vdwg.mxu0
        %v1580 = vsel %vm909, %v1390, 0
        %v1583 = vsel %vm1397, %v898, 0
        %1585 = vmatprep.subr.bf16.mxu0 0
        %1586 = vmatpush1.bf16.msra.mxu0 %v1583
        %1587 = vmatprep.subr.bf16.mxu0 0
        %1588 = vmatpush1.bf16.msra.mxu0 0
        %1589 = vmatprep.subr.bf16.mxu0 0
        %1590 = vmatpush1.bf16.msra.mxu0 0
        %1591 = vmatprep.subr.bf16.mxu0 0
        %1592 = vmatpush1.bf16.msra.mxu0 0
        %1593 = vmatprep.subr.bf16.mxu0 0
        %1594 = vmatpush1.bf16.msra.mxu0 0
        %1595 = vmatprep.subr.bf16.mxu0 0
        %1596 = vmatpush1.bf16.msra.mxu0 0
        %1597 = vmatprep.subr.bf16.mxu0 0
        %1598 = vmatpush1.bf16.msra.mxu0 0
        %1599 = vmatprep.subr.bf16.mxu0 0
        %1600 = vmatpush1.bf16.msra.mxu0 0
        %1601 = vmatprep.subr.bf16.mxu0 0
        %1602 = vmatpush1.bf16.msra.mxu0 0
        %1603 = vmatprep.subr.bf16.mxu0 0
        %1604 = vmatpush1.bf16.msra.mxu0 0
        %1605 = vmatprep.subr.bf16.mxu0 0
        %1606 = vmatpush1.bf16.msra.mxu0 0
        %1607 = vmatprep.subr.bf16.mxu0 0
        %1608 = vmatpush1.bf16.msra.mxu0 0
        %1609 = vmatprep.subr.bf16.mxu0 0
        %1610 = vmatpush1.bf16.msra.mxu0 0
        %1611 = vmatprep.subr.bf16.mxu0 0
        %1612 = vmatpush1.bf16.msra.mxu0 0
        %1613 = vmatprep.subr.bf16.mxu0 0
        %1614 = vmatpush1.bf16.msra.mxu0 0
        %1615 = vmatprep.subr.bf16.mxu0 0
        %1616 = vmatpush1.bf16.msra.mxu0 0
        %1617 = vmatprep.mubr.bf16.mxu0 0
        %1618 = vmatmul.mubr.bf16.gmra.mrb[0].mxu0 %v1580
        %v1619 = vpop.f32.mrb[0].mxu0
        %v1620 = vadd.f32 0.0, %v1619
        %v1621 = vpop.f32.mrb[0].mxu0
        %v1622 = vpop.f32.mrb[0].mxu0
        %v1623 = vpop.f32.mrb[0].mxu0
        %1624 = vdwg.mxu0
        %v1626 = vsel %vm909, %v1391, 0
        %v1629 = vsel %vm1397, %v900, 0
        %1631 = vmatprep.subr.bf16.mxu0 0
        %1632 = vmatpush1.bf16.msra.mxu0 %v1629
        %1633 = vmatprep.subr.bf16.mxu0 0
        %1634 = vmatpush1.bf16.msra.mxu0 0
        %1635 = vmatprep.subr.bf16.mxu0 0
        %1636 = vmatpush1.bf16.msra.mxu0 0
        %1637 = vmatprep.subr.bf16.mxu0 0
        %1638 = vmatpush1.bf16.msra.mxu0 0
        %1639 = vmatprep.subr.bf16.mxu0 0
        %1640 = vmatpush1.bf16.msra.mxu0 0
        %1641 = vmatprep.subr.bf16.mxu0 0
        %1642 = vmatpush1.bf16.msra.mxu0 0
        %1643 = vmatprep.subr.bf16.mxu0 0
        %1644 = vmatpush1.bf16.msra.mxu0 0
        %1645 = vmatprep.subr.bf16.mxu0 0
        %1646 = vmatpush1.bf16.msra.mxu0 0
        %1647 = vmatprep.subr.bf16.mxu0 0
        %1648 = vmatpush1.bf16.msra.mxu0 0
        %1649 = vmatprep.subr.bf16.mxu0 0
        %1650 = vmatpush1.bf16.msra.mxu0 0
        %1651 = vmatprep.subr.bf16.mxu0 0
        %1652 = vmatpush1.bf16.msra.mxu0 0
        %1653 = vmatprep.subr.bf16.mxu0 0
        %1654 = vmatpush1.bf16.msra.mxu0 0
        %1655 = vmatprep.subr.bf16.mxu0 0
        %1656 = vmatpush1.bf16.msra.mxu0 0
        %1657 = vmatprep.subr.bf16.mxu0 0
        %1658 = vmatpush1.bf16.msra.mxu0 0
        %1659 = vmatprep.subr.bf16.mxu0 0
        %1660 = vmatpush1.bf16.msra.mxu0 0
        %1661 = vmatprep.subr.bf16.mxu0 0
        %1662 = vmatpush1.bf16.msra.mxu0 0
        %1663 = vmatprep.mubr.bf16.mxu0 0
        %1664 = vmatmul.mubr.bf16.gmra.mrb[0].mxu0 %v1626
        %v1665 = vpop.f32.mrb[0].mxu0
        %v1666 = vadd.f32 0.0, %v1665
        %v1667 = vpop.f32.mrb[0].mxu0
        %v1668 = vpop.f32.mrb[0].mxu0
        %v1669 = vpop.f32.mrb[0].mxu0
        %1670 = vdwg.mxu0
        %v1672 = vsel %vm909, %v1392, 0
        %v1675 = vsel %vm1397, %v902, 0
        %1677 = vmatprep.subr.bf16.mxu0 0
        %1678 = vmatpush1.bf16.msra.mxu0 %v1675
        %1679 = vmatprep.subr.bf16.mxu0 0
        %1680 = vmatpush1.bf16.msra.mxu0 0
        %1681 = vmatprep.subr.bf16.mxu0 0
        %1682 = vmatpush1.bf16.msra.mxu0 0
        %1683 = vmatprep.subr.bf16.mxu0 0
        %1684 = vmatpush1.bf16.msra.mxu0 0
        %1685 = vmatprep.subr.bf16.mxu0 0
        %1686 = vmatpush1.bf16.msra.mxu0 0
        %1687 = vmatprep.subr.bf16.mxu0 0
        %1688 = vmatpush1.bf16.msra.mxu0 0
        %1689 = vmatprep.subr.bf16.mxu0 0
        %1690 = vmatpush1.bf16.msra.mxu0 0
        %1691 = vmatprep.subr.bf16.mxu0 0
        %1692 = vmatpush1.bf16.msra.mxu0 0
        %1693 = vmatprep.subr.bf16.mxu0 0
        %1694 = vmatpush1.bf16.msra.mxu0 0
        %1695 = vmatprep.subr.bf16.mxu0 0
        %1696 = vmatpush1.bf16.msra.mxu0 0
        %1697 = vmatprep.subr.bf16.mxu0 0
        %1698 = vmatpush1.bf16.msra.mxu0 0
        %1699 = vmatprep.subr.bf16.mxu0 0
        %1700 = vmatpush1.bf16.msra.mxu0 0
        %1701 = vmatprep.subr.bf16.mxu0 0
        %1702 = vmatpush1.bf16.msra.mxu0 0
        %1703 = vmatprep.subr.bf16.mxu0 0
        %1704 = vmatpush1.bf16.msra.mxu0 0
        %1705 = vmatprep.subr.bf16.mxu0 0
        %1706 = vmatpush1.bf16.msra.mxu0 0
        %1707 = vmatprep.subr.bf16.mxu0 0
        %1708 = vmatpush1.bf16.msra.mxu0 0
        %1709 = vmatprep.mubr.bf16.mxu0 0
        %1710 = vmatmul.mubr.bf16.gmra.mrb[0].mxu0 %v1672
        %v1711 = vpop.f32.mrb[0].mxu0
        %v1712 = vadd.f32 0.0, %v1711
        %v1713 = vpop.f32.mrb[0].mxu0
        %v1714 = vpop.f32.mrb[0].mxu0
        %v1715 = vpop.f32.mrb[0].mxu0
        %1716 = vdwg.mxu0
        %v1718 = vsel %vm909, %v1393, 0
        %v1721 = vsel %vm1397, %v904, 0
        %1723 = vmatprep.subr.bf16.mxu0 0
        %1724 = vmatpush1.bf16.msra.mxu0 %v1721
        %1725 = vmatprep.subr.bf16.mxu0 0
        %1726 = vmatpush1.bf16.msra.mxu0 0
        %1727 = vmatprep.subr.bf16.mxu0 0
        %1728 = vmatpush1.bf16.msra.mxu0 0
        %1729 = vmatprep.subr.bf16.mxu0 0
        %1730 = vmatpush1.bf16.msra.mxu0 0
        %1731 = vmatprep.subr.bf16.mxu0 0
        %1732 = vmatpush1.bf16.msra.mxu0 0
        %1733 = vmatprep.subr.bf16.mxu0 0
        %1734 = vmatpush1.bf16.msra.mxu0 0
        %1735 = vmatprep.subr.bf16.mxu0 0
        %1736 = vmatpush1.bf16.msra.mxu0 0
        %1737 = vmatprep.subr.bf16.mxu0 0
        %1738 = vmatpush1.bf16.msra.mxu0 0
        %1739 = vmatprep.subr.bf16.mxu0 0
        %1740 = vmatpush1.bf16.msra.mxu0 0
        %1741 = vmatprep.subr.bf16.mxu0 0
        %1742 = vmatpush1.bf16.msra.mxu0 0
        %1743 = vmatprep.subr.bf16.mxu0 0
        %1744 = vmatpush1.bf16.msra.mxu0 0
        %1745 = vmatprep.subr.bf16.mxu0 0
        %1746 = vmatpush1.bf16.msra.mxu0 0
        %1747 = vmatprep.subr.bf16.mxu0 0
        %1748 = vmatpush1.bf16.msra.mxu0 0
        %1749 = vmatprep.subr.bf16.mxu0 0
        %1750 = vmatpush1.bf16.msra.mxu0 0
        %1751 = vmatprep.subr.bf16.mxu0 0
        %1752 = vmatpush1.bf16.msra.mxu0 0
        %1753 = vmatprep.subr.bf16.mxu0 0
        %1754 = vmatpush1.bf16.msra.mxu0 0
        %1755 = vmatprep.mubr.bf16.mxu0 0
        %1756 = vmatmul.mubr.bf16.gmra.mrb[0].mxu0 %v1718
        %v1757 = vpop.f32.mrb[0].mxu0
        %v1758 = vadd.f32 0.0, %v1757
        %v1759 = vpop.f32.mrb[0].mxu0
        %v1760 = vpop.f32.mrb[0].mxu0
        %v1761 = vpop.f32.mrb[0].mxu0
        %1762 = vdwg.mxu0
        %1765 = vrot.lane.b32.xlu0 %v1528, 8
        %v1766 = vpop.permute.xlu0 %1765
        %1767 = vrot.lane.b32.xlu0 %v1574, 8
        %v1768 = vpop.permute.xlu0 %1767
        %1773 = vrot.lane.b32.xlu0 %v1620, 16
        %v1774 = vpop.permute.xlu0 %1773
        %1775 = vrot.lane.b32.xlu0 %v1666, 16
        %v1776 = vpop.permute.xlu0 %1775
        %1781 = vrot.lane.b32.xlu0 %v1712, 24
        %v1782 = vpop.permute.xlu0 %1781
        %1783 = vrot.lane.b32.xlu0 %v1758, 24
        %v1784 = vpop.permute.xlu0 %1783
        %v1787 = vsel %vm909, %v1436, %v1766
        %v1788 = vsel %vm909, %v1482, %v1768
        %vm1789 = vcmask 130048
        %v1790 = vsel %vm1789, %v1787, %v1774
        %v1791 = vsel %vm1789, %v1788, %v1776
        %vm1792 = vcmask 195584
        %v1793 = vsel %vm1792, %v1790, %v1782
        %v1794 = vsel %vm1792, %v1791, %v1784
        %v1795 = vpack.c.bf16 %v1794, %v1793
        %v1796 = vld [vmem:[#allocation11] sm:$0xf]
        %v1797 = vld [vmem:[#allocation11 + $0x4] sm:$0xf]
        %v1798 = vld [vmem:[#allocation11 + $0x8] sm:$0xf]
        %v1799 = vld [vmem:[#allocation11 + $0xc] sm:$0xf]
        %v1800 = vld [vmem:[#allocation13] sm:$0x1]
        %v1802 = vlaneseq
        %v1803 = vshrl.u32 %v1802, 7
        %v1804 = vsub.s32 0, %v1803
        %v1805 = vrot.slane %v1800, %v1804
        %v1811 = vunpack.c.l.b16 %v1796
        %v1812 = vunpack.c.l.b16 %v1797
        %v1813 = vunpack.c.l.b16 %v1798
        %v1814 = vunpack.c.l.b16 %v1799
        %v1815 = vpack.c.b16 %v1812, %v1811
        %v1816 = vpack.c.b16 %v1814, %v1813
        %v1820 = vsel %vm678, %v1795, 0
        %1822 = vmatprep.subr.bf16.mxu0 0
        %1823 = vmatpush1.bf16.msra.mxu0 %v1815
        %1824 = vmatprep.subr.bf16.mxu0 0
        %1825 = vmatpush1.bf16.msra.mxu0 %v1816
        %1826 = vmatprep.subr.bf16.mxu0 0
        %1827 = vmatpush1.bf16.msra.mxu0 0
        %1828 = vmatprep.subr.bf16.mxu0 0
        %1829 = vmatpush1.bf16.msra.mxu0 0
        %1830 = vmatprep.subr.bf16.mxu0 0
        %1831 = vmatpush1.bf16.msra.mxu0 0
        %1832 = vmatprep.subr.bf16.mxu0 0
        %1833 = vmatpush1.bf16.msra.mxu0 0
        %1834 = vmatprep.subr.bf16.mxu0 0
        %1835 = vmatpush1.bf16.msra.mxu0 0
        %1836 = vmatprep.subr.bf16.mxu0 0
        %1837 = vmatpush1.bf16.msra.mxu0 0
        %1838 = vmatprep.subr.bf16.mxu0 0
        %1839 = vmatpush1.bf16.msra.mxu0 0
        %1840 = vmatprep.subr.bf16.mxu0 0
        %1841 = vmatpush1.bf16.msra.mxu0 0
        %1842 = vmatprep.subr.bf16.mxu0 0
        %1843 = vmatpush1.bf16.msra.mxu0 0
        %1844 = vmatprep.subr.bf16.mxu0 0
        %1845 = vmatpush1.bf16.msra.mxu0 0
        %1846 = vmatprep.subr.bf16.mxu0 0
        %1847 = vmatpush1.bf16.msra.mxu0 0
        %1848 = vmatprep.subr.bf16.mxu0 0
        %1849 = vmatpush1.bf16.msra.mxu0 0
        %1850 = vmatprep.subr.bf16.mxu0 0
        %1851 = vmatpush1.bf16.msra.mxu0 0
        %1852 = vmatprep.subr.bf16.mxu0 0
        %1853 = vmatpush1.bf16.msra.mxu0 0
        %1854 = vmatprep.mubr.bf16.mxu0 0
        %1855 = vmatmul.mubr.bf16.gmra.mrb[0].mxu0 %v1820
        %v1856 = vpop.f32.mrb[0].mxu0
        %v1857 = vadd.f32 %v1805, %v1856
        %v1858 = vpop.f32.mrb[0].mxu0
        %v1859 = vpop.f32.mrb[0].mxu0
        %v1860 = vadd.f32 %v1805, %v1859
        %v1861 = vpop.f32.mrb[0].mxu0
        %1862 = vdwg.mxu0
        %v1863 = vadd.f32 %v652, %v1857
        %v1864 = vadd.f32 %v653, %v1860
        %v1865 = vld [vmem:[%s10] sm:$0x1]
        %v1866 = vld [vmem:[%s11] sm:$0x1]
        %v1867 = vsel %vm678, %v1863, 0.0
        %1868 = vadd.xlane.f32.xlu0 %v1867
        %v1869 = vpop.xlane.xlu0 %1868
        %v1870 = vsel %vm678, %v1864, 0.0
        %1871 = vadd.xlane.f32.xlu0 %v1870
        %v1872 = vpop.xlane.xlu0 %1871
        %v1873 = vrcp.pop 32.0
        %v1874 = vmul.f32 %v1869, %v1873
        %v1875 = vmul.f32 %v1872, %v1873
        %v1876 = vsub.f32 %v1863, %v1874
        %v1877 = vsub.f32 %v1864, %v1875
        %v1878 = vmul.f32 %v1876, %v1876
        %v1879 = vmul.f32 %v1877, %v1877
        %v1880 = vsel %vm678, %v1878, 0.0
        %1881 = vadd.xlane.f32.xlu0 %v1880
        %v1882 = vpop.xlane.xlu0 %1881
        %v1883 = vsel %vm678, %v1879, 0.0
        %1884 = vadd.xlane.f32.xlu0 %v1883
        %v1885 = vpop.xlane.xlu0 %1884
        %v1886 = vmul.f32 %v1882, %v1873
        %v1887 = vmul.f32 %v1885, %v1873
        %v1888 = vadd.f32 %v1886, 1e-05
        %v1889 = vadd.f32 %v1887, 1e-05
        %v1890 = vrsqrt.pop %v1888
        %v1891 = vrsqrt.pop %v1889
        %v1892 = vmul.f32 %v1876, %v1890
        %v1893 = vmul.f32 %v1877, %v1891
        %v1895 = vlaneseq
        %v1896 = vshrl.u32 %v1895, 7
        %v1897 = vsub.s32 0, %v1896
        %v1898 = vrot.slane %v1865, %v1897
        %v1900 = vmul.f32 %v1892, %v1898
        %v1901 = vmul.f32 %v1893, %v1898
        %v1903 = vlaneseq
        %v1904 = vshrl.u32 %v1903, 7
        %v1905 = vsub.s32 0, %v1904
        %v1906 = vrot.slane %v1866, %v1905
        %v1908 = vadd.f32 %v1900, %v1906
        %v1909 = vadd.f32 %v1901, %v1906
        %v1910 = vpack.c.bf16 %v1909, %v1908
        %v1911 = vld [vmem:[%s12] sm:$0xf]
        %v1912 = vld [vmem:[%s12 + $0x4] sm:$0xf]
        %v1913 = vld [vmem:[%s12 + $0x8] sm:$0xf]
        %v1914 = vld [vmem:[%s12 + $0xc] sm:$0xf]
        %v1915 = vld [vmem:[%s13] sm:$0x1]
        %v1917 = vlaneseq
        %v1918 = vshrl.u32 %v1917, 7
        %v1919 = vsub.s32 0, %v1918
        %v1920 = vrot.slane %v1915, %v1919
        %v1926 = vunpack.c.l.b16 %v1911
        %v1927 = vunpack.c.l.b16 %v1912
        %v1928 = vunpack.c.l.b16 %v1913
        %v1929 = vunpack.c.l.b16 %v1914
        %v1930 = vpack.c.b16 %v1927, %v1926
        %v1931 = vpack.c.b16 %v1929, %v1928
        %v1935 = vsel %vm678, %v1910, 0
        %1937 = vmatprep.subr.bf16.mxu0 0
        %1938 = vmatpush1.bf16.msra.mxu0 %v1930
        %1939 = vmatprep.subr.bf16.mxu0 0
        %1940 = vmatpush1.bf16.msra.mxu0 %v1931
        %1941 = vmatprep.subr.bf16.mxu0 0
        %1942 = vmatpush1.bf16.msra.mxu0 0
        %1943 = vmatprep.subr.bf16.mxu0 0
        %1944 = vmatpush1.bf16.msra.mxu0 0
        %1945 = vmatprep.subr.bf16.mxu0 0
        %1946 = vmatpush1.bf16.msra.mxu0 0
        %1947 = vmatprep.subr.bf16.mxu0 0
        %1948 = vmatpush1.bf16.msra.mxu0 0
        %1949 = vmatprep.subr.bf16.mxu0 0
        %1950 = vmatpush1.bf16.msra.mxu0 0
        %1951 = vmatprep.subr.bf16.mxu0 0
        %1952 = vmatpush1.bf16.msra.mxu0 0
        %1953 = vmatprep.subr.bf16.mxu0 0
        %1954 = vmatpush1.bf16.msra.mxu0 0
        %1955 = vmatprep.subr.bf16.mxu0 0
        %1956 = vmatpush1.bf16.msra.mxu0 0
        %1957 = vmatprep.subr.bf16.mxu0 0
        %1958 = vmatpush1.bf16.msra.mxu0 0
        %1959 = vmatprep.subr.bf16.mxu0 0
        %1960 = vmatpush1.bf16.msra.mxu0 0
        %1961 = vmatprep.subr.bf16.mxu0 0
        %1962 = vmatpush1.bf16.msra.mxu0 0
        %1963 = vmatprep.subr.bf16.mxu0 0
        %1964 = vmatpush1.bf16.msra.mxu0 0
        %1965 = vmatprep.subr.bf16.mxu0 0
        %1966 = vmatpush1.bf16.msra.mxu0 0
        %1967 = vmatprep.subr.bf16.mxu0 0
        %1968 = vmatpush1.bf16.msra.mxu0 0
        %1969 = vmatprep.mubr.bf16.mxu0 0
        %1970 = vmatmul.mubr.bf16.gmra.mrb[0].mxu0 %v1935
        %v1971 = vpop.f32.mrb[0].mxu0
        %v1972 = vadd.f32 %v1920, %v1971
        %v1973 = vpop.f32.mrb[0].mxu0
        %v1974 = vpop.f32.mrb[0].mxu0
        %v1975 = vadd.f32 %v1920, %v1974
        %v1976 = vpop.f32.mrb[0].mxu0
        %1977 = vdwg.mxu0
        %v1978 = vmax.f32 %v1972, 0.0
        %v1979 = vmax.f32 %v1975, 0.0
        %v1980 = vadd.f32 %v1908, %v1978
        %v1981 = vadd.f32 %v1909, %v1979
        %v1982 = vld [vmem:[%s14] sm:$0x1]
        %v1983 = vld [vmem:[%s15] sm:$0x1]
        %v1984 = vsel %vm678, %v1980, 0.0
        %1985 = vadd.xlane.f32.xlu0 %v1984
        %v1986 = vpop.xlane.xlu0 %1985
        %v1987 = vsel %vm678, %v1981, 0.0
        %1988 = vadd.xlane.f32.xlu0 %v1987
        %v1989 = vpop.xlane.xlu0 %1988
        %v1990 = vmul.f32 %v1986, %v1873
        %v1991 = vmul.f32 %v1989, %v1873
        %v1992 = vsub.f32 %v1980, %v1990
        %v1993 = vsub.f32 %v1981, %v1991
        %v1994 = vmul.f32 %v1992, %v1992
        %v1995 = vmul.f32 %v1993, %v1993
        %v1996 = vsel %vm678, %v1994, 0.0
        %1997 = vadd.xlane.f32.xlu0 %v1996
        %v1998 = vpop.xlane.xlu0 %1997
        %v1999 = vsel %vm678, %v1995, 0.0
        %2000 = vadd.xlane.f32.xlu0 %v1999
        %v2001 = vpop.xlane.xlu0 %2000
        %v2002 = vmul.f32 %v1998, %v1873
        %v2003 = vmul.f32 %v2001, %v1873
        %v2004 = vadd.f32 %v2002, 1e-05
        %v2005 = vadd.f32 %v2003, 1e-05
        %v2006 = vrsqrt.pop %v2004
        %v2007 = vrsqrt.pop %v2005
        %v2008 = vmul.f32 %v1992, %v2006
        %v2009 = vmul.f32 %v1993, %v2007
        %v2011 = vlaneseq
        %v2012 = vshrl.u32 %v2011, 7
        %v2013 = vsub.s32 0, %v2012
        %v2014 = vrot.slane %v1982, %v2013
        %v2016 = vmul.f32 %v2008, %v2014
        %v2017 = vmul.f32 %v2009, %v2014
        %v2019 = vlaneseq
        %v2020 = vshrl.u32 %v2019, 7
        %v2021 = vsub.s32 0, %v2020
        %v2022 = vrot.slane %v1983, %v2021
        %v2024 = vadd.f32 %v2016, %v2022
        %v2025 = vadd.f32 %v2017, %v2022
        %2026 = vst.msk [vmem:[%s647] sm:$0xff] %vm678, %v2024
        %2027 = vst.msk [vmem:[%s647 + $0x8] sm:$0xff] %vm678, %v2025
        %s2028 = sand.u32 %s392, 1
        %s2029 = scalar_lea.sflag [#allocation4], %s2028
        %s2030 = sand.u32 %s392, 1
        %s2031 = smul.addr %s2030, 16
        %s2032 = scalar_lea.vmem [#allocation14], %s2031
        // Predicated region
        $region113: #{tpu_custom_call.1} parent=83 // pred_check
          %p2033 = pneg %p402
        $region114: #{tpu_custom_call.1} parent=83 // pred_check_branch
          %2035 = sbr.rel (%p2033) target = $region116
        $region115: #{tpu_custom_call.1} parent=83 // pred_region
          %s2036 = smul.u32 2, %s38
          %s2038 = ssub.s32 256, 256
          %2039 = vsyncadd %s2029, %s2038
          %s2040 = smul.addr %s2036, 128
          %s2041 = scalar_lea.hbm %s16, %s2040
          %s2042 = sshll.u32 %s2032, 4
          %s2043 = int_to_ptr.vmem [resolvable:$true] %s2042
          %2048 = dma.vmem_to_hbm [thread:$0]  %s2043, 256, %s2041, %s2029, 128, 128, 8
        $region116: #{tpu_custom_call.1} parent=83 // pred_fallthru
          _
      $region84: #{tpu_custom_call.1} parent=5 // pred_fallthru
        _
      %p2049 = scmp.le.s32.totalorder 2, %s33
      // Predicated region
      $region117: #{tpu_custom_call.1} parent=5 // pred_check
        %p2050 = pneg %p2049
      $region118: #{tpu_custom_call.1} parent=5 // pred_check_branch
        %2052 = sbr.rel (%p2050) target = $region120
      $region119: #{tpu_custom_call.1} parent=5 // pred_region
        %s2053 = ssub.s32 %s33, 2
        // Predicated region
        $region121: #{tpu_custom_call.1} parent=119 // pred_check
          %p2054 = pneg %p408
        $region122: #{tpu_custom_call.1} parent=119 // pred_check_branch
          %2056 = sbr.rel (%p2054) target = $region124
        $region123: #{tpu_custom_call.1} parent=119 // pred_region
          %s2057 = sand.u32 %s393, 1
          %s2058 = scalar_lea.sflag [#allocation4], %s2057
          %s2059 = sand.u32 %s393, 1
          %s2060 = smul.addr %s2059, 16
          %s2061 = scalar_lea.vmem [#allocation14], %s2060
          %2062 = dma.done %s2058, 256
        $region124: #{tpu_custom_call.1} parent=119 // pred_fallthru
          _
      $region120: #{tpu_custom_call.1} parent=5 // pred_fallthru
        _
    $region6: #{tpu_custom_call.1} parent=1 // loop_footer
      %s37 = sadd.s32 1, %s33
    $region7: #{tpu_custom_call.1} parent=1 // loop_footer_branch
      %32 = sbr.rel target = $region3
    $region8: #{tpu_custom_call.1} parent=1 // loop_exit
      _
    %2063 = vsyncpa [#allocation3], 1
    %s2064 = scalar_lea.sflag [#allocation3], 1
    %2065 = vsyncpa %s2064, 1
    %2066 = vsyncpa [#allocation6], 1
    %s2067 = scalar_lea.sflag [#allocation6], 1
    %2068 = vsyncpa %s2067, 1
    %2069 = vsyncpa [#allocation9], 1
    %2070 = vsyncpa [#allocation12], 1
    %2071 = vsyncpa [#allocation4], 1
    %s2072 = scalar_lea.sflag [#allocation4], 1
    %2073 = vsyncpa %s2072, 1

</llo_original>
